<compile_context>
chip_gen: v5e
topology: v5e:2x2
jax: 0.10.0
libtpu: 0.0.40
codegen_flags: <defaults>
</compile_context>

<pallas_src>
import jax
import jax.numpy as jnp
from jax.experimental import pallas as pl
from jax.experimental.pallas import tpu as pltpu

Z = 32
IMG = 3 * 28 * 28          # 2352 output / condition features
IN_F = IMG + Z             # 2384 concatenated input features (fan_in of layer 1)
HID = 256


def _pad_to(n, m):
    return ((n + m - 1) // m) * m


def _vmem_limit_bytes():
    # v5e/v6e: 128 MiB physical -> 96 MiB scoped; v7x: 64 MiB -> 48 MiB.
    try:
        cap = int(pltpu.get_tpu_info().vmem_capacity_bytes)
        return int(min(96 << 20, (cap * 3) // 4))
    except Exception:
        return 48 << 20  # conservative: fits every generation


def mlp_generator_kernel(cond_ref, smp_ref,
                         w1c_ref, w1s_ref, b1_ref,
                         w2_ref, b2_ref,
                         w3_ref, b3_ref,
                         w4_ref, b4_ref,
                         o_ref):
    # Layer 1: split-K matmul over (condition | sample), f32 accumulation.
    h = (jnp.dot(cond_ref[...], w1c_ref[...], preferred_element_type=jnp.float32)
         + jnp.dot(smp_ref[...], w1s_ref[...], preferred_element_type=jnp.float32)
         + b1_ref[...])
    h = jnp.maximum(h, 0.0).astype(jnp.bfloat16)
    # Layer 2
    h = jnp.dot(h, w2_ref[...], preferred_element_type=jnp.float32) + b2_ref[...]
    h = jnp.maximum(h, 0.0).astype(jnp.bfloat16)
    # Layer 3
    h = jnp.dot(h, w3_ref[...], preferred_element_type=jnp.float32) + b3_ref[...]
    h = jnp.maximum(h, 0.0).astype(jnp.bfloat16)
    # Layer 4 + sigmoid
    y = jnp.dot(h, w4_ref[...], preferred_element_type=jnp.float32) + b4_ref[...]
    o_ref[...] = jax.nn.sigmoid(y)


def init_params(key):
    """Deterministic init mimicking torch.nn.Linear default
    (U[-1/sqrt(fan_in), 1/sqrt(fan_in)]).  Weights are stored as (in, out)
    (torch weight transposed) in bf16; biases in f32.  Layer-1 weight is split
    into its condition (2352 x 256) and sample (32 x 256) slabs."""
    keys = jax.random.split(key, 8)

    def uni(k, shape, fan_in):
        bound = 1.0 / (fan_in ** 0.5)
        return jax.random.uniform(k, shape, jnp.float32, -bound, bound)

    # Layer 1 (fan_in = IN_F for both slabs and the bias)
    w1c = uni(keys[0], (IMG, HID), IN_F).astype(jnp.bfloat16)
    w1s = uni(keys[1], (Z, HID), IN_F).astype(jnp.bfloat16)
    b1 = uni(keys[2], (1, HID), IN_F)
    # Layers 2, 3
    w2 = uni(keys[3], (HID, HID), HID).astype(jnp.bfloat16)
    b2 = uni(keys[4], (1, HID), HID)
    w3 = uni(keys[5], (HID, HID), HID).astype(jnp.bfloat16)
    b3 = uni(keys[6], (1, HID), HID)
    # Layer 4
    k4w, k4b = jax.random.split(keys[7])
    w4 = uni(k4w, (HID, IMG), HID).astype(jnp.bfloat16)
    b4 = uni(k4b, (1, IMG), HID)
    return [w1c, w1s, b1, w2, b2, w3, b3, w4, b4]


def generator_forward(sample, condition, params):
    """sample: (B, Z), condition: (B, 3, 28, 28) NCHW -> (B, 3, 28, 28) f32."""
    B = condition.shape[0]
    cond_flat = condition.reshape(B, IMG).astype(jnp.bfloat16)
    smp = sample.astype(jnp.bfloat16)

    # Batch tile: minimal sublane padding for small B; MXU-filling 256 rows
    # (v6e/v7x native M) once the batch is large enough.
    if B <= 256:
        TM = _pad_to(B, 8)
        Bp = TM
    else:
        TM = 256
        Bp = _pad_to(B, TM)

    if Bp != B:
        cond_flat = jnp.zeros((Bp, IMG), jnp.bfloat16).at[:B].set(cond_flat)
        smp = jnp.zeros((Bp, Z), jnp.bfloat16).at[:B].set(smp)

    w1c, w1s, b1, w2, b2, w3, b3, w4, b4 = params

    const = lambda i: (0, 0)      # weights/biases: VMEM-resident across tiles
    tiled = lambda i: (i, 0)      # activations: one batch tile per grid step

    out_p = pl.pallas_call(
        mlp_generator_kernel,
        out_shape=jax.ShapeDtypeStruct((Bp, IMG), jnp.float32),
        grid=(Bp // TM,),
        in_specs=[
            pl.BlockSpec((TM, IMG), tiled),    # condition tile
            pl.BlockSpec((TM, Z), tiled),      # sample tile
            pl.BlockSpec((IMG, HID), const),   # w1 (condition slab)
            pl.BlockSpec((Z, HID), const),     # w1 (sample slab)
            pl.BlockSpec((1, HID), const),     # b1
            pl.BlockSpec((HID, HID), const),   # w2
            pl.BlockSpec((1, HID), const),     # b2
            pl.BlockSpec((HID, HID), const),   # w3
            pl.BlockSpec((1, HID), const),     # b3
            pl.BlockSpec((HID, IMG), const),   # w4
            pl.BlockSpec((1, IMG), const),     # b4
        ],
        out_specs=pl.BlockSpec((TM, IMG), tiled),
        compiler_params=pltpu.CompilerParams(
            dimension_semantics=("parallel",),
            vmem_limit_bytes=_vmem_limit_bytes(),
        ),
    )(cond_flat, smp, w1c, w1s, b1, w2, b2, w3, b3, w4, b4)

    out = out_p[:B] if Bp != B else out_p
    return out.reshape(B, 3, 28, 28)


def _reference_forward(sample, condition, params):
    """Pure-jnp reference with the same dtype policy (bf16 weights/acts,
    f32 accumulation) for a correctness check."""
    w1c, w1s, b1, w2, b2, w3, b3, w4, b4 = params
    B = condition.shape[0]
    cond = condition.reshape(B, IMG).astype(jnp.bfloat16)
    smp = sample.astype(jnp.bfloat16)
    h = (jnp.dot(cond, w1c, preferred_element_type=jnp.float32)
         + jnp.dot(smp, w1s, preferred_element_type=jnp.float32) + b1)
    h = jnp.maximum(h, 0.0).astype(jnp.bfloat16)
    h = jnp.dot(h, w2, preferred_element_type=jnp.float32) + b2
    h = jnp.maximum(h, 0.0).astype(jnp.bfloat16)
    h = jnp.dot(h, w3, preferred_element_type=jnp.float32) + b3
    h = jnp.maximum(h, 0.0).astype(jnp.bfloat16)
    y = jnp.dot(h, w4, preferred_element_type=jnp.float32) + b4
    return jax.nn.sigmoid(y).reshape(B, 3, 28, 28)


if __name__ == "__main__":
    key = jax.random.PRNGKey(0)
    k_cond, k_sample, k_params = jax.random.split(key, 3)

    B = 2
    condition = jax.random.normal(k_cond, (B, 3, 28, 28), jnp.float32)
    sample = jax.random.normal(k_sample, (B, Z), jnp.float32)
    params = init_params(k_params)

    out = generator_forward(sample, condition, params)
    out = jax.block_until_ready(out)

    assert out.shape == (B, 3, 28, 28), out.shape
    assert out.dtype == jnp.float32
    # sigmoid range sanity check
    assert bool(jnp.all((out >= 0.0) & (out <= 1.0)))
    # numerical check against a pure-jnp reference with the same dtype policy
    ref = _reference_forward(sample, condition, params)
    assert bool(jnp.max(jnp.abs(out - ref)) < 1e-2), float(
        jnp.max(jnp.abs(out - ref)))
    print("KERNEL_OK")
</pallas_src>

<mosaic_0001>
module attributes {stable_mosaic.version = 11 : i64} {
  func.func @mlp_generator_kernel(%arg0: i32, %arg1: memref<8x2352xbf16, #tpu.memory_space<vmem>>, %arg2: memref<8x32xbf16, #tpu.memory_space<vmem>>, %arg3: memref<2352x256xbf16, #tpu.memory_space<vmem>>, %arg4: memref<32x256xbf16, #tpu.memory_space<vmem>>, %arg5: memref<1x256xf32, #tpu.memory_space<vmem>>, %arg6: memref<256x256xbf16, #tpu.memory_space<vmem>>, %arg7: memref<1x256xf32, #tpu.memory_space<vmem>>, %arg8: memref<256x256xbf16, #tpu.memory_space<vmem>>, %arg9: memref<1x256xf32, #tpu.memory_space<vmem>>, %arg10: memref<256x2352xbf16, #tpu.memory_space<vmem>>, %arg11: memref<1x2352xf32, #tpu.memory_space<vmem>>, %arg12: memref<8x2352xf32, #tpu.memory_space<vmem>>) attributes {dimension_semantics = [#tpu.dimension_semantics<parallel>], iteration_bounds = array<i64: 1>, scalar_prefetch = 0 : i64, scratch_operands = 0 : i64, tpu.core_type = #tpu.core_type<tc>, window_params = [{transform_indices = @transform_0, window_bounds = array<i64: 8, 2352>}, {transform_indices = @transform_1, window_bounds = array<i64: 8, 32>}, {pipeline_mode = #tpu.pipeline_mode<synchronous>, transform_indices = @transform_2, window_bounds = array<i64: 2352, 256>}, {pipeline_mode = #tpu.pipeline_mode<synchronous>, transform_indices = @transform_3, window_bounds = array<i64: 32, 256>}, {pipeline_mode = #tpu.pipeline_mode<synchronous>, transform_indices = @transform_4, window_bounds = array<i64: 1, 256>}, {pipeline_mode = #tpu.pipeline_mode<synchronous>, transform_indices = @transform_5, window_bounds = array<i64: 256, 256>}, {pipeline_mode = #tpu.pipeline_mode<synchronous>, transform_indices = @transform_6, window_bounds = array<i64: 1, 256>}, {pipeline_mode = #tpu.pipeline_mode<synchronous>, transform_indices = @transform_7, window_bounds = array<i64: 256, 256>}, {pipeline_mode = #tpu.pipeline_mode<synchronous>, transform_indices = @transform_8, window_bounds = array<i64: 1, 256>}, {pipeline_mode = #tpu.pipeline_mode<synchronous>, transform_indices = @transform_9, window_bounds = array<i64: 256, 2352>}, {pipeline_mode = #tpu.pipeline_mode<synchronous>, transform_indices = @transform_10, window_bounds = array<i64: 1, 2352>}, {transform_indices = @transform_11, window_bounds = array<i64: 8, 2352>}]} {
    %c0 = arith.constant 0 : index
    %c0_0 = arith.constant 0 : index
    %0 = vector.load %arg1[%c0, %c0_0] : memref<8x2352xbf16, #tpu.memory_space<vmem>>, vector<8x2352xbf16>
    %c0_1 = arith.constant 0 : index
    %c0_2 = arith.constant 0 : index
    %1 = vector.load %arg3[%c0_1, %c0_2] : memref<2352x256xbf16, #tpu.memory_space<vmem>>, vector<2352x256xbf16>
    %cst = arith.constant dense<0.000000e+00> : vector<8x256xf32>
    %2 = tpu.matmul %0, %1, %cst {dimension_numbers = #tpu.dot_dimension_numbers<[1], [0], [0], [1], [0, 0, 1, 1], [], []>} : vector<8x2352xbf16>, vector<2352x256xbf16>, vector<8x256xf32> -> vector<8x256xf32>
    %c0_3 = arith.constant 0 : index
    %c0_4 = arith.constant 0 : index
    %3 = vector.load %arg2[%c0_3, %c0_4] : memref<8x32xbf16, #tpu.memory_space<vmem>>, vector<8x32xbf16>
    %c0_5 = arith.constant 0 : index
    %c0_6 = arith.constant 0 : index
    %4 = vector.load %arg4[%c0_5, %c0_6] : memref<32x256xbf16, #tpu.memory_space<vmem>>, vector<32x256xbf16>
    %cst_7 = arith.constant dense<0.000000e+00> : vector<8x256xf32>
    %5 = tpu.matmul %3, %4, %cst_7 {dimension_numbers = #tpu.dot_dimension_numbers<[1], [0], [0], [1], [0, 0, 1, 1], [], []>} : vector<8x32xbf16>, vector<32x256xbf16>, vector<8x256xf32> -> vector<8x256xf32>
    %6 = arith.addf %2, %5 : vector<8x256xf32>
    %c0_8 = arith.constant 0 : index
    %c0_9 = arith.constant 0 : index
    %7 = vector.load %arg5[%c0_8, %c0_9] : memref<1x256xf32, #tpu.memory_space<vmem>>, vector<1x256xf32>
    %8 = vector.broadcast %7 : vector<1x256xf32> to vector<8x256xf32>
    %9 = arith.addf %6, %8 : vector<8x256xf32>
    %cst_10 = arith.constant 0.000000e+00 : f32
    %10 = vector.broadcast %cst_10 : f32 to vector<8x256xf32>
    %11 = arith.maximumf %9, %10 : vector<8x256xf32>
    %12 = arith.truncf %11 : vector<8x256xf32> to vector<8x256xbf16>
    %c0_11 = arith.constant 0 : index
    %c0_12 = arith.constant 0 : index
    %13 = vector.load %arg6[%c0_11, %c0_12] : memref<256x256xbf16, #tpu.memory_space<vmem>>, vector<256x256xbf16>
    %cst_13 = arith.constant dense<0.000000e+00> : vector<8x256xf32>
    %14 = tpu.matmul %12, %13, %cst_13 {dimension_numbers = #tpu.dot_dimension_numbers<[1], [0], [0], [1], [0, 0, 1, 1], [], []>} : vector<8x256xbf16>, vector<256x256xbf16>, vector<8x256xf32> -> vector<8x256xf32>
    %c0_14 = arith.constant 0 : index
    %c0_15 = arith.constant 0 : index
    %15 = vector.load %arg7[%c0_14, %c0_15] : memref<1x256xf32, #tpu.memory_space<vmem>>, vector<1x256xf32>
    %16 = vector.broadcast %15 : vector<1x256xf32> to vector<8x256xf32>
    %17 = arith.addf %14, %16 : vector<8x256xf32>
    %cst_16 = arith.constant 0.000000e+00 : f32
    %18 = vector.broadcast %cst_16 : f32 to vector<8x256xf32>
    %19 = arith.maximumf %17, %18 : vector<8x256xf32>
    %20 = arith.truncf %19 : vector<8x256xf32> to vector<8x256xbf16>
    %c0_17 = arith.constant 0 : index
    %c0_18 = arith.constant 0 : index
    %21 = vector.load %arg8[%c0_17, %c0_18] : memref<256x256xbf16, #tpu.memory_space<vmem>>, vector<256x256xbf16>
    %cst_19 = arith.constant dense<0.000000e+00> : vector<8x256xf32>
    %22 = tpu.matmul %20, %21, %cst_19 {dimension_numbers = #tpu.dot_dimension_numbers<[1], [0], [0], [1], [0, 0, 1, 1], [], []>} : vector<8x256xbf16>, vector<256x256xbf16>, vector<8x256xf32> -> vector<8x256xf32>
    %c0_20 = arith.constant 0 : index
    %c0_21 = arith.constant 0 : index
    %23 = vector.load %arg9[%c0_20, %c0_21] : memref<1x256xf32, #tpu.memory_space<vmem>>, vector<1x256xf32>
    %24 = vector.broadcast %23 : vector<1x256xf32> to vector<8x256xf32>
    %25 = arith.addf %22, %24 : vector<8x256xf32>
    %cst_22 = arith.constant 0.000000e+00 : f32
    %26 = vector.broadcast %cst_22 : f32 to vector<8x256xf32>
    %27 = arith.maximumf %25, %26 : vector<8x256xf32>
    %28 = arith.truncf %27 : vector<8x256xf32> to vector<8x256xbf16>
    %c0_23 = arith.constant 0 : index
    %c0_24 = arith.constant 0 : index
    %29 = vector.load %arg10[%c0_23, %c0_24] : memref<256x2352xbf16, #tpu.memory_space<vmem>>, vector<256x2352xbf16>
    %cst_25 = arith.constant dense<0.000000e+00> : vector<8x2352xf32>
    %30 = tpu.matmul %28, %29, %cst_25 {dimension_numbers = #tpu.dot_dimension_numbers<[1], [0], [0], [1], [0, 0, 1, 1], [], []>} : vector<8x256xbf16>, vector<256x2352xbf16>, vector<8x2352xf32> -> vector<8x2352xf32>
    %c0_26 = arith.constant 0 : index
    %c0_27 = arith.constant 0 : index
    %31 = vector.load %arg11[%c0_26, %c0_27] : memref<1x2352xf32, #tpu.memory_space<vmem>>, vector<1x2352xf32>
    %32 = vector.broadcast %31 : vector<1x2352xf32> to vector<8x2352xf32>
    %33 = arith.addf %30, %32 : vector<8x2352xf32>
    %34 = arith.negf %33 : vector<8x2352xf32>
    %35 = math.exp %34 : vector<8x2352xf32>
    %cst_28 = arith.constant 1.000000e+00 : f32
    %36 = vector.broadcast %cst_28 : f32 to vector<8x2352xf32>
    %37 = arith.addf %36, %35 : vector<8x2352xf32>
    %38 = arith.divf %36, %37 : vector<8x2352xf32>
    %c0_29 = arith.constant 0 : index
    %c0_30 = arith.constant 0 : index
    %39 = vector.load %arg12[%c0_29, %c0_30] : memref<8x2352xf32, #tpu.memory_space<vmem>>, vector<8x2352xf32>
    tpu.vector_store %arg12[%c0_29, %c0_30], %38 {strides = array<i32>} : memref<8x2352xf32, #tpu.memory_space<vmem>>, vector<8x2352xf32>,
    return
  }
  func.func @transform_0(%arg0: i32) -> (i32, i32) {
    %c0_i32 = arith.constant 0 : i32
    %c0_i32_0 = arith.constant 0 : i32
    return %arg0, %c0_i32 : i32, i32
  }
  func.func @transform_1(%arg0: i32) -> (i32, i32) {
    %c0_i32 = arith.constant 0 : i32
    %c0_i32_0 = arith.constant 0 : i32
    return %arg0, %c0_i32 : i32, i32
  }
  func.func @transform_2(%arg0: i32) -> (i32, i32) {
    %c0_i32 = arith.constant 0 : i32
    %c0_i32_0 = arith.constant 0 : i32
    %c0_i32_1 = arith.constant 0 : i32
    return %c0_i32, %c0_i32_0 : i32, i32
  }
  func.func @transform_3(%arg0: i32) -> (i32, i32) {
    %c0_i32 = arith.constant 0 : i32
    %c0_i32_0 = arith.constant 0 : i32
    %c0_i32_1 = arith.constant 0 : i32
    return %c0_i32, %c0_i32_0 : i32, i32
  }
  func.func @transform_4(%arg0: i32) -> (i32, i32) {
    %c0_i32 = arith.constant 0 : i32
    %c0_i32_0 = arith.constant 0 : i32
    %c0_i32_1 = arith.constant 0 : i32
    return %c0_i32, %c0_i32_0 : i32, i32
  }
  func.func @transform_5(%arg0: i32) -> (i32, i32) {
    %c0_i32 = arith.constant 0 : i32
    %c0_i32_0 = arith.constant 0 : i32
    %c0_i32_1 = arith.constant 0 : i32
    return %c0_i32, %c0_i32_0 : i32, i32
  }
  func.func @transform_6(%arg0: i32) -> (i32, i32) {
    %c0_i32 = arith.constant 0 : i32
    %c0_i32_0 = arith.constant 0 : i32
    %c0_i32_1 = arith.constant 0 : i32
    return %c0_i32, %c0_i32_0 : i32, i32
  }
  func.func @transform_7(%arg0: i32) -> (i32, i32) {
    %c0_i32 = arith.constant 0 : i32
    %c0_i32_0 = arith.constant 0 : i32
    %c0_i32_1 = arith.constant 0 : i32
    return %c0_i32, %c0_i32_0 : i32, i32
  }
  func.func @transform_8(%arg0: i32) -> (i32, i32) {
    %c0_i32 = arith.constant 0 : i32
    %c0_i32_0 = arith.constant 0 : i32
    %c0_i32_1 = arith.constant 0 : i32
    return %c0_i32, %c0_i32_0 : i32, i32
  }
  func.func @transform_9(%arg0: i32) -> (i32, i32) {
    %c0_i32 = arith.constant 0 : i32
    %c0_i32_0 = arith.constant 0 : i32
    %c0_i32_1 = arith.constant 0 : i32
    return %c0_i32, %c0_i32_0 : i32, i32
  }
  func.func @transform_10(%arg0: i32) -> (i32, i32) {
    %c0_i32 = arith.constant 0 : i32
    %c0_i32_0 = arith.constant 0 : i32
    %c0_i32_1 = arith.constant 0 : i32
    return %c0_i32, %c0_i32_0 : i32, i32
  }
  func.func @transform_11(%arg0: i32) -> (i32, i32) {
    %c0_i32 = arith.constant 0 : i32
    %c0_i32_0 = arith.constant 0 : i32
    return %arg0, %c0_i32 : i32, i32
  }
}

</mosaic_0001>

<llo_original>
// kernel: tpu_custom_call.1
$region0: #{tpu_custom_call.1}
  #allocation0 [shape = 'u32[]', space=smem, size = 0x4, offset = 0x4, fixed_abs, tag = 'smem constant byte address 0x4 - core index']
  #allocation1 [shape = 'u32[72,128]{1,0:T(1,128)}', space=vmem, size = 0x9000, scoped, tag = 'internal scratch']
  %s0 = inlined_call_operand.vmem [shape: bf16[8,2352], index: 0, kind: input, shape index: {}]
  %s1 = inlined_call_operand.vmem [shape: bf16[8,32], index: 1, kind: input, shape index: {}]
  %s2 = inlined_call_operand.vmem [shape: bf16[2352,256], index: 2, kind: input, shape index: {}]
  %s3 = inlined_call_operand.vmem [shape: bf16[32,256], index: 3, kind: input, shape index: {}]
  %s4 = inlined_call_operand.vmem [shape: f32[1,256], index: 4, kind: input, shape index: {}]
  %s5 = inlined_call_operand.vmem [shape: bf16[256,256], index: 5, kind: input, shape index: {}]
  %s6 = inlined_call_operand.vmem [shape: f32[1,256], index: 6, kind: input, shape index: {}]
  %s7 = inlined_call_operand.vmem [shape: bf16[256,256], index: 7, kind: input, shape index: {}]
  %s8 = inlined_call_operand.vmem [shape: f32[1,256], index: 8, kind: input, shape index: {}]
  %s9 = inlined_call_operand.vmem [shape: bf16[256,2352], index: 9, kind: input, shape index: {}]
  %s10 = inlined_call_operand.vmem [shape: f32[1,2352], index: 10, kind: input, shape index: {}]
  %s11 = inlined_call_operand.hbm [shape: f32[8,2352], index: 11, kind: output, shape index: {}]
  %s12 = sld [smem:[#allocation0]]
  $region54: #{tpu_custom_call.1} parent=0
    _
  %s14 = ssub.s32 1, %s12
  %s15 = scalar_select 0, %s14, %s12
  $region1: #{tpu_custom_call.1} parent=0
    #allocation2 [shape = 'u8[77824]{0}', space=vmem, size = 0x13000, scoped, tag = 'output window, operand 0, single buffered']
    #allocation3 [shape = 's32[1]{0}', space=sflag, size = 0x4, scoped, tag = 'scoped memory for tpu_custom_call.1']
    %16 = vsyncpa [#allocation3], 0
    // Predicated region
    $region2: #{tpu_custom_call.1} parent=1 // pred_check
      _
    $region3: #{tpu_custom_call.1} parent=1 // pred_check_branch
      %18 = sbr.rel (0) target = $region5
    $region4: #{tpu_custom_call.1} parent=1 // pred_region
      _
    $region5: #{tpu_custom_call.1} parent=1 // pred_fallthru
      _
    // Predicated region
    $region6: #{tpu_custom_call.1} parent=1 // pred_check
      _
    $region7: #{tpu_custom_call.1} parent=1 // pred_check_branch
      %20 = sbr.rel (0) target = $region9
    $region8: #{tpu_custom_call.1} parent=1 // pred_region
      _
    $region9: #{tpu_custom_call.1} parent=1 // pred_fallthru
      _
    // Predicated region
    $region10: #{tpu_custom_call.1} parent=1 // pred_check
      _
    $region11: #{tpu_custom_call.1} parent=1 // pred_check_branch
      %22 = sbr.rel (0) target = $region13
    $region12: #{tpu_custom_call.1} parent=1 // pred_region
      _
    $region13: #{tpu_custom_call.1} parent=1 // pred_fallthru
      _
    // Predicated region
    $region14: #{tpu_custom_call.1} parent=1 // pred_check
      _
    $region15: #{tpu_custom_call.1} parent=1 // pred_check_branch
      %24 = sbr.rel (0) target = $region17
    $region16: #{tpu_custom_call.1} parent=1 // pred_region
      _
    $region17: #{tpu_custom_call.1} parent=1 // pred_fallthru
      _
    // Predicated region
    $region18: #{tpu_custom_call.1} parent=1 // pred_check
      _
    $region19: #{tpu_custom_call.1} parent=1 // pred_check_branch
      %26 = sbr.rel (0) target = $region21
    $region20: #{tpu_custom_call.1} parent=1 // pred_region
      _
    $region21: #{tpu_custom_call.1} parent=1 // pred_fallthru
      _
    // Predicated region
    $region22: #{tpu_custom_call.1} parent=1 // pred_check
      _
    $region23: #{tpu_custom_call.1} parent=1 // pred_check_branch
      %28 = sbr.rel (0) target = $region25
    $region24: #{tpu_custom_call.1} parent=1 // pred_region
      _
    $region25: #{tpu_custom_call.1} parent=1 // pred_fallthru
      _
    // Predicated region
    $region26: #{tpu_custom_call.1} parent=1 // pred_check
      _
    $region27: #{tpu_custom_call.1} parent=1 // pred_check_branch
      %30 = sbr.rel (0) target = $region29
    $region28: #{tpu_custom_call.1} parent=1 // pred_region
      _
    $region29: #{tpu_custom_call.1} parent=1 // pred_fallthru
      _
    // Predicated region
    $region30: #{tpu_custom_call.1} parent=1 // pred_check
      _
    $region31: #{tpu_custom_call.1} parent=1 // pred_check_branch
      %32 = sbr.rel (0) target = $region33
    $region32: #{tpu_custom_call.1} parent=1 // pred_region
      _
    $region33: #{tpu_custom_call.1} parent=1 // pred_fallthru
      _
    // Predicated region
    $region34: #{tpu_custom_call.1} parent=1 // pred_check
      _
    $region35: #{tpu_custom_call.1} parent=1 // pred_check_branch
      %34 = sbr.rel (0) target = $region37
    $region36: #{tpu_custom_call.1} parent=1 // pred_region
      _
    $region37: #{tpu_custom_call.1} parent=1 // pred_fallthru
      _
    // Predicated region
    $region38: #{tpu_custom_call.1} parent=1 // pred_check
      _
    $region39: #{tpu_custom_call.1} parent=1 // pred_check_branch
      %36 = sbr.rel (0) target = $region41
    $region40: #{tpu_custom_call.1} parent=1 // pred_region
      _
    $region41: #{tpu_custom_call.1} parent=1 // pred_fallthru
      _
    // Predicated region
    $region42: #{tpu_custom_call.1} parent=1 // pred_check
      _
    $region43: #{tpu_custom_call.1} parent=1 // pred_check_branch
      %38 = sbr.rel (0) target = $region45
    $region44: #{tpu_custom_call.1} parent=1 // pred_region
      _
    $region45: #{tpu_custom_call.1} parent=1 // pred_fallthru
      _
    %v40 = vld [vmem:[%s0] sm:$0xff]
    %v41 = vld [vmem:[%s0 + $0x8] sm:$0xff]
    %v42 = vld [vmem:[%s0 + $0x10] sm:$0xff]
    %v43 = vld [vmem:[%s0 + $0x18] sm:$0xff]
    %v44 = vld [vmem:[%s0 + $0x20] sm:$0xff]
    %v45 = vld [vmem:[%s0 + $0x28] sm:$0xff]
    %v46 = vld [vmem:[%s0 + $0x30] sm:$0xff]
    %v47 = vld [vmem:[%s0 + $0x38] sm:$0xff]
    %v48 = vld [vmem:[%s0 + $0x40] sm:$0xff]
    %v49 = vld [vmem:[%s0 + $0x48] sm:$0xf]
    %v50 = vld [vmem:[%s2] sm:$0xff]
    %v51 = vld [vmem:[%s2 + $0x8] sm:$0xff]
    %v52 = vld [vmem:[%s2 + $0x10] sm:$0xff]
    %v53 = vld [vmem:[%s2 + $0x18] sm:$0xff]
    %v54 = vld [vmem:[%s2 + $0x20] sm:$0xff]
    %v55 = vld [vmem:[%s2 + $0x28] sm:$0xff]
    %v56 = vld [vmem:[%s2 + $0x30] sm:$0xff]
    %v57 = vld [vmem:[%s2 + $0x38] sm:$0xff]
    %v58 = vld [vmem:[%s2 + $0x40] sm:$0xff]
    %v59 = vld [vmem:[%s2 + $0x48] sm:$0xff]
    %v60 = vld [vmem:[%s2 + $0x50] sm:$0xff]
    %v61 = vld [vmem:[%s2 + $0x58] sm:$0xff]
    %v62 = vld [vmem:[%s2 + $0x60] sm:$0xff]
    %v63 = vld [vmem:[%s2 + $0x68] sm:$0xff]
    %v64 = vld [vmem:[%s2 + $0x70] sm:$0xff]
    %v65 = vld [vmem:[%s2 + $0x78] sm:$0xff]
    %v66 = vld [vmem:[%s2 + $0x80] sm:$0xff]
    %v67 = vld [vmem:[%s2 + $0x88] sm:$0xff]
    %v68 = vld [vmem:[%s2 + $0x90] sm:$0xff]
    %v69 = vld [vmem:[%s2 + $0x98] sm:$0xff]
    %v70 = vld [vmem:[%s2 + $0xa0] sm:$0xff]
    %v71 = vld [vmem:[%s2 + $0xa8] sm:$0xff]
    %v72 = vld [vmem:[%s2 + $0xb0] sm:$0xff]
    %v73 = vld [vmem:[%s2 + $0xb8] sm:$0xff]
    %v74 = vld [vmem:[%s2 + $0xc0] sm:$0xff]
    %v75 = vld [vmem:[%s2 + $0xc8] sm:$0xff]
    %v76 = vld [vmem:[%s2 + $0xd0] sm:$0xff]
    %v77 = vld [vmem:[%s2 + $0xd8] sm:$0xff]
    %v78 = vld [vmem:[%s2 + $0xe0] sm:$0xff]
    %v79 = vld [vmem:[%s2 + $0xe8] sm:$0xff]
    %v80 = vld [vmem:[%s2 + $0xf0] sm:$0xff]
    %v81 = vld [vmem:[%s2 + $0xf8] sm:$0xff]
    %v82 = vld [vmem:[%s2 + $0x100] sm:$0xff]
    %v83 = vld [vmem:[%s2 + $0x108] sm:$0xff]
    %v84 = vld [vmem:[%s2 + $0x110] sm:$0xff]
    %v85 = vld [vmem:[%s2 + $0x118] sm:$0xff]
    %v86 = vld [vmem:[%s2 + $0x120] sm:$0xff]
    %v87 = vld [vmem:[%s2 + $0x128] sm:$0xff]
    %v88 = vld [vmem:[%s2 + $0x130] sm:$0xff]
    %v89 = vld [vmem:[%s2 + $0x138] sm:$0xff]
    %v90 = vld [vmem:[%s2 + $0x140] sm:$0xff]
    %v91 = vld [vmem:[%s2 + $0x148] sm:$0xff]
    %v92 = vld [vmem:[%s2 + $0x150] sm:$0xff]
    %v93 = vld [vmem:[%s2 + $0x158] sm:$0xff]
    %v94 = vld [vmem:[%s2 + $0x160] sm:$0xff]
    %v95 = vld [vmem:[%s2 + $0x168] sm:$0xff]
    %v96 = vld [vmem:[%s2 + $0x170] sm:$0xff]
    %v97 = vld [vmem:[%s2 + $0x178] sm:$0xff]
    %v98 = vld [vmem:[%s2 + $0x180] sm:$0xff]
    %v99 = vld [vmem:[%s2 + $0x188] sm:$0xff]
    %v100 = vld [vmem:[%s2 + $0x190] sm:$0xff]
    %v101 = vld [vmem:[%s2 + $0x198] sm:$0xff]
    %v102 = vld [vmem:[%s2 + $0x1a0] sm:$0xff]
    %v103 = vld [vmem:[%s2 + $0x1a8] sm:$0xff]
    %v104 = vld [vmem:[%s2 + $0x1b0] sm:$0xff]
    %v105 = vld [vmem:[%s2 + $0x1b8] sm:$0xff]
    %v106 = vld [vmem:[%s2 + $0x1c0] sm:$0xff]
    %v107 = vld [vmem:[%s2 + $0x1c8] sm:$0xff]
    %v108 = vld [vmem:[%s2 + $0x1d0] sm:$0xff]
    %v109 = vld [vmem:[%s2 + $0x1d8] sm:$0xff]
    %v110 = vld [vmem:[%s2 + $0x1e0] sm:$0xff]
    %v111 = vld [vmem:[%s2 + $0x1e8] sm:$0xff]
    %v112 = vld [vmem:[%s2 + $0x1f0] sm:$0xff]
    %v113 = vld [vmem:[%s2 + $0x1f8] sm:$0xff]
    %v114 = vld [vmem:[%s2 + $0x200] sm:$0xff]
    %v115 = vld [vmem:[%s2 + $0x208] sm:$0xff]
    %v116 = vld [vmem:[%s2 + $0x210] sm:$0xff]
    %v117 = vld [vmem:[%s2 + $0x218] sm:$0xff]
    %v118 = vld [vmem:[%s2 + $0x220] sm:$0xff]
    %v119 = vld [vmem:[%s2 + $0x228] sm:$0xff]
    %v120 = vld [vmem:[%s2 + $0x230] sm:$0xff]
    %v121 = vld [vmem:[%s2 + $0x238] sm:$0xff]
    %v122 = vld [vmem:[%s2 + $0x240] sm:$0xff]
    %v123 = vld [vmem:[%s2 + $0x248] sm:$0xff]
    %v124 = vld [vmem:[%s2 + $0x250] sm:$0xff]
    %v125 = vld [vmem:[%s2 + $0x258] sm:$0xff]
    %v126 = vld [vmem:[%s2 + $0x260] sm:$0xff]
    %v127 = vld [vmem:[%s2 + $0x268] sm:$0xff]
    %v128 = vld [vmem:[%s2 + $0x270] sm:$0xff]
    %v129 = vld [vmem:[%s2 + $0x278] sm:$0xff]
    %v130 = vld [vmem:[%s2 + $0x280] sm:$0xff]
    %v131 = vld [vmem:[%s2 + $0x288] sm:$0xff]
    %v132 = vld [vmem:[%s2 + $0x290] sm:$0xff]
    %v133 = vld [vmem:[%s2 + $0x298] sm:$0xff]
    %v134 = vld [vmem:[%s2 + $0x2a0] sm:$0xff]
    %v135 = vld [vmem:[%s2 + $0x2a8] sm:$0xff]
    %v136 = vld [vmem:[%s2 + $0x2b0] sm:$0xff]
    %v137 = vld [vmem:[%s2 + $0x2b8] sm:$0xff]
    %v138 = vld [vmem:[%s2 + $0x2c0] sm:$0xff]
    %v139 = vld [vmem:[%s2 + $0x2c8] sm:$0xff]
    %v140 = vld [vmem:[%s2 + $0x2d0] sm:$0xff]
    %v141 = vld [vmem:[%s2 + $0x2d8] sm:$0xff]
    %v142 = vld [vmem:[%s2 + $0x2e0] sm:$0xff]
    %v143 = vld [vmem:[%s2 + $0x2e8] sm:$0xff]
    %v144 = vld [vmem:[%s2 + $0x2f0] sm:$0xff]
    %v145 = vld [vmem:[%s2 + $0x2f8] sm:$0xff]
    %v146 = vld [vmem:[%s2 + $0x300] sm:$0xff]
    %v147 = vld [vmem:[%s2 + $0x308] sm:$0xff]
    %v148 = vld [vmem:[%s2 + $0x310] sm:$0xff]
    %v149 = vld [vmem:[%s2 + $0x318] sm:$0xff]
    %v150 = vld [vmem:[%s2 + $0x320] sm:$0xff]
    %v151 = vld [vmem:[%s2 + $0x328] sm:$0xff]
    %v152 = vld [vmem:[%s2 + $0x330] sm:$0xff]
    %v153 = vld [vmem:[%s2 + $0x338] sm:$0xff]
    %v154 = vld [vmem:[%s2 + $0x340] sm:$0xff]
    %v155 = vld [vmem:[%s2 + $0x348] sm:$0xff]
    %v156 = vld [vmem:[%s2 + $0x350] sm:$0xff]
    %v157 = vld [vmem:[%s2 + $0x358] sm:$0xff]
    %v158 = vld [vmem:[%s2 + $0x360] sm:$0xff]
    %v159 = vld [vmem:[%s2 + $0x368] sm:$0xff]
    %v160 = vld [vmem:[%s2 + $0x370] sm:$0xff]
    %v161 = vld [vmem:[%s2 + $0x378] sm:$0xff]
    %v162 = vld [vmem:[%s2 + $0x380] sm:$0xff]
    %v163 = vld [vmem:[%s2 + $0x388] sm:$0xff]
    %v164 = vld [vmem:[%s2 + $0x390] sm:$0xff]
    %v165 = vld [vmem:[%s2 + $0x398] sm:$0xff]
    %v166 = vld [vmem:[%s2 + $0x3a0] sm:$0xff]
    %v167 = vld [vmem:[%s2 + $0x3a8] sm:$0xff]
    %v168 = vld [vmem:[%s2 + $0x3b0] sm:$0xff]
    %v169 = vld [vmem:[%s2 + $0x3b8] sm:$0xff]
    %v170 = vld [vmem:[%s2 + $0x3c0] sm:$0xff]
    %v171 = vld [vmem:[%s2 + $0x3c8] sm:$0xff]
    %v172 = vld [vmem:[%s2 + $0x3d0] sm:$0xff]
    %v173 = vld [vmem:[%s2 + $0x3d8] sm:$0xff]
    %v174 = vld [vmem:[%s2 + $0x3e0] sm:$0xff]
    %v175 = vld [vmem:[%s2 + $0x3e8] sm:$0xff]
    %v176 = vld [vmem:[%s2 + $0x3f0] sm:$0xff]
    %v177 = vld [vmem:[%s2 + $0x3f8] sm:$0xff]
    %v178 = vld [vmem:[%s2 + $0x400] sm:$0xff]
    %v179 = vld [vmem:[%s2 + $0x408] sm:$0xff]
    %v180 = vld [vmem:[%s2 + $0x410] sm:$0xff]
    %v181 = vld [vmem:[%s2 + $0x418] sm:$0xff]
    %v182 = vld [vmem:[%s2 + $0x420] sm:$0xff]
    %v183 = vld [vmem:[%s2 + $0x428] sm:$0xff]
    %v184 = vld [vmem:[%s2 + $0x430] sm:$0xff]
    %v185 = vld [vmem:[%s2 + $0x438] sm:$0xff]
    %v186 = vld [vmem:[%s2 + $0x440] sm:$0xff]
    %v187 = vld [vmem:[%s2 + $0x448] sm:$0xff]
    %v188 = vld [vmem:[%s2 + $0x450] sm:$0xff]
    %v189 = vld [vmem:[%s2 + $0x458] sm:$0xff]
    %v190 = vld [vmem:[%s2 + $0x460] sm:$0xff]
    %v191 = vld [vmem:[%s2 + $0x468] sm:$0xff]
    %v192 = vld [vmem:[%s2 + $0x470] sm:$0xff]
    %v193 = vld [vmem:[%s2 + $0x478] sm:$0xff]
    %v194 = vld [vmem:[%s2 + $0x480] sm:$0xff]
    %v195 = vld [vmem:[%s2 + $0x488] sm:$0xff]
    %v196 = vld [vmem:[%s2 + $0x490] sm:$0xff]
    %v197 = vld [vmem:[%s2 + $0x498] sm:$0xff]
    %v198 = vld [vmem:[%s2 + $0x4a0] sm:$0xff]
    %v199 = vld [vmem:[%s2 + $0x4a8] sm:$0xff]
    %v200 = vld [vmem:[%s2 + $0x4b0] sm:$0xff]
    %v201 = vld [vmem:[%s2 + $0x4b8] sm:$0xff]
    %v202 = vld [vmem:[%s2 + $0x4c0] sm:$0xff]
    %v203 = vld [vmem:[%s2 + $0x4c8] sm:$0xff]
    %v204 = vld [vmem:[%s2 + $0x4d0] sm:$0xff]
    %v205 = vld [vmem:[%s2 + $0x4d8] sm:$0xff]
    %v206 = vld [vmem:[%s2 + $0x4e0] sm:$0xff]
    %v207 = vld [vmem:[%s2 + $0x4e8] sm:$0xff]
    %v208 = vld [vmem:[%s2 + $0x4f0] sm:$0xff]
    %v209 = vld [vmem:[%s2 + $0x4f8] sm:$0xff]
    %v210 = vld [vmem:[%s2 + $0x500] sm:$0xff]
    %v211 = vld [vmem:[%s2 + $0x508] sm:$0xff]
    %v212 = vld [vmem:[%s2 + $0x510] sm:$0xff]
    %v213 = vld [vmem:[%s2 + $0x518] sm:$0xff]
    %v214 = vld [vmem:[%s2 + $0x520] sm:$0xff]
    %v215 = vld [vmem:[%s2 + $0x528] sm:$0xff]
    %v216 = vld [vmem:[%s2 + $0x530] sm:$0xff]
    %v217 = vld [vmem:[%s2 + $0x538] sm:$0xff]
    %v218 = vld [vmem:[%s2 + $0x540] sm:$0xff]
    %v219 = vld [vmem:[%s2 + $0x548] sm:$0xff]
    %v220 = vld [vmem:[%s2 + $0x550] sm:$0xff]
    %v221 = vld [vmem:[%s2 + $0x558] sm:$0xff]
    %v222 = vld [vmem:[%s2 + $0x560] sm:$0xff]
    %v223 = vld [vmem:[%s2 + $0x568] sm:$0xff]
    %v224 = vld [vmem:[%s2 + $0x570] sm:$0xff]
    %v225 = vld [vmem:[%s2 + $0x578] sm:$0xff]
    %v226 = vld [vmem:[%s2 + $0x580] sm:$0xff]
    %v227 = vld [vmem:[%s2 + $0x588] sm:$0xff]
    %v228 = vld [vmem:[%s2 + $0x590] sm:$0xff]
    %v229 = vld [vmem:[%s2 + $0x598] sm:$0xff]
    %v230 = vld [vmem:[%s2 + $0x5a0] sm:$0xff]
    %v231 = vld [vmem:[%s2 + $0x5a8] sm:$0xff]
    %v232 = vld [vmem:[%s2 + $0x5b0] sm:$0xff]
    %v233 = vld [vmem:[%s2 + $0x5b8] sm:$0xff]
    %v234 = vld [vmem:[%s2 + $0x5c0] sm:$0xff]
    %v235 = vld [vmem:[%s2 + $0x5c8] sm:$0xff]
    %v236 = vld [vmem:[%s2 + $0x5d0] sm:$0xff]
    %v237 = vld [vmem:[%s2 + $0x5d8] sm:$0xff]
    %v238 = vld [vmem:[%s2 + $0x5e0] sm:$0xff]
    %v239 = vld [vmem:[%s2 + $0x5e8] sm:$0xff]
    %v240 = vld [vmem:[%s2 + $0x5f0] sm:$0xff]
    %v241 = vld [vmem:[%s2 + $0x5f8] sm:$0xff]
    %v242 = vld [vmem:[%s2 + $0x600] sm:$0xff]
    %v243 = vld [vmem:[%s2 + $0x608] sm:$0xff]
    %v244 = vld [vmem:[%s2 + $0x610] sm:$0xff]
    %v245 = vld [vmem:[%s2 + $0x618] sm:$0xff]
    %v246 = vld [vmem:[%s2 + $0x620] sm:$0xff]
    %v247 = vld [vmem:[%s2 + $0x628] sm:$0xff]
    %v248 = vld [vmem:[%s2 + $0x630] sm:$0xff]
    %v249 = vld [vmem:[%s2 + $0x638] sm:$0xff]
    %v250 = vld [vmem:[%s2 + $0x640] sm:$0xff]
    %v251 = vld [vmem:[%s2 + $0x648] sm:$0xff]
    %v252 = vld [vmem:[%s2 + $0x650] sm:$0xff]
    %v253 = vld [vmem:[%s2 + $0x658] sm:$0xff]
    %v254 = vld [vmem:[%s2 + $0x660] sm:$0xff]
    %v255 = vld [vmem:[%s2 + $0x668] sm:$0xff]
    %v256 = vld [vmem:[%s2 + $0x670] sm:$0xff]
    %v257 = vld [vmem:[%s2 + $0x678] sm:$0xff]
    %v258 = vld [vmem:[%s2 + $0x680] sm:$0xff]
    %v259 = vld [vmem:[%s2 + $0x688] sm:$0xff]
    %v260 = vld [vmem:[%s2 + $0x690] sm:$0xff]
    %v261 = vld [vmem:[%s2 + $0x698] sm:$0xff]
    %v262 = vld [vmem:[%s2 + $0x6a0] sm:$0xff]
    %v263 = vld [vmem:[%s2 + $0x6a8] sm:$0xff]
    %v264 = vld [vmem:[%s2 + $0x6b0] sm:$0xff]
    %v265 = vld [vmem:[%s2 + $0x6b8] sm:$0xff]
    %v266 = vld [vmem:[%s2 + $0x6c0] sm:$0xff]
    %v267 = vld [vmem:[%s2 + $0x6c8] sm:$0xff]
    %v268 = vld [vmem:[%s2 + $0x6d0] sm:$0xff]
    %v269 = vld [vmem:[%s2 + $0x6d8] sm:$0xff]
    %v270 = vld [vmem:[%s2 + $0x6e0] sm:$0xff]
    %v271 = vld [vmem:[%s2 + $0x6e8] sm:$0xff]
    %v272 = vld [vmem:[%s2 + $0x6f0] sm:$0xff]
    %v273 = vld [vmem:[%s2 + $0x6f8] sm:$0xff]
    %v274 = vld [vmem:[%s2 + $0x700] sm:$0xff]
    %v275 = vld [vmem:[%s2 + $0x708] sm:$0xff]
    %v276 = vld [vmem:[%s2 + $0x710] sm:$0xff]
    %v277 = vld [vmem:[%s2 + $0x718] sm:$0xff]
    %v278 = vld [vmem:[%s2 + $0x720] sm:$0xff]
    %v279 = vld [vmem:[%s2 + $0x728] sm:$0xff]
    %v280 = vld [vmem:[%s2 + $0x730] sm:$0xff]
    %v281 = vld [vmem:[%s2 + $0x738] sm:$0xff]
    %v282 = vld [vmem:[%s2 + $0x740] sm:$0xff]
    %v283 = vld [vmem:[%s2 + $0x748] sm:$0xff]
    %v284 = vld [vmem:[%s2 + $0x750] sm:$0xff]
    %v285 = vld [vmem:[%s2 + $0x758] sm:$0xff]
    %v286 = vld [vmem:[%s2 + $0x760] sm:$0xff]
    %v287 = vld [vmem:[%s2 + $0x768] sm:$0xff]
    %v288 = vld [vmem:[%s2 + $0x770] sm:$0xff]
    %v289 = vld [vmem:[%s2 + $0x778] sm:$0xff]
    %v290 = vld [vmem:[%s2 + $0x780] sm:$0xff]
    %v291 = vld [vmem:[%s2 + $0x788] sm:$0xff]
    %v292 = vld [vmem:[%s2 + $0x790] sm:$0xff]
    %v293 = vld [vmem:[%s2 + $0x798] sm:$0xff]
    %v294 = vld [vmem:[%s2 + $0x7a0] sm:$0xff]
    %v295 = vld [vmem:[%s2 + $0x7a8] sm:$0xff]
    %v296 = vld [vmem:[%s2 + $0x7b0] sm:$0xff]
    %v297 = vld [vmem:[%s2 + $0x7b8] sm:$0xff]
    %v298 = vld [vmem:[%s2 + $0x7c0] sm:$0xff]
    %v299 = vld [vmem:[%s2 + $0x7c8] sm:$0xff]
    %v300 = vld [vmem:[%s2 + $0x7d0] sm:$0xff]
    %v301 = vld [vmem:[%s2 + $0x7d8] sm:$0xff]
    %v302 = vld [vmem:[%s2 + $0x7e0] sm:$0xff]
    %v303 = vld [vmem:[%s2 + $0x7e8] sm:$0xff]
    %v304 = vld [vmem:[%s2 + $0x7f0] sm:$0xff]
    %v305 = vld [vmem:[%s2 + $0x7f8] sm:$0xff]
    %v306 = vld [vmem:[%s2 + $0x800] sm:$0xff]
    %v307 = vld [vmem:[%s2 + $0x808] sm:$0xff]
    %v308 = vld [vmem:[%s2 + $0x810] sm:$0xff]
    %v309 = vld [vmem:[%s2 + $0x818] sm:$0xff]
    %v310 = vld [vmem:[%s2 + $0x820] sm:$0xff]
    %v311 = vld [vmem:[%s2 + $0x828] sm:$0xff]
    %v312 = vld [vmem:[%s2 + $0x830] sm:$0xff]
    %v313 = vld [vmem:[%s2 + $0x838] sm:$0xff]
    %v314 = vld [vmem:[%s2 + $0x840] sm:$0xff]
    %v315 = vld [vmem:[%s2 + $0x848] sm:$0xff]
    %v316 = vld [vmem:[%s2 + $0x850] sm:$0xff]
    %v317 = vld [vmem:[%s2 + $0x858] sm:$0xff]
    %v318 = vld [vmem:[%s2 + $0x860] sm:$0xff]
    %v319 = vld [vmem:[%s2 + $0x868] sm:$0xff]
    %v320 = vld [vmem:[%s2 + $0x870] sm:$0xff]
    %v321 = vld [vmem:[%s2 + $0x878] sm:$0xff]
    %v322 = vld [vmem:[%s2 + $0x880] sm:$0xff]
    %v323 = vld [vmem:[%s2 + $0x888] sm:$0xff]
    %v324 = vld [vmem:[%s2 + $0x890] sm:$0xff]
    %v325 = vld [vmem:[%s2 + $0x898] sm:$0xff]
    %v326 = vld [vmem:[%s2 + $0x8a0] sm:$0xff]
    %v327 = vld [vmem:[%s2 + $0x8a8] sm:$0xff]
    %v328 = vld [vmem:[%s2 + $0x8b0] sm:$0xff]
    %v329 = vld [vmem:[%s2 + $0x8b8] sm:$0xff]
    %v330 = vld [vmem:[%s2 + $0x8c0] sm:$0xff]
    %v331 = vld [vmem:[%s2 + $0x8c8] sm:$0xff]
    %v332 = vld [vmem:[%s2 + $0x8d0] sm:$0xff]
    %v333 = vld [vmem:[%s2 + $0x8d8] sm:$0xff]
    %v334 = vld [vmem:[%s2 + $0x8e0] sm:$0xff]
    %v335 = vld [vmem:[%s2 + $0x8e8] sm:$0xff]
    %v336 = vld [vmem:[%s2 + $0x8f0] sm:$0xff]
    %v337 = vld [vmem:[%s2 + $0x8f8] sm:$0xff]
    %v338 = vld [vmem:[%s2 + $0x900] sm:$0xff]
    %v339 = vld [vmem:[%s2 + $0x908] sm:$0xff]
    %v340 = vld [vmem:[%s2 + $0x910] sm:$0xff]
    %v341 = vld [vmem:[%s2 + $0x918] sm:$0xff]
    %v342 = vld [vmem:[%s2 + $0x920] sm:$0xff]
    %v343 = vld [vmem:[%s2 + $0x928] sm:$0xff]
    %v344 = vld [vmem:[%s1] sm:$0xf]
    %v345 = vld [vmem:[%s3] sm:$0xff]
    %v346 = vld [vmem:[%s3 + $0x8] sm:$0xff]
    %v347 = vld [vmem:[%s3 + $0x10] sm:$0xff]
    %v348 = vld [vmem:[%s3 + $0x18] sm:$0xff]
    %v353 = vunpack.c.l.b16 %v345
    %v354 = vunpack.c.h.b16 %v345
    %v355 = vunpack.c.l.b16 %v346
    %v356 = vunpack.c.h.b16 %v346
    %v357 = vunpack.c.l.b16 %v347
    %v358 = vunpack.c.h.b16 %v347
    %v359 = vunpack.c.l.b16 %v348
    %v360 = vunpack.c.h.b16 %v348
    %v361 = vpack.c.b16 %v355, %v353
    %v362 = vpack.c.b16 %v356, %v354
    %v363 = vpack.c.b16 %v359, %v357
    %v364 = vpack.c.b16 %v360, %v358
    %vm369 = vcmask 261120
    %v371 = vsel %vm369, %v344, 0
    %373 = vmatpush.bf16.msra.mxu0 0
    %374 = vmatpush.bf16.msra.mxu0 0
    %375 = vmatpush.bf16.msra.mxu0 0
    %376 = vmatpush.bf16.msra.mxu0 0
    %377 = vmatpush.bf16.msra.mxu0 0
    %378 = vmatpush.bf16.msra.mxu0 0
    %379 = vmatpush.bf16.msra.mxu0 %v363
    %380 = vmatpush.bf16.msra.mxu0 %v361
    %381 = vmatmul.bf16.gmra.mxu0 %v371
    %v382 = vpop.f32.mrf.mxu0
    %v383 = vadd.f32 0.0, %v382
    %v384 = vpop.f32.mrf.mxu0
    %385 = vdwg.mxu0
    %386 = vmatpush.bf16.msra.mxu0 0
    %387 = vmatpush.bf16.msra.mxu0 0
    %388 = vmatpush.bf16.msra.mxu0 0
    %389 = vmatpush.bf16.msra.mxu0 0
    %390 = vmatpush.bf16.msra.mxu0 0
    %391 = vmatpush.bf16.msra.mxu0 0
    %392 = vmatpush.bf16.msra.mxu0 %v364
    %393 = vmatpush.bf16.msra.mxu0 %v362
    %394 = vmatmul.bf16.gmra.mxu0 %v371
    %v395 = vpop.f32.mrf.mxu0
    %v396 = vadd.f32 0.0, %v395
    %v397 = vpop.f32.mrf.mxu0
    %398 = vdwg.mxu0
    %v409 = vunpack.c.l.b16 %v40
    %v410 = vunpack.c.h.b16 %v40
    %v411 = vunpack.c.l.b16 %v41
    %v412 = vunpack.c.h.b16 %v41
    %v413 = vunpack.c.l.b16 %v42
    %v414 = vunpack.c.h.b16 %v42
    %v415 = vunpack.c.l.b16 %v43
    %v416 = vunpack.c.h.b16 %v43
    %v417 = vunpack.c.l.b16 %v44
    %v418 = vunpack.c.h.b16 %v44
    %v419 = vunpack.c.l.b16 %v45
    %v420 = vunpack.c.h.b16 %v45
    %v421 = vunpack.c.l.b16 %v46
    %v422 = vunpack.c.h.b16 %v46
    %v423 = vunpack.c.l.b16 %v47
    %v424 = vunpack.c.h.b16 %v47
    %v425 = vunpack.c.l.b16 %v48
    %v426 = vunpack.c.h.b16 %v48
    %v427 = vunpack.c.l.b16 %v49
    %v428 = vpack.c.b16 %v409, %v409
    %v429 = vpack.c.b16 %v410, %v410
    %v430 = vpack.c.b16 %v411, %v411
    %v431 = vpack.c.b16 %v412, %v412
    %v432 = vpack.c.b16 %v413, %v413
    %v433 = vpack.c.b16 %v414, %v414
    %v434 = vpack.c.b16 %v415, %v415
    %v435 = vpack.c.b16 %v416, %v416
    %v436 = vpack.c.b16 %v417, %v417
    %v437 = vpack.c.b16 %v418, %v418
    %v438 = vpack.c.b16 %v419, %v419
    %v439 = vpack.c.b16 %v420, %v420
    %v440 = vpack.c.b16 %v421, %v421
    %v441 = vpack.c.b16 %v422, %v422
    %v442 = vpack.c.b16 %v423, %v423
    %v443 = vpack.c.b16 %v424, %v424
    %v444 = vpack.c.b16 %v425, %v425
    %v445 = vpack.c.b16 %v426, %v426
    %v446 = vpack.c.b16 %v427, %v427
    %v759 = vunpack.c.l.b16 %v50
    %v760 = vunpack.c.h.b16 %v50
    %v761 = vunpack.c.l.b16 %v51
    %v762 = vunpack.c.h.b16 %v51
    %v763 = vunpack.c.l.b16 %v52
    %v764 = vunpack.c.h.b16 %v52
    %v765 = vunpack.c.l.b16 %v53
    %v766 = vunpack.c.h.b16 %v53
    %v767 = vunpack.c.l.b16 %v54
    %v768 = vunpack.c.h.b16 %v54
    %v769 = vunpack.c.l.b16 %v55
    %v770 = vunpack.c.h.b16 %v55
    %v771 = vunpack.c.l.b16 %v56
    %v772 = vunpack.c.h.b16 %v56
    %v773 = vunpack.c.l.b16 %v57
    %v774 = vunpack.c.h.b16 %v57
    %v775 = vunpack.c.l.b16 %v58
    %v776 = vunpack.c.h.b16 %v58
    %v777 = vunpack.c.l.b16 %v59
    %v778 = vunpack.c.h.b16 %v59
    %v779 = vunpack.c.l.b16 %v60
    %v780 = vunpack.c.h.b16 %v60
    %v781 = vunpack.c.l.b16 %v61
    %v782 = vunpack.c.h.b16 %v61
    %v783 = vunpack.c.l.b16 %v62
    %v784 = vunpack.c.h.b16 %v62
    %v785 = vunpack.c.l.b16 %v63
    %v786 = vunpack.c.h.b16 %v63
    %v787 = vunpack.c.l.b16 %v64
    %v788 = vunpack.c.h.b16 %v64
    %v789 = vunpack.c.l.b16 %v65
    %v790 = vunpack.c.h.b16 %v65
    %v791 = vunpack.c.l.b16 %v66
    %v792 = vunpack.c.h.b16 %v66
    %v793 = vunpack.c.l.b16 %v67
    %v794 = vunpack.c.h.b16 %v67
    %v795 = vunpack.c.l.b16 %v68
    %v796 = vunpack.c.h.b16 %v68
    %v797 = vunpack.c.l.b16 %v69
    %v798 = vunpack.c.h.b16 %v69
    %v799 = vunpack.c.l.b16 %v70
    %v800 = vunpack.c.h.b16 %v70
    %v801 = vunpack.c.l.b16 %v71
    %v802 = vunpack.c.h.b16 %v71
    %v803 = vunpack.c.l.b16 %v72
    %v804 = vunpack.c.h.b16 %v72
    %v805 = vunpack.c.l.b16 %v73
    %v806 = vunpack.c.h.b16 %v73
    %v807 = vunpack.c.l.b16 %v74
    %v808 = vunpack.c.h.b16 %v74
    %v809 = vunpack.c.l.b16 %v75
    %v810 = vunpack.c.h.b16 %v75
    %v811 = vunpack.c.l.b16 %v76
    %v812 = vunpack.c.h.b16 %v76
    %v813 = vunpack.c.l.b16 %v77
    %v814 = vunpack.c.h.b16 %v77
    %v815 = vunpack.c.l.b16 %v78
    %v816 = vunpack.c.h.b16 %v78
    %v817 = vunpack.c.l.b16 %v79
    %v818 = vunpack.c.h.b16 %v79
    %v819 = vunpack.c.l.b16 %v80
    %v820 = vunpack.c.h.b16 %v80
    %v821 = vunpack.c.l.b16 %v81
    %v822 = vunpack.c.h.b16 %v81
    %v823 = vunpack.c.l.b16 %v82
    %v824 = vunpack.c.h.b16 %v82
    %v825 = vunpack.c.l.b16 %v83
    %v826 = vunpack.c.h.b16 %v83
    %v827 = vunpack.c.l.b16 %v84
    %v828 = vunpack.c.h.b16 %v84
    %v829 = vunpack.c.l.b16 %v85
    %v830 = vunpack.c.h.b16 %v85
    %v831 = vunpack.c.l.b16 %v86
    %v832 = vunpack.c.h.b16 %v86
    %v833 = vunpack.c.l.b16 %v87
    %v834 = vunpack.c.h.b16 %v87
    %v835 = vunpack.c.l.b16 %v88
    %v836 = vunpack.c.h.b16 %v88
    %v837 = vunpack.c.l.b16 %v89
    %v838 = vunpack.c.h.b16 %v89
    %v839 = vunpack.c.l.b16 %v90
    %v840 = vunpack.c.h.b16 %v90
    %v841 = vunpack.c.l.b16 %v91
    %v842 = vunpack.c.h.b16 %v91
    %v843 = vunpack.c.l.b16 %v92
    %v844 = vunpack.c.h.b16 %v92
    %v845 = vunpack.c.l.b16 %v93
    %v846 = vunpack.c.h.b16 %v93
    %v847 = vunpack.c.l.b16 %v94
    %v848 = vunpack.c.h.b16 %v94
    %v849 = vunpack.c.l.b16 %v95
    %v850 = vunpack.c.h.b16 %v95
    %v851 = vunpack.c.l.b16 %v96
    %v852 = vunpack.c.h.b16 %v96
    %v853 = vunpack.c.l.b16 %v97
    %v854 = vunpack.c.h.b16 %v97
    %v855 = vunpack.c.l.b16 %v98
    %v856 = vunpack.c.h.b16 %v98
    %v857 = vunpack.c.l.b16 %v99
    %v858 = vunpack.c.h.b16 %v99
    %v859 = vunpack.c.l.b16 %v100
    %v860 = vunpack.c.h.b16 %v100
    %v861 = vunpack.c.l.b16 %v101
    %v862 = vunpack.c.h.b16 %v101
    %v863 = vunpack.c.l.b16 %v102
    %v864 = vunpack.c.h.b16 %v102
    %v865 = vunpack.c.l.b16 %v103
    %v866 = vunpack.c.h.b16 %v103
    %v867 = vunpack.c.l.b16 %v104
    %v868 = vunpack.c.h.b16 %v104
    %v869 = vunpack.c.l.b16 %v105
    %v870 = vunpack.c.h.b16 %v105
    %v871 = vunpack.c.l.b16 %v106
    %v872 = vunpack.c.h.b16 %v106
    %v873 = vunpack.c.l.b16 %v107
    %v874 = vunpack.c.h.b16 %v107
    %v875 = vunpack.c.l.b16 %v108
    %v876 = vunpack.c.h.b16 %v108
    %v877 = vunpack.c.l.b16 %v109
    %v878 = vunpack.c.h.b16 %v109
    %v879 = vunpack.c.l.b16 %v110
    %v880 = vunpack.c.h.b16 %v110
    %v881 = vunpack.c.l.b16 %v111
    %v882 = vunpack.c.h.b16 %v111
    %v883 = vunpack.c.l.b16 %v112
    %v884 = vunpack.c.h.b16 %v112
    %v885 = vunpack.c.l.b16 %v113
    %v886 = vunpack.c.h.b16 %v113
    %v887 = vunpack.c.l.b16 %v114
    %v888 = vunpack.c.h.b16 %v114
    %v889 = vunpack.c.l.b16 %v115
    %v890 = vunpack.c.h.b16 %v115
    %v891 = vunpack.c.l.b16 %v116
    %v892 = vunpack.c.h.b16 %v116
    %v893 = vunpack.c.l.b16 %v117
    %v894 = vunpack.c.h.b16 %v117
    %v895 = vunpack.c.l.b16 %v118
    %v896 = vunpack.c.h.b16 %v118
    %v897 = vunpack.c.l.b16 %v119
    %v898 = vunpack.c.h.b16 %v119
    %v899 = vunpack.c.l.b16 %v120
    %v900 = vunpack.c.h.b16 %v120
    %v901 = vunpack.c.l.b16 %v121
    %v902 = vunpack.c.h.b16 %v121
    %v903 = vunpack.c.l.b16 %v122
    %v904 = vunpack.c.h.b16 %v122
    %v905 = vunpack.c.l.b16 %v123
    %v906 = vunpack.c.h.b16 %v123
    %v907 = vunpack.c.l.b16 %v124
    %v908 = vunpack.c.h.b16 %v124
    %v909 = vunpack.c.l.b16 %v125
    %v910 = vunpack.c.h.b16 %v125
    %v911 = vunpack.c.l.b16 %v126
    %v912 = vunpack.c.h.b16 %v126
    %v913 = vunpack.c.l.b16 %v127
    %v914 = vunpack.c.h.b16 %v127
    %v915 = vunpack.c.l.b16 %v128
    %v916 = vunpack.c.h.b16 %v128
    %v917 = vunpack.c.l.b16 %v129
    %v918 = vunpack.c.h.b16 %v129
    %v919 = vunpack.c.l.b16 %v130
    %v920 = vunpack.c.h.b16 %v130
    %v921 = vunpack.c.l.b16 %v131
    %v922 = vunpack.c.h.b16 %v131
    %v923 = vunpack.c.l.b16 %v132
    %v924 = vunpack.c.h.b16 %v132
    %v925 = vunpack.c.l.b16 %v133
    %v926 = vunpack.c.h.b16 %v133
    %v927 = vunpack.c.l.b16 %v134
    %v928 = vunpack.c.h.b16 %v134
    %v929 = vunpack.c.l.b16 %v135
    %v930 = vunpack.c.h.b16 %v135
    %v931 = vunpack.c.l.b16 %v136
    %v932 = vunpack.c.h.b16 %v136
    %v933 = vunpack.c.l.b16 %v137
    %v934 = vunpack.c.h.b16 %v137
    %v935 = vunpack.c.l.b16 %v138
    %v936 = vunpack.c.h.b16 %v138
    %v937 = vunpack.c.l.b16 %v139
    %v938 = vunpack.c.h.b16 %v139
    %v939 = vunpack.c.l.b16 %v140
    %v940 = vunpack.c.h.b16 %v140
    %v941 = vunpack.c.l.b16 %v141
    %v942 = vunpack.c.h.b16 %v141
    %v943 = vunpack.c.l.b16 %v142
    %v944 = vunpack.c.h.b16 %v142
    %v945 = vunpack.c.l.b16 %v143
    %v946 = vunpack.c.h.b16 %v143
    %v947 = vunpack.c.l.b16 %v144
    %v948 = vunpack.c.h.b16 %v144
    %v949 = vunpack.c.l.b16 %v145
    %v950 = vunpack.c.h.b16 %v145
    %v951 = vunpack.c.l.b16 %v146
    %v952 = vunpack.c.h.b16 %v146
    %v953 = vunpack.c.l.b16 %v147
    %v954 = vunpack.c.h.b16 %v147
    %v955 = vunpack.c.l.b16 %v148
    %v956 = vunpack.c.h.b16 %v148
    %v957 = vunpack.c.l.b16 %v149
    %v958 = vunpack.c.h.b16 %v149
    %v959 = vunpack.c.l.b16 %v150
    %v960 = vunpack.c.h.b16 %v150
    %v961 = vunpack.c.l.b16 %v151
    %v962 = vunpack.c.h.b16 %v151
    %v963 = vunpack.c.l.b16 %v152
    %v964 = vunpack.c.h.b16 %v152
    %v965 = vunpack.c.l.b16 %v153
    %v966 = vunpack.c.h.b16 %v153
    %v967 = vunpack.c.l.b16 %v154
    %v968 = vunpack.c.h.b16 %v154
    %v969 = vunpack.c.l.b16 %v155
    %v970 = vunpack.c.h.b16 %v155
    %v971 = vunpack.c.l.b16 %v156
    %v972 = vunpack.c.h.b16 %v156
    %v973 = vunpack.c.l.b16 %v157
    %v974 = vunpack.c.h.b16 %v157
    %v975 = vunpack.c.l.b16 %v158
    %v976 = vunpack.c.h.b16 %v158
    %v977 = vunpack.c.l.b16 %v159
    %v978 = vunpack.c.h.b16 %v159
    %v979 = vunpack.c.l.b16 %v160
    %v980 = vunpack.c.h.b16 %v160
    %v981 = vunpack.c.l.b16 %v161
    %v982 = vunpack.c.h.b16 %v161
    %v983 = vunpack.c.l.b16 %v162
    %v984 = vunpack.c.h.b16 %v162
    %v985 = vunpack.c.l.b16 %v163
    %v986 = vunpack.c.h.b16 %v163
    %v987 = vunpack.c.l.b16 %v164
    %v988 = vunpack.c.h.b16 %v164
    %v989 = vunpack.c.l.b16 %v165
    %v990 = vunpack.c.h.b16 %v165
    %v991 = vunpack.c.l.b16 %v166
    %v992 = vunpack.c.h.b16 %v166
    %v993 = vunpack.c.l.b16 %v167
    %v994 = vunpack.c.h.b16 %v167
    %v995 = vunpack.c.l.b16 %v168
    %v996 = vunpack.c.h.b16 %v168
    %v997 = vunpack.c.l.b16 %v169
    %v998 = vunpack.c.h.b16 %v169
    %v999 = vunpack.c.l.b16 %v170
    %v1000 = vunpack.c.h.b16 %v170
    %v1001 = vunpack.c.l.b16 %v171
    %v1002 = vunpack.c.h.b16 %v171
    %v1003 = vunpack.c.l.b16 %v172
    %v1004 = vunpack.c.h.b16 %v172
    %v1005 = vunpack.c.l.b16 %v173
    %v1006 = vunpack.c.h.b16 %v173
    %v1007 = vunpack.c.l.b16 %v174
    %v1008 = vunpack.c.h.b16 %v174
    %v1009 = vunpack.c.l.b16 %v175
    %v1010 = vunpack.c.h.b16 %v175
    %v1011 = vunpack.c.l.b16 %v176
    %v1012 = vunpack.c.h.b16 %v176
    %v1013 = vunpack.c.l.b16 %v177
    %v1014 = vunpack.c.h.b16 %v177
    %v1015 = vunpack.c.l.b16 %v178
    %v1016 = vunpack.c.h.b16 %v178
    %v1017 = vunpack.c.l.b16 %v179
    %v1018 = vunpack.c.h.b16 %v179
    %v1019 = vunpack.c.l.b16 %v180
    %v1020 = vunpack.c.h.b16 %v180
    %v1021 = vunpack.c.l.b16 %v181
    %v1022 = vunpack.c.h.b16 %v181
    %v1023 = vunpack.c.l.b16 %v182
    %v1024 = vunpack.c.h.b16 %v182
    %v1025 = vunpack.c.l.b16 %v183
    %v1026 = vunpack.c.h.b16 %v183
    %v1027 = vunpack.c.l.b16 %v184
    %v1028 = vunpack.c.h.b16 %v184
    %v1029 = vunpack.c.l.b16 %v185
    %v1030 = vunpack.c.h.b16 %v185
    %v1031 = vunpack.c.l.b16 %v186
    %v1032 = vunpack.c.h.b16 %v186
    %v1033 = vunpack.c.l.b16 %v187
    %v1034 = vunpack.c.h.b16 %v187
    %v1035 = vunpack.c.l.b16 %v188
    %v1036 = vunpack.c.h.b16 %v188
    %v1037 = vunpack.c.l.b16 %v189
    %v1038 = vunpack.c.h.b16 %v189
    %v1039 = vunpack.c.l.b16 %v190
    %v1040 = vunpack.c.h.b16 %v190
    %v1041 = vunpack.c.l.b16 %v191
    %v1042 = vunpack.c.h.b16 %v191
    %v1043 = vunpack.c.l.b16 %v192
    %v1044 = vunpack.c.h.b16 %v192
    %v1045 = vunpack.c.l.b16 %v193
    %v1046 = vunpack.c.h.b16 %v193
    %v1047 = vunpack.c.l.b16 %v194
    %v1048 = vunpack.c.h.b16 %v194
    %v1049 = vunpack.c.l.b16 %v195
    %v1050 = vunpack.c.h.b16 %v195
    %v1051 = vunpack.c.l.b16 %v196
    %v1052 = vunpack.c.h.b16 %v196
    %v1053 = vunpack.c.l.b16 %v197
    %v1054 = vunpack.c.h.b16 %v197
    %v1055 = vunpack.c.l.b16 %v198
    %v1056 = vunpack.c.h.b16 %v198
    %v1057 = vunpack.c.l.b16 %v199
    %v1058 = vunpack.c.h.b16 %v199
    %v1059 = vunpack.c.l.b16 %v200
    %v1060 = vunpack.c.h.b16 %v200
    %v1061 = vunpack.c.l.b16 %v201
    %v1062 = vunpack.c.h.b16 %v201
    %v1063 = vunpack.c.l.b16 %v202
    %v1064 = vunpack.c.h.b16 %v202
    %v1065 = vunpack.c.l.b16 %v203
    %v1066 = vunpack.c.h.b16 %v203
    %v1067 = vunpack.c.l.b16 %v204
    %v1068 = vunpack.c.h.b16 %v204
    %v1069 = vunpack.c.l.b16 %v205
    %v1070 = vunpack.c.h.b16 %v205
    %v1071 = vunpack.c.l.b16 %v206
    %v1072 = vunpack.c.h.b16 %v206
    %v1073 = vunpack.c.l.b16 %v207
    %v1074 = vunpack.c.h.b16 %v207
    %v1075 = vunpack.c.l.b16 %v208
    %v1076 = vunpack.c.h.b16 %v208
    %v1077 = vunpack.c.l.b16 %v209
    %v1078 = vunpack.c.h.b16 %v209
    %v1079 = vunpack.c.l.b16 %v210
    %v1080 = vunpack.c.h.b16 %v210
    %v1081 = vunpack.c.l.b16 %v211
    %v1082 = vunpack.c.h.b16 %v211
    %v1083 = vunpack.c.l.b16 %v212
    %v1084 = vunpack.c.h.b16 %v212
    %v1085 = vunpack.c.l.b16 %v213
    %v1086 = vunpack.c.h.b16 %v213
    %v1087 = vunpack.c.l.b16 %v214
    %v1088 = vunpack.c.h.b16 %v214
    %v1089 = vunpack.c.l.b16 %v215
    %v1090 = vunpack.c.h.b16 %v215
    %v1091 = vunpack.c.l.b16 %v216
    %v1092 = vunpack.c.h.b16 %v216
    %v1093 = vunpack.c.l.b16 %v217
    %v1094 = vunpack.c.h.b16 %v217
    %v1095 = vunpack.c.l.b16 %v218
    %v1096 = vunpack.c.h.b16 %v218
    %v1097 = vunpack.c.l.b16 %v219
    %v1098 = vunpack.c.h.b16 %v219
    %v1099 = vunpack.c.l.b16 %v220
    %v1100 = vunpack.c.h.b16 %v220
    %v1101 = vunpack.c.l.b16 %v221
    %v1102 = vunpack.c.h.b16 %v221
    %v1103 = vunpack.c.l.b16 %v222
    %v1104 = vunpack.c.h.b16 %v222
    %v1105 = vunpack.c.l.b16 %v223
    %v1106 = vunpack.c.h.b16 %v223
    %v1107 = vunpack.c.l.b16 %v224
    %v1108 = vunpack.c.h.b16 %v224
    %v1109 = vunpack.c.l.b16 %v225
    %v1110 = vunpack.c.h.b16 %v225
    %v1111 = vunpack.c.l.b16 %v226
    %v1112 = vunpack.c.h.b16 %v226
    %v1113 = vunpack.c.l.b16 %v227
    %v1114 = vunpack.c.h.b16 %v227
    %v1115 = vunpack.c.l.b16 %v228
    %v1116 = vunpack.c.h.b16 %v228
    %v1117 = vunpack.c.l.b16 %v229
    %v1118 = vunpack.c.h.b16 %v229
    %v1119 = vunpack.c.l.b16 %v230
    %v1120 = vunpack.c.h.b16 %v230
    %v1121 = vunpack.c.l.b16 %v231
    %v1122 = vunpack.c.h.b16 %v231
    %v1123 = vunpack.c.l.b16 %v232
    %v1124 = vunpack.c.h.b16 %v232
    %v1125 = vunpack.c.l.b16 %v233
    %v1126 = vunpack.c.h.b16 %v233
    %v1127 = vunpack.c.l.b16 %v234
    %v1128 = vunpack.c.h.b16 %v234
    %v1129 = vunpack.c.l.b16 %v235
    %v1130 = vunpack.c.h.b16 %v235
    %v1131 = vunpack.c.l.b16 %v236
    %v1132 = vunpack.c.h.b16 %v236
    %v1133 = vunpack.c.l.b16 %v237
    %v1134 = vunpack.c.h.b16 %v237
    %v1135 = vunpack.c.l.b16 %v238
    %v1136 = vunpack.c.h.b16 %v238
    %v1137 = vunpack.c.l.b16 %v239
    %v1138 = vunpack.c.h.b16 %v239
    %v1139 = vunpack.c.l.b16 %v240
    %v1140 = vunpack.c.h.b16 %v240
    %v1141 = vunpack.c.l.b16 %v241
    %v1142 = vunpack.c.h.b16 %v241
    %v1143 = vunpack.c.l.b16 %v242
    %v1144 = vunpack.c.h.b16 %v242
    %v1145 = vunpack.c.l.b16 %v243
    %v1146 = vunpack.c.h.b16 %v243
    %v1147 = vunpack.c.l.b16 %v244
    %v1148 = vunpack.c.h.b16 %v244
    %v1149 = vunpack.c.l.b16 %v245
    %v1150 = vunpack.c.h.b16 %v245
    %v1151 = vunpack.c.l.b16 %v246
    %v1152 = vunpack.c.h.b16 %v246
    %v1153 = vunpack.c.l.b16 %v247
    %v1154 = vunpack.c.h.b16 %v247
    %v1155 = vunpack.c.l.b16 %v248
    %v1156 = vunpack.c.h.b16 %v248
    %v1157 = vunpack.c.l.b16 %v249
    %v1158 = vunpack.c.h.b16 %v249
    %v1159 = vunpack.c.l.b16 %v250
    %v1160 = vunpack.c.h.b16 %v250
    %v1161 = vunpack.c.l.b16 %v251
    %v1162 = vunpack.c.h.b16 %v251
    %v1163 = vunpack.c.l.b16 %v252
    %v1164 = vunpack.c.h.b16 %v252
    %v1165 = vunpack.c.l.b16 %v253
    %v1166 = vunpack.c.h.b16 %v253
    %v1167 = vunpack.c.l.b16 %v254
    %v1168 = vunpack.c.h.b16 %v254
    %v1169 = vunpack.c.l.b16 %v255
    %v1170 = vunpack.c.h.b16 %v255
    %v1171 = vunpack.c.l.b16 %v256
    %v1172 = vunpack.c.h.b16 %v256
    %v1173 = vunpack.c.l.b16 %v257
    %v1174 = vunpack.c.h.b16 %v257
    %v1175 = vunpack.c.l.b16 %v258
    %v1176 = vunpack.c.h.b16 %v258
    %v1177 = vunpack.c.l.b16 %v259
    %v1178 = vunpack.c.h.b16 %v259
    %v1179 = vunpack.c.l.b16 %v260
    %v1180 = vunpack.c.h.b16 %v260
    %v1181 = vunpack.c.l.b16 %v261
    %v1182 = vunpack.c.h.b16 %v261
    %v1183 = vunpack.c.l.b16 %v262
    %v1184 = vunpack.c.h.b16 %v262
    %v1185 = vunpack.c.l.b16 %v263
    %v1186 = vunpack.c.h.b16 %v263
    %v1187 = vunpack.c.l.b16 %v264
    %v1188 = vunpack.c.h.b16 %v264
    %v1189 = vunpack.c.l.b16 %v265
    %v1190 = vunpack.c.h.b16 %v265
    %v1191 = vunpack.c.l.b16 %v266
    %v1192 = vunpack.c.h.b16 %v266
    %v1193 = vunpack.c.l.b16 %v267
    %v1194 = vunpack.c.h.b16 %v267
    %v1195 = vunpack.c.l.b16 %v268
    %v1196 = vunpack.c.h.b16 %v268
    %v1197 = vunpack.c.l.b16 %v269
    %v1198 = vunpack.c.h.b16 %v269
    %v1199 = vunpack.c.l.b16 %v270
    %v1200 = vunpack.c.h.b16 %v270
    %v1201 = vunpack.c.l.b16 %v271
    %v1202 = vunpack.c.h.b16 %v271
    %v1203 = vunpack.c.l.b16 %v272
    %v1204 = vunpack.c.h.b16 %v272
    %v1205 = vunpack.c.l.b16 %v273
    %v1206 = vunpack.c.h.b16 %v273
    %v1207 = vunpack.c.l.b16 %v274
    %v1208 = vunpack.c.h.b16 %v274
    %v1209 = vunpack.c.l.b16 %v275
    %v1210 = vunpack.c.h.b16 %v275
    %v1211 = vunpack.c.l.b16 %v276
    %v1212 = vunpack.c.h.b16 %v276
    %v1213 = vunpack.c.l.b16 %v277
    %v1214 = vunpack.c.h.b16 %v277
    %v1215 = vunpack.c.l.b16 %v278
    %v1216 = vunpack.c.h.b16 %v278
    %v1217 = vunpack.c.l.b16 %v279
    %v1218 = vunpack.c.h.b16 %v279
    %v1219 = vunpack.c.l.b16 %v280
    %v1220 = vunpack.c.h.b16 %v280
    %v1221 = vunpack.c.l.b16 %v281
    %v1222 = vunpack.c.h.b16 %v281
    %v1223 = vunpack.c.l.b16 %v282
    %v1224 = vunpack.c.h.b16 %v282
    %v1225 = vunpack.c.l.b16 %v283
    %v1226 = vunpack.c.h.b16 %v283
    %v1227 = vunpack.c.l.b16 %v284
    %v1228 = vunpack.c.h.b16 %v284
    %v1229 = vunpack.c.l.b16 %v285
    %v1230 = vunpack.c.h.b16 %v285
    %v1231 = vunpack.c.l.b16 %v286
    %v1232 = vunpack.c.h.b16 %v286
    %v1233 = vunpack.c.l.b16 %v287
    %v1234 = vunpack.c.h.b16 %v287
    %v1235 = vunpack.c.l.b16 %v288
    %v1236 = vunpack.c.h.b16 %v288
    %v1237 = vunpack.c.l.b16 %v289
    %v1238 = vunpack.c.h.b16 %v289
    %v1239 = vunpack.c.l.b16 %v290
    %v1240 = vunpack.c.h.b16 %v290
    %v1241 = vunpack.c.l.b16 %v291
    %v1242 = vunpack.c.h.b16 %v291
    %v1243 = vunpack.c.l.b16 %v292
    %v1244 = vunpack.c.h.b16 %v292
    %v1245 = vunpack.c.l.b16 %v293
    %v1246 = vunpack.c.h.b16 %v293
    %v1247 = vunpack.c.l.b16 %v294
    %v1248 = vunpack.c.h.b16 %v294
    %v1249 = vunpack.c.l.b16 %v295
    %v1250 = vunpack.c.h.b16 %v295
    %v1251 = vunpack.c.l.b16 %v296
    %v1252 = vunpack.c.h.b16 %v296
    %v1253 = vunpack.c.l.b16 %v297
    %v1254 = vunpack.c.h.b16 %v297
    %v1255 = vunpack.c.l.b16 %v298
    %v1256 = vunpack.c.h.b16 %v298
    %v1257 = vunpack.c.l.b16 %v299
    %v1258 = vunpack.c.h.b16 %v299
    %v1259 = vunpack.c.l.b16 %v300
    %v1260 = vunpack.c.h.b16 %v300
    %v1261 = vunpack.c.l.b16 %v301
    %v1262 = vunpack.c.h.b16 %v301
    %v1263 = vunpack.c.l.b16 %v302
    %v1264 = vunpack.c.h.b16 %v302
    %v1265 = vunpack.c.l.b16 %v303
    %v1266 = vunpack.c.h.b16 %v303
    %v1267 = vunpack.c.l.b16 %v304
    %v1268 = vunpack.c.h.b16 %v304
    %v1269 = vunpack.c.l.b16 %v305
    %v1270 = vunpack.c.h.b16 %v305
    %v1271 = vunpack.c.l.b16 %v306
    %v1272 = vunpack.c.h.b16 %v306
    %v1273 = vunpack.c.l.b16 %v307
    %v1274 = vunpack.c.h.b16 %v307
    %v1275 = vunpack.c.l.b16 %v308
    %v1276 = vunpack.c.h.b16 %v308
    %v1277 = vunpack.c.l.b16 %v309
    %v1278 = vunpack.c.h.b16 %v309
    %v1279 = vunpack.c.l.b16 %v310
    %v1280 = vunpack.c.h.b16 %v310
    %v1281 = vunpack.c.l.b16 %v311
    %v1282 = vunpack.c.h.b16 %v311
    %v1283 = vunpack.c.l.b16 %v312
    %v1284 = vunpack.c.h.b16 %v312
    %v1285 = vunpack.c.l.b16 %v313
    %v1286 = vunpack.c.h.b16 %v313
    %v1287 = vunpack.c.l.b16 %v314
    %v1288 = vunpack.c.h.b16 %v314
    %v1289 = vunpack.c.l.b16 %v315
    %v1290 = vunpack.c.h.b16 %v315
    %v1291 = vunpack.c.l.b16 %v316
    %v1292 = vunpack.c.h.b16 %v316
    %v1293 = vunpack.c.l.b16 %v317
    %v1294 = vunpack.c.h.b16 %v317
    %v1295 = vunpack.c.l.b16 %v318
    %v1296 = vunpack.c.h.b16 %v318
    %v1297 = vunpack.c.l.b16 %v319
    %v1298 = vunpack.c.h.b16 %v319
    %v1299 = vunpack.c.l.b16 %v320
    %v1300 = vunpack.c.h.b16 %v320
    %v1301 = vunpack.c.l.b16 %v321
    %v1302 = vunpack.c.h.b16 %v321
    %v1303 = vunpack.c.l.b16 %v322
    %v1304 = vunpack.c.h.b16 %v322
    %v1305 = vunpack.c.l.b16 %v323
    %v1306 = vunpack.c.h.b16 %v323
    %v1307 = vunpack.c.l.b16 %v324
    %v1308 = vunpack.c.h.b16 %v324
    %v1309 = vunpack.c.l.b16 %v325
    %v1310 = vunpack.c.h.b16 %v325
    %v1311 = vunpack.c.l.b16 %v326
    %v1312 = vunpack.c.h.b16 %v326
    %v1313 = vunpack.c.l.b16 %v327
    %v1314 = vunpack.c.h.b16 %v327
    %v1315 = vunpack.c.l.b16 %v328
    %v1316 = vunpack.c.h.b16 %v328
    %v1317 = vunpack.c.l.b16 %v329
    %v1318 = vunpack.c.h.b16 %v329
    %v1319 = vunpack.c.l.b16 %v330
    %v1320 = vunpack.c.h.b16 %v330
    %v1321 = vunpack.c.l.b16 %v331
    %v1322 = vunpack.c.h.b16 %v331
    %v1323 = vunpack.c.l.b16 %v332
    %v1324 = vunpack.c.h.b16 %v332
    %v1325 = vunpack.c.l.b16 %v333
    %v1326 = vunpack.c.h.b16 %v333
    %v1327 = vunpack.c.l.b16 %v334
    %v1328 = vunpack.c.h.b16 %v334
    %v1329 = vunpack.c.l.b16 %v335
    %v1330 = vunpack.c.h.b16 %v335
    %v1331 = vunpack.c.l.b16 %v336
    %v1332 = vunpack.c.h.b16 %v336
    %v1333 = vunpack.c.l.b16 %v337
    %v1334 = vunpack.c.h.b16 %v337
    %v1335 = vunpack.c.l.b16 %v338
    %v1336 = vunpack.c.h.b16 %v338
    %v1337 = vunpack.c.l.b16 %v339
    %v1338 = vunpack.c.h.b16 %v339
    %v1339 = vunpack.c.l.b16 %v340
    %v1340 = vunpack.c.h.b16 %v340
    %v1341 = vunpack.c.l.b16 %v341
    %v1342 = vunpack.c.h.b16 %v341
    %v1343 = vunpack.c.l.b16 %v342
    %v1344 = vunpack.c.h.b16 %v342
    %v1345 = vunpack.c.l.b16 %v343
    %v1346 = vunpack.c.h.b16 %v343
    %v1347 = vpack.c.b16 %v761, %v759
    %v1348 = vpack.c.b16 %v762, %v760
    %v1349 = vpack.c.b16 %v765, %v763
    %v1350 = vpack.c.b16 %v766, %v764
    %v1351 = vpack.c.b16 %v769, %v767
    %v1352 = vpack.c.b16 %v770, %v768
    %v1353 = vpack.c.b16 %v773, %v771
    %v1354 = vpack.c.b16 %v774, %v772
    %v1355 = vpack.c.b16 %v777, %v775
    %v1356 = vpack.c.b16 %v778, %v776
    %v1357 = vpack.c.b16 %v781, %v779
    %v1358 = vpack.c.b16 %v782, %v780
    %v1359 = vpack.c.b16 %v785, %v783
    %v1360 = vpack.c.b16 %v786, %v784
    %v1361 = vpack.c.b16 %v789, %v787
    %v1362 = vpack.c.b16 %v790, %v788
    %v1363 = vpack.c.b16 %v793, %v791
    %v1364 = vpack.c.b16 %v794, %v792
    %v1365 = vpack.c.b16 %v797, %v795
    %v1366 = vpack.c.b16 %v798, %v796
    %v1367 = vpack.c.b16 %v801, %v799
    %v1368 = vpack.c.b16 %v802, %v800
    %v1369 = vpack.c.b16 %v805, %v803
    %v1370 = vpack.c.b16 %v806, %v804
    %v1371 = vpack.c.b16 %v809, %v807
    %v1372 = vpack.c.b16 %v810, %v808
    %v1373 = vpack.c.b16 %v813, %v811
    %v1374 = vpack.c.b16 %v814, %v812
    %v1375 = vpack.c.b16 %v817, %v815
    %v1376 = vpack.c.b16 %v818, %v816
    %v1377 = vpack.c.b16 %v821, %v819
    %v1378 = vpack.c.b16 %v822, %v820
    %v1379 = vpack.c.b16 %v825, %v823
    %v1380 = vpack.c.b16 %v826, %v824
    %v1381 = vpack.c.b16 %v829, %v827
    %v1382 = vpack.c.b16 %v830, %v828
    %v1383 = vpack.c.b16 %v833, %v831
    %v1384 = vpack.c.b16 %v834, %v832
    %v1385 = vpack.c.b16 %v837, %v835
    %v1386 = vpack.c.b16 %v838, %v836
    %v1387 = vpack.c.b16 %v841, %v839
    %v1388 = vpack.c.b16 %v842, %v840
    %v1389 = vpack.c.b16 %v845, %v843
    %v1390 = vpack.c.b16 %v846, %v844
    %v1391 = vpack.c.b16 %v849, %v847
    %v1392 = vpack.c.b16 %v850, %v848
    %v1393 = vpack.c.b16 %v853, %v851
    %v1394 = vpack.c.b16 %v854, %v852
    %v1395 = vpack.c.b16 %v857, %v855
    %v1396 = vpack.c.b16 %v858, %v856
    %v1397 = vpack.c.b16 %v861, %v859
    %v1398 = vpack.c.b16 %v862, %v860
    %v1399 = vpack.c.b16 %v865, %v863
    %v1400 = vpack.c.b16 %v866, %v864
    %v1401 = vpack.c.b16 %v869, %v867
    %v1402 = vpack.c.b16 %v870, %v868
    %v1403 = vpack.c.b16 %v873, %v871
    %v1404 = vpack.c.b16 %v874, %v872
    %v1405 = vpack.c.b16 %v877, %v875
    %v1406 = vpack.c.b16 %v878, %v876
    %v1407 = vpack.c.b16 %v881, %v879
    %v1408 = vpack.c.b16 %v882, %v880
    %v1409 = vpack.c.b16 %v885, %v883
    %v1410 = vpack.c.b16 %v886, %v884
    %v1411 = vpack.c.b16 %v889, %v887
    %v1412 = vpack.c.b16 %v890, %v888
    %v1413 = vpack.c.b16 %v893, %v891
    %v1414 = vpack.c.b16 %v894, %v892
    %v1415 = vpack.c.b16 %v897, %v895
    %v1416 = vpack.c.b16 %v898, %v896
    %v1417 = vpack.c.b16 %v901, %v899
    %v1418 = vpack.c.b16 %v902, %v900
    %v1419 = vpack.c.b16 %v905, %v903
    %v1420 = vpack.c.b16 %v906, %v904
    %v1421 = vpack.c.b16 %v909, %v907
    %v1422 = vpack.c.b16 %v910, %v908
    %v1423 = vpack.c.b16 %v913, %v911
    %v1424 = vpack.c.b16 %v914, %v912
    %v1425 = vpack.c.b16 %v917, %v915
    %v1426 = vpack.c.b16 %v918, %v916
    %v1427 = vpack.c.b16 %v921, %v919
    %v1428 = vpack.c.b16 %v922, %v920
    %v1429 = vpack.c.b16 %v925, %v923
    %v1430 = vpack.c.b16 %v926, %v924
    %v1431 = vpack.c.b16 %v929, %v927
    %v1432 = vpack.c.b16 %v930, %v928
    %v1433 = vpack.c.b16 %v933, %v931
    %v1434 = vpack.c.b16 %v934, %v932
    %v1435 = vpack.c.b16 %v937, %v935
    %v1436 = vpack.c.b16 %v938, %v936
    %v1437 = vpack.c.b16 %v941, %v939
    %v1438 = vpack.c.b16 %v942, %v940
    %v1439 = vpack.c.b16 %v945, %v943
    %v1440 = vpack.c.b16 %v946, %v944
    %v1441 = vpack.c.b16 %v949, %v947
    %v1442 = vpack.c.b16 %v950, %v948
    %v1443 = vpack.c.b16 %v953, %v951
    %v1444 = vpack.c.b16 %v954, %v952
    %v1445 = vpack.c.b16 %v957, %v955
    %v1446 = vpack.c.b16 %v958, %v956
    %v1447 = vpack.c.b16 %v961, %v959
    %v1448 = vpack.c.b16 %v962, %v960
    %v1449 = vpack.c.b16 %v965, %v963
    %v1450 = vpack.c.b16 %v966, %v964
    %v1451 = vpack.c.b16 %v969, %v967
    %v1452 = vpack.c.b16 %v970, %v968
    %v1453 = vpack.c.b16 %v973, %v971
    %v1454 = vpack.c.b16 %v974, %v972
    %v1455 = vpack.c.b16 %v977, %v975
    %v1456 = vpack.c.b16 %v978, %v976
    %v1457 = vpack.c.b16 %v981, %v979
    %v1458 = vpack.c.b16 %v982, %v980
    %v1459 = vpack.c.b16 %v985, %v983
    %v1460 = vpack.c.b16 %v986, %v984
    %v1461 = vpack.c.b16 %v989, %v987
    %v1462 = vpack.c.b16 %v990, %v988
    %v1463 = vpack.c.b16 %v993, %v991
    %v1464 = vpack.c.b16 %v994, %v992
    %v1465 = vpack.c.b16 %v997, %v995
    %v1466 = vpack.c.b16 %v998, %v996
    %v1467 = vpack.c.b16 %v1001, %v999
    %v1468 = vpack.c.b16 %v1002, %v1000
    %v1469 = vpack.c.b16 %v1005, %v1003
    %v1470 = vpack.c.b16 %v1006, %v1004
    %v1471 = vpack.c.b16 %v1009, %v1007
    %v1472 = vpack.c.b16 %v1010, %v1008
    %v1473 = vpack.c.b16 %v1013, %v1011
    %v1474 = vpack.c.b16 %v1014, %v1012
    %v1475 = vpack.c.b16 %v1017, %v1015
    %v1476 = vpack.c.b16 %v1018, %v1016
    %v1477 = vpack.c.b16 %v1021, %v1019
    %v1478 = vpack.c.b16 %v1022, %v1020
    %v1479 = vpack.c.b16 %v1025, %v1023
    %v1480 = vpack.c.b16 %v1026, %v1024
    %v1481 = vpack.c.b16 %v1029, %v1027
    %v1482 = vpack.c.b16 %v1030, %v1028
    %v1483 = vpack.c.b16 %v1033, %v1031
    %v1484 = vpack.c.b16 %v1034, %v1032
    %v1485 = vpack.c.b16 %v1037, %v1035
    %v1486 = vpack.c.b16 %v1038, %v1036
    %v1487 = vpack.c.b16 %v1041, %v1039
    %v1488 = vpack.c.b16 %v1042, %v1040
    %v1489 = vpack.c.b16 %v1045, %v1043
    %v1490 = vpack.c.b16 %v1046, %v1044
    %v1491 = vpack.c.b16 %v1049, %v1047
    %v1492 = vpack.c.b16 %v1050, %v1048
    %v1493 = vpack.c.b16 %v1053, %v1051
    %v1494 = vpack.c.b16 %v1054, %v1052
    %v1495 = vpack.c.b16 %v1057, %v1055
    %v1496 = vpack.c.b16 %v1058, %v1056
    %v1497 = vpack.c.b16 %v1061, %v1059
    %v1498 = vpack.c.b16 %v1062, %v1060
    %v1499 = vpack.c.b16 %v1065, %v1063
    %v1500 = vpack.c.b16 %v1066, %v1064
    %v1501 = vpack.c.b16 %v1069, %v1067
    %v1502 = vpack.c.b16 %v1070, %v1068
    %v1503 = vpack.c.b16 %v1073, %v1071
    %v1504 = vpack.c.b16 %v1074, %v1072
    %v1505 = vpack.c.b16 %v1077, %v1075
    %v1506 = vpack.c.b16 %v1078, %v1076
    %v1507 = vpack.c.b16 %v1081, %v1079
    %v1508 = vpack.c.b16 %v1082, %v1080
    %v1509 = vpack.c.b16 %v1085, %v1083
    %v1510 = vpack.c.b16 %v1086, %v1084
    %v1511 = vpack.c.b16 %v1089, %v1087
    %v1512 = vpack.c.b16 %v1090, %v1088
    %v1513 = vpack.c.b16 %v1093, %v1091
    %v1514 = vpack.c.b16 %v1094, %v1092
    %v1515 = vpack.c.b16 %v1097, %v1095
    %v1516 = vpack.c.b16 %v1098, %v1096
    %v1517 = vpack.c.b16 %v1101, %v1099
    %v1518 = vpack.c.b16 %v1102, %v1100
    %v1519 = vpack.c.b16 %v1105, %v1103
    %v1520 = vpack.c.b16 %v1106, %v1104
    %v1521 = vpack.c.b16 %v1109, %v1107
    %v1522 = vpack.c.b16 %v1110, %v1108
    %v1523 = vpack.c.b16 %v1113, %v1111
    %v1524 = vpack.c.b16 %v1114, %v1112
    %v1525 = vpack.c.b16 %v1117, %v1115
    %v1526 = vpack.c.b16 %v1118, %v1116
    %v1527 = vpack.c.b16 %v1121, %v1119
    %v1528 = vpack.c.b16 %v1122, %v1120
    %v1529 = vpack.c.b16 %v1125, %v1123
    %v1530 = vpack.c.b16 %v1126, %v1124
    %v1531 = vpack.c.b16 %v1129, %v1127
    %v1532 = vpack.c.b16 %v1130, %v1128
    %v1533 = vpack.c.b16 %v1133, %v1131
    %v1534 = vpack.c.b16 %v1134, %v1132
    %v1535 = vpack.c.b16 %v1137, %v1135
    %v1536 = vpack.c.b16 %v1138, %v1136
    %v1537 = vpack.c.b16 %v1141, %v1139
    %v1538 = vpack.c.b16 %v1142, %v1140
    %v1539 = vpack.c.b16 %v1145, %v1143
    %v1540 = vpack.c.b16 %v1146, %v1144
    %v1541 = vpack.c.b16 %v1149, %v1147
    %v1542 = vpack.c.b16 %v1150, %v1148
    %v1543 = vpack.c.b16 %v1153, %v1151
    %v1544 = vpack.c.b16 %v1154, %v1152
    %v1545 = vpack.c.b16 %v1157, %v1155
    %v1546 = vpack.c.b16 %v1158, %v1156
    %v1547 = vpack.c.b16 %v1161, %v1159
    %v1548 = vpack.c.b16 %v1162, %v1160
    %v1549 = vpack.c.b16 %v1165, %v1163
    %v1550 = vpack.c.b16 %v1166, %v1164
    %v1551 = vpack.c.b16 %v1169, %v1167
    %v1552 = vpack.c.b16 %v1170, %v1168
    %v1553 = vpack.c.b16 %v1173, %v1171
    %v1554 = vpack.c.b16 %v1174, %v1172
    %v1555 = vpack.c.b16 %v1177, %v1175
    %v1556 = vpack.c.b16 %v1178, %v1176
    %v1557 = vpack.c.b16 %v1181, %v1179
    %v1558 = vpack.c.b16 %v1182, %v1180
    %v1559 = vpack.c.b16 %v1185, %v1183
    %v1560 = vpack.c.b16 %v1186, %v1184
    %v1561 = vpack.c.b16 %v1189, %v1187
    %v1562 = vpack.c.b16 %v1190, %v1188
    %v1563 = vpack.c.b16 %v1193, %v1191
    %v1564 = vpack.c.b16 %v1194, %v1192
    %v1565 = vpack.c.b16 %v1197, %v1195
    %v1566 = vpack.c.b16 %v1198, %v1196
    %v1567 = vpack.c.b16 %v1201, %v1199
    %v1568 = vpack.c.b16 %v1202, %v1200
    %v1569 = vpack.c.b16 %v1205, %v1203
    %v1570 = vpack.c.b16 %v1206, %v1204
    %v1571 = vpack.c.b16 %v1209, %v1207
    %v1572 = vpack.c.b16 %v1210, %v1208
    %v1573 = vpack.c.b16 %v1213, %v1211
    %v1574 = vpack.c.b16 %v1214, %v1212
    %v1575 = vpack.c.b16 %v1217, %v1215
    %v1576 = vpack.c.b16 %v1218, %v1216
    %v1577 = vpack.c.b16 %v1221, %v1219
    %v1578 = vpack.c.b16 %v1222, %v1220
    %v1579 = vpack.c.b16 %v1225, %v1223
    %v1580 = vpack.c.b16 %v1226, %v1224
    %v1581 = vpack.c.b16 %v1229, %v1227
    %v1582 = vpack.c.b16 %v1230, %v1228
    %v1583 = vpack.c.b16 %v1233, %v1231
    %v1584 = vpack.c.b16 %v1234, %v1232
    %v1585 = vpack.c.b16 %v1237, %v1235
    %v1586 = vpack.c.b16 %v1238, %v1236
    %v1587 = vpack.c.b16 %v1241, %v1239
    %v1588 = vpack.c.b16 %v1242, %v1240
    %v1589 = vpack.c.b16 %v1245, %v1243
    %v1590 = vpack.c.b16 %v1246, %v1244
    %v1591 = vpack.c.b16 %v1249, %v1247
    %v1592 = vpack.c.b16 %v1250, %v1248
    %v1593 = vpack.c.b16 %v1253, %v1251
    %v1594 = vpack.c.b16 %v1254, %v1252
    %v1595 = vpack.c.b16 %v1257, %v1255
    %v1596 = vpack.c.b16 %v1258, %v1256
    %v1597 = vpack.c.b16 %v1261, %v1259
    %v1598 = vpack.c.b16 %v1262, %v1260
    %v1599 = vpack.c.b16 %v1265, %v1263
    %v1600 = vpack.c.b16 %v1266, %v1264
    %v1601 = vpack.c.b16 %v1269, %v1267
    %v1602 = vpack.c.b16 %v1270, %v1268
    %v1603 = vpack.c.b16 %v1273, %v1271
    %v1604 = vpack.c.b16 %v1274, %v1272
    %v1605 = vpack.c.b16 %v1277, %v1275
    %v1606 = vpack.c.b16 %v1278, %v1276
    %v1607 = vpack.c.b16 %v1281, %v1279
    %v1608 = vpack.c.b16 %v1282, %v1280
    %v1609 = vpack.c.b16 %v1285, %v1283
    %v1610 = vpack.c.b16 %v1286, %v1284
    %v1611 = vpack.c.b16 %v1289, %v1287
    %v1612 = vpack.c.b16 %v1290, %v1288
    %v1613 = vpack.c.b16 %v1293, %v1291
    %v1614 = vpack.c.b16 %v1294, %v1292
    %v1615 = vpack.c.b16 %v1297, %v1295
    %v1616 = vpack.c.b16 %v1298, %v1296
    %v1617 = vpack.c.b16 %v1301, %v1299
    %v1618 = vpack.c.b16 %v1302, %v1300
    %v1619 = vpack.c.b16 %v1305, %v1303
    %v1620 = vpack.c.b16 %v1306, %v1304
    %v1621 = vpack.c.b16 %v1309, %v1307
    %v1622 = vpack.c.b16 %v1310, %v1308
    %v1623 = vpack.c.b16 %v1313, %v1311
    %v1624 = vpack.c.b16 %v1314, %v1312
    %v1625 = vpack.c.b16 %v1317, %v1315
    %v1626 = vpack.c.b16 %v1318, %v1316
    %v1627 = vpack.c.b16 %v1321, %v1319
    %v1628 = vpack.c.b16 %v1322, %v1320
    %v1629 = vpack.c.b16 %v1325, %v1323
    %v1630 = vpack.c.b16 %v1326, %v1324
    %v1631 = vpack.c.b16 %v1329, %v1327
    %v1632 = vpack.c.b16 %v1330, %v1328
    %v1633 = vpack.c.b16 %v1333, %v1331
    %v1634 = vpack.c.b16 %v1334, %v1332
    %v1635 = vpack.c.b16 %v1337, %v1335
    %v1636 = vpack.c.b16 %v1338, %v1336
    %v1637 = vpack.c.b16 %v1341, %v1339
    %v1638 = vpack.c.b16 %v1342, %v1340
    %v1639 = vpack.c.b16 %v1345, %v1343
    %v1640 = vpack.c.b16 %v1346, %v1344
    %vm1935 = vcmask 392192
    %v1937 = vsel %vm1935, %v446, 0
    %1939 = vmatpush.bf16.msra.mxu0 %v1361
    %1940 = vmatpush.bf16.msra.mxu0 %v1359
    %1941 = vmatpush.bf16.msra.mxu0 %v1357
    %1942 = vmatpush.bf16.msra.mxu0 %v1355
    %1943 = vmatpush.bf16.msra.mxu0 %v1353
    %1944 = vmatpush.bf16.msra.mxu0 %v1351
    %1945 = vmatpush.bf16.msra.mxu0 %v1349
    %1946 = vmatpush.bf16.msra.mxu0 %v1347
    %1947 = vmatmul.bf16.gmra.mxu0 %v428
    %v1948 = vpop.f32.mrf.mxu0
    %v1949 = vadd.f32 %v383, %v1948
    %v1950 = vpop.f32.mrf.mxu0
    %1951 = vdwg.mxu0
    %1952 = vmatpush.bf16.msra.mxu0 %v1377
    %1953 = vmatpush.bf16.msra.mxu0 %v1375
    %1954 = vmatpush.bf16.msra.mxu0 %v1373
    %1955 = vmatpush.bf16.msra.mxu0 %v1371
    %1956 = vmatpush.bf16.msra.mxu0 %v1369
    %1957 = vmatpush.bf16.msra.mxu0 %v1367
    %1958 = vmatpush.bf16.msra.mxu0 %v1365
    %1959 = vmatpush.bf16.msra.mxu0 %v1363
    %1960 = vmatmul.bf16.gmra.mxu0 %v429
    %v1961 = vpop.f32.mrf.mxu0
    %v1962 = vadd.f32 %v1949, %v1961
    %v1963 = vpop.f32.mrf.mxu0
    %1964 = vdwg.mxu0
    %1965 = vmatpush.bf16.msra.mxu0 %v1393
    %1966 = vmatpush.bf16.msra.mxu0 %v1391
    %1967 = vmatpush.bf16.msra.mxu0 %v1389
    %1968 = vmatpush.bf16.msra.mxu0 %v1387
    %1969 = vmatpush.bf16.msra.mxu0 %v1385
    %1970 = vmatpush.bf16.msra.mxu0 %v1383
    %1971 = vmatpush.bf16.msra.mxu0 %v1381
    %1972 = vmatpush.bf16.msra.mxu0 %v1379
    %1973 = vmatmul.bf16.gmra.mxu0 %v430
    %v1974 = vpop.f32.mrf.mxu0
    %v1975 = vadd.f32 %v1962, %v1974
    %v1976 = vpop.f32.mrf.mxu0
    %1977 = vdwg.mxu0
    %1978 = vmatpush.bf16.msra.mxu0 %v1409
    %1979 = vmatpush.bf16.msra.mxu0 %v1407
    %1980 = vmatpush.bf16.msra.mxu0 %v1405
    %1981 = vmatpush.bf16.msra.mxu0 %v1403
    %1982 = vmatpush.bf16.msra.mxu0 %v1401
    %1983 = vmatpush.bf16.msra.mxu0 %v1399
    %1984 = vmatpush.bf16.msra.mxu0 %v1397
    %1985 = vmatpush.bf16.msra.mxu0 %v1395
    %1986 = vmatmul.bf16.gmra.mxu0 %v431
    %v1987 = vpop.f32.mrf.mxu0
    %v1988 = vadd.f32 %v1975, %v1987
    %v1989 = vpop.f32.mrf.mxu0
    %1990 = vdwg.mxu0
    %1991 = vmatpush.bf16.msra.mxu0 %v1425
    %1992 = vmatpush.bf16.msra.mxu0 %v1423
    %1993 = vmatpush.bf16.msra.mxu0 %v1421
    %1994 = vmatpush.bf16.msra.mxu0 %v1419
    %1995 = vmatpush.bf16.msra.mxu0 %v1417
    %1996 = vmatpush.bf16.msra.mxu0 %v1415
    %1997 = vmatpush.bf16.msra.mxu0 %v1413
    %1998 = vmatpush.bf16.msra.mxu0 %v1411
    %1999 = vmatmul.bf16.gmra.mxu0 %v432
    %v2000 = vpop.f32.mrf.mxu0
    %v2001 = vadd.f32 %v1988, %v2000
    %v2002 = vpop.f32.mrf.mxu0
    %2003 = vdwg.mxu0
    %2004 = vmatpush.bf16.msra.mxu0 %v1441
    %2005 = vmatpush.bf16.msra.mxu0 %v1439
    %2006 = vmatpush.bf16.msra.mxu0 %v1437
    %2007 = vmatpush.bf16.msra.mxu0 %v1435
    %2008 = vmatpush.bf16.msra.mxu0 %v1433
    %2009 = vmatpush.bf16.msra.mxu0 %v1431
    %2010 = vmatpush.bf16.msra.mxu0 %v1429
    %2011 = vmatpush.bf16.msra.mxu0 %v1427
    %2012 = vmatmul.bf16.gmra.mxu0 %v433
    %v2013 = vpop.f32.mrf.mxu0
    %v2014 = vadd.f32 %v2001, %v2013
    %v2015 = vpop.f32.mrf.mxu0
    %2016 = vdwg.mxu0
    %2017 = vmatpush.bf16.msra.mxu0 %v1457
    %2018 = vmatpush.bf16.msra.mxu0 %v1455
    %2019 = vmatpush.bf16.msra.mxu0 %v1453
    %2020 = vmatpush.bf16.msra.mxu0 %v1451
    %2021 = vmatpush.bf16.msra.mxu0 %v1449
    %2022 = vmatpush.bf16.msra.mxu0 %v1447
    %2023 = vmatpush.bf16.msra.mxu0 %v1445
    %2024 = vmatpush.bf16.msra.mxu0 %v1443
    %2025 = vmatmul.bf16.gmra.mxu0 %v434
    %v2026 = vpop.f32.mrf.mxu0
    %v2027 = vadd.f32 %v2014, %v2026
    %v2028 = vpop.f32.mrf.mxu0
    %2029 = vdwg.mxu0
    %2030 = vmatpush.bf16.msra.mxu0 %v1473
    %2031 = vmatpush.bf16.msra.mxu0 %v1471
    %2032 = vmatpush.bf16.msra.mxu0 %v1469
    %2033 = vmatpush.bf16.msra.mxu0 %v1467
    %2034 = vmatpush.bf16.msra.mxu0 %v1465
    %2035 = vmatpush.bf16.msra.mxu0 %v1463
    %2036 = vmatpush.bf16.msra.mxu0 %v1461
    %2037 = vmatpush.bf16.msra.mxu0 %v1459
    %2038 = vmatmul.bf16.gmra.mxu0 %v435
    %v2039 = vpop.f32.mrf.mxu0
    %v2040 = vadd.f32 %v2027, %v2039
    %v2041 = vpop.f32.mrf.mxu0
    %2042 = vdwg.mxu0
    %2043 = vmatpush.bf16.msra.mxu0 %v1489
    %2044 = vmatpush.bf16.msra.mxu0 %v1487
    %2045 = vmatpush.bf16.msra.mxu0 %v1485
    %2046 = vmatpush.bf16.msra.mxu0 %v1483
    %2047 = vmatpush.bf16.msra.mxu0 %v1481
    %2048 = vmatpush.bf16.msra.mxu0 %v1479
    %2049 = vmatpush.bf16.msra.mxu0 %v1477
    %2050 = vmatpush.bf16.msra.mxu0 %v1475
    %2051 = vmatmul.bf16.gmra.mxu0 %v436
    %v2052 = vpop.f32.mrf.mxu0
    %v2053 = vadd.f32 %v2040, %v2052
    %v2054 = vpop.f32.mrf.mxu0
    %2055 = vdwg.mxu0
    %2056 = vmatpush.bf16.msra.mxu0 %v1505
    %2057 = vmatpush.bf16.msra.mxu0 %v1503
    %2058 = vmatpush.bf16.msra.mxu0 %v1501
    %2059 = vmatpush.bf16.msra.mxu0 %v1499
    %2060 = vmatpush.bf16.msra.mxu0 %v1497
    %2061 = vmatpush.bf16.msra.mxu0 %v1495
    %2062 = vmatpush.bf16.msra.mxu0 %v1493
    %2063 = vmatpush.bf16.msra.mxu0 %v1491
    %2064 = vmatmul.bf16.gmra.mxu0 %v437
    %v2065 = vpop.f32.mrf.mxu0
    %v2066 = vadd.f32 %v2053, %v2065
    %v2067 = vpop.f32.mrf.mxu0
    %2068 = vdwg.mxu0
    %2069 = vmatpush.bf16.msra.mxu0 %v1521
    %2070 = vmatpush.bf16.msra.mxu0 %v1519
    %2071 = vmatpush.bf16.msra.mxu0 %v1517
    %2072 = vmatpush.bf16.msra.mxu0 %v1515
    %2073 = vmatpush.bf16.msra.mxu0 %v1513
    %2074 = vmatpush.bf16.msra.mxu0 %v1511
    %2075 = vmatpush.bf16.msra.mxu0 %v1509
    %2076 = vmatpush.bf16.msra.mxu0 %v1507
    %2077 = vmatmul.bf16.gmra.mxu0 %v438
    %v2078 = vpop.f32.mrf.mxu0
    %v2079 = vadd.f32 %v2066, %v2078
    %v2080 = vpop.f32.mrf.mxu0
    %2081 = vdwg.mxu0
    %2082 = vmatpush.bf16.msra.mxu0 %v1537
    %2083 = vmatpush.bf16.msra.mxu0 %v1535
    %2084 = vmatpush.bf16.msra.mxu0 %v1533
    %2085 = vmatpush.bf16.msra.mxu0 %v1531
    %2086 = vmatpush.bf16.msra.mxu0 %v1529
    %2087 = vmatpush.bf16.msra.mxu0 %v1527
    %2088 = vmatpush.bf16.msra.mxu0 %v1525
    %2089 = vmatpush.bf16.msra.mxu0 %v1523
    %2090 = vmatmul.bf16.gmra.mxu0 %v439
    %v2091 = vpop.f32.mrf.mxu0
    %v2092 = vadd.f32 %v2079, %v2091
    %v2093 = vpop.f32.mrf.mxu0
    %2094 = vdwg.mxu0
    %2095 = vmatpush.bf16.msra.mxu0 %v1553
    %2096 = vmatpush.bf16.msra.mxu0 %v1551
    %2097 = vmatpush.bf16.msra.mxu0 %v1549
    %2098 = vmatpush.bf16.msra.mxu0 %v1547
    %2099 = vmatpush.bf16.msra.mxu0 %v1545
    %2100 = vmatpush.bf16.msra.mxu0 %v1543
    %2101 = vmatpush.bf16.msra.mxu0 %v1541
    %2102 = vmatpush.bf16.msra.mxu0 %v1539
    %2103 = vmatmul.bf16.gmra.mxu0 %v440
    %v2104 = vpop.f32.mrf.mxu0
    %v2105 = vadd.f32 %v2092, %v2104
    %v2106 = vpop.f32.mrf.mxu0
    %2107 = vdwg.mxu0
    %2108 = vmatpush.bf16.msra.mxu0 %v1569
    %2109 = vmatpush.bf16.msra.mxu0 %v1567
    %2110 = vmatpush.bf16.msra.mxu0 %v1565
    %2111 = vmatpush.bf16.msra.mxu0 %v1563
    %2112 = vmatpush.bf16.msra.mxu0 %v1561
    %2113 = vmatpush.bf16.msra.mxu0 %v1559
    %2114 = vmatpush.bf16.msra.mxu0 %v1557
    %2115 = vmatpush.bf16.msra.mxu0 %v1555
    %2116 = vmatmul.bf16.gmra.mxu0 %v441
    %v2117 = vpop.f32.mrf.mxu0
    %v2118 = vadd.f32 %v2105, %v2117
    %v2119 = vpop.f32.mrf.mxu0
    %2120 = vdwg.mxu0
    %2121 = vmatpush.bf16.msra.mxu0 %v1585
    %2122 = vmatpush.bf16.msra.mxu0 %v1583
    %2123 = vmatpush.bf16.msra.mxu0 %v1581
    %2124 = vmatpush.bf16.msra.mxu0 %v1579
    %2125 = vmatpush.bf16.msra.mxu0 %v1577
    %2126 = vmatpush.bf16.msra.mxu0 %v1575
    %2127 = vmatpush.bf16.msra.mxu0 %v1573
    %2128 = vmatpush.bf16.msra.mxu0 %v1571
    %2129 = vmatmul.bf16.gmra.mxu0 %v442
    %v2130 = vpop.f32.mrf.mxu0
    %v2131 = vadd.f32 %v2118, %v2130
    %v2132 = vpop.f32.mrf.mxu0
    %2133 = vdwg.mxu0
    %2134 = vmatpush.bf16.msra.mxu0 %v1601
    %2135 = vmatpush.bf16.msra.mxu0 %v1599
    %2136 = vmatpush.bf16.msra.mxu0 %v1597
    %2137 = vmatpush.bf16.msra.mxu0 %v1595
    %2138 = vmatpush.bf16.msra.mxu0 %v1593
    %2139 = vmatpush.bf16.msra.mxu0 %v1591
    %2140 = vmatpush.bf16.msra.mxu0 %v1589
    %2141 = vmatpush.bf16.msra.mxu0 %v1587
    %2142 = vmatmul.bf16.gmra.mxu0 %v443
    %v2143 = vpop.f32.mrf.mxu0
    %v2144 = vadd.f32 %v2131, %v2143
    %v2145 = vpop.f32.mrf.mxu0
    %2146 = vdwg.mxu0
    %2147 = vmatpush.bf16.msra.mxu0 %v1617
    %2148 = vmatpush.bf16.msra.mxu0 %v1615
    %2149 = vmatpush.bf16.msra.mxu0 %v1613
    %2150 = vmatpush.bf16.msra.mxu0 %v1611
    %2151 = vmatpush.bf16.msra.mxu0 %v1609
    %2152 = vmatpush.bf16.msra.mxu0 %v1607
    %2153 = vmatpush.bf16.msra.mxu0 %v1605
    %2154 = vmatpush.bf16.msra.mxu0 %v1603
    %2155 = vmatmul.bf16.gmra.mxu0 %v444
    %v2156 = vpop.f32.mrf.mxu0
    %v2157 = vadd.f32 %v2144, %v2156
    %v2158 = vpop.f32.mrf.mxu0
    %2159 = vdwg.mxu0
    %2160 = vmatpush.bf16.msra.mxu0 %v1633
    %2161 = vmatpush.bf16.msra.mxu0 %v1631
    %2162 = vmatpush.bf16.msra.mxu0 %v1629
    %2163 = vmatpush.bf16.msra.mxu0 %v1627
    %2164 = vmatpush.bf16.msra.mxu0 %v1625
    %2165 = vmatpush.bf16.msra.mxu0 %v1623
    %2166 = vmatpush.bf16.msra.mxu0 %v1621
    %2167 = vmatpush.bf16.msra.mxu0 %v1619
    %2168 = vmatmul.bf16.gmra.mxu0 %v445
    %v2169 = vpop.f32.mrf.mxu0
    %v2170 = vadd.f32 %v2157, %v2169
    %v2171 = vpop.f32.mrf.mxu0
    %2172 = vdwg.mxu0
    %2173 = vmatpush.bf16.msra.mxu0 0
    %2174 = vmatpush.bf16.msra.mxu0 0
    %2175 = vmatpush.bf16.msra.mxu0 0
    %2176 = vmatpush.bf16.msra.mxu0 0
    %2177 = vmatpush.bf16.msra.mxu0 0
    %2178 = vmatpush.bf16.msra.mxu0 %v1639
    %2179 = vmatpush.bf16.msra.mxu0 %v1637
    %2180 = vmatpush.bf16.msra.mxu0 %v1635
    %2181 = vmatmul.bf16.gmra.mxu0 %v1937
    %v2182 = vpop.f32.mrf.mxu0
    %v2183 = vadd.f32 %v2170, %v2182
    %v2184 = vpop.f32.mrf.mxu0
    %2185 = vdwg.mxu0
    %2186 = vmatpush.bf16.msra.mxu0 %v1362
    %2187 = vmatpush.bf16.msra.mxu0 %v1360
    %2188 = vmatpush.bf16.msra.mxu0 %v1358
    %2189 = vmatpush.bf16.msra.mxu0 %v1356
    %2190 = vmatpush.bf16.msra.mxu0 %v1354
    %2191 = vmatpush.bf16.msra.mxu0 %v1352
    %2192 = vmatpush.bf16.msra.mxu0 %v1350
    %2193 = vmatpush.bf16.msra.mxu0 %v1348
    %2194 = vmatmul.bf16.gmra.mxu0 %v428
    %v2195 = vpop.f32.mrf.mxu0
    %v2196 = vadd.f32 %v396, %v2195
    %v2197 = vpop.f32.mrf.mxu0
    %2198 = vdwg.mxu0
    %2199 = vmatpush.bf16.msra.mxu0 %v1378
    %2200 = vmatpush.bf16.msra.mxu0 %v1376
    %2201 = vmatpush.bf16.msra.mxu0 %v1374
    %2202 = vmatpush.bf16.msra.mxu0 %v1372
    %2203 = vmatpush.bf16.msra.mxu0 %v1370
    %2204 = vmatpush.bf16.msra.mxu0 %v1368
    %2205 = vmatpush.bf16.msra.mxu0 %v1366
    %2206 = vmatpush.bf16.msra.mxu0 %v1364
    %2207 = vmatmul.bf16.gmra.mxu0 %v429
    %v2208 = vpop.f32.mrf.mxu0
    %v2209 = vadd.f32 %v2196, %v2208
    %v2210 = vpop.f32.mrf.mxu0
    %2211 = vdwg.mxu0
    %2212 = vmatpush.bf16.msra.mxu0 %v1394
    %2213 = vmatpush.bf16.msra.mxu0 %v1392
    %2214 = vmatpush.bf16.msra.mxu0 %v1390
    %2215 = vmatpush.bf16.msra.mxu0 %v1388
    %2216 = vmatpush.bf16.msra.mxu0 %v1386
    %2217 = vmatpush.bf16.msra.mxu0 %v1384
    %2218 = vmatpush.bf16.msra.mxu0 %v1382
    %2219 = vmatpush.bf16.msra.mxu0 %v1380
    %2220 = vmatmul.bf16.gmra.mxu0 %v430
    %v2221 = vpop.f32.mrf.mxu0
    %v2222 = vadd.f32 %v2209, %v2221
    %v2223 = vpop.f32.mrf.mxu0
    %2224 = vdwg.mxu0
    %2225 = vmatpush.bf16.msra.mxu0 %v1410
    %2226 = vmatpush.bf16.msra.mxu0 %v1408
    %2227 = vmatpush.bf16.msra.mxu0 %v1406
    %2228 = vmatpush.bf16.msra.mxu0 %v1404
    %2229 = vmatpush.bf16.msra.mxu0 %v1402
    %2230 = vmatpush.bf16.msra.mxu0 %v1400
    %2231 = vmatpush.bf16.msra.mxu0 %v1398
    %2232 = vmatpush.bf16.msra.mxu0 %v1396
    %2233 = vmatmul.bf16.gmra.mxu0 %v431
    %v2234 = vpop.f32.mrf.mxu0
    %v2235 = vadd.f32 %v2222, %v2234
    %v2236 = vpop.f32.mrf.mxu0
    %2237 = vdwg.mxu0
    %2238 = vmatpush.bf16.msra.mxu0 %v1426
    %2239 = vmatpush.bf16.msra.mxu0 %v1424
    %2240 = vmatpush.bf16.msra.mxu0 %v1422
    %2241 = vmatpush.bf16.msra.mxu0 %v1420
    %2242 = vmatpush.bf16.msra.mxu0 %v1418
    %2243 = vmatpush.bf16.msra.mxu0 %v1416
    %2244 = vmatpush.bf16.msra.mxu0 %v1414
    %2245 = vmatpush.bf16.msra.mxu0 %v1412
    %2246 = vmatmul.bf16.gmra.mxu0 %v432
    %v2247 = vpop.f32.mrf.mxu0
    %v2248 = vadd.f32 %v2235, %v2247
    %v2249 = vpop.f32.mrf.mxu0
    %2250 = vdwg.mxu0
    %2251 = vmatpush.bf16.msra.mxu0 %v1442
    %2252 = vmatpush.bf16.msra.mxu0 %v1440
    %2253 = vmatpush.bf16.msra.mxu0 %v1438
    %2254 = vmatpush.bf16.msra.mxu0 %v1436
    %2255 = vmatpush.bf16.msra.mxu0 %v1434
    %2256 = vmatpush.bf16.msra.mxu0 %v1432
    %2257 = vmatpush.bf16.msra.mxu0 %v1430
    %2258 = vmatpush.bf16.msra.mxu0 %v1428
    %2259 = vmatmul.bf16.gmra.mxu0 %v433
    %v2260 = vpop.f32.mrf.mxu0
    %v2261 = vadd.f32 %v2248, %v2260
    %v2262 = vpop.f32.mrf.mxu0
    %2263 = vdwg.mxu0
    %2264 = vmatpush.bf16.msra.mxu0 %v1458
    %2265 = vmatpush.bf16.msra.mxu0 %v1456
    %2266 = vmatpush.bf16.msra.mxu0 %v1454
    %2267 = vmatpush.bf16.msra.mxu0 %v1452
    %2268 = vmatpush.bf16.msra.mxu0 %v1450
    %2269 = vmatpush.bf16.msra.mxu0 %v1448
    %2270 = vmatpush.bf16.msra.mxu0 %v1446
    %2271 = vmatpush.bf16.msra.mxu0 %v1444
    %2272 = vmatmul.bf16.gmra.mxu0 %v434
    %v2273 = vpop.f32.mrf.mxu0
    %v2274 = vadd.f32 %v2261, %v2273
    %v2275 = vpop.f32.mrf.mxu0
    %2276 = vdwg.mxu0
    %2277 = vmatpush.bf16.msra.mxu0 %v1474
    %2278 = vmatpush.bf16.msra.mxu0 %v1472
    %2279 = vmatpush.bf16.msra.mxu0 %v1470
    %2280 = vmatpush.bf16.msra.mxu0 %v1468
    %2281 = vmatpush.bf16.msra.mxu0 %v1466
    %2282 = vmatpush.bf16.msra.mxu0 %v1464
    %2283 = vmatpush.bf16.msra.mxu0 %v1462
    %2284 = vmatpush.bf16.msra.mxu0 %v1460
    %2285 = vmatmul.bf16.gmra.mxu0 %v435
    %v2286 = vpop.f32.mrf.mxu0
    %v2287 = vadd.f32 %v2274, %v2286
    %v2288 = vpop.f32.mrf.mxu0
    %2289 = vdwg.mxu0
    %2290 = vmatpush.bf16.msra.mxu0 %v1490
    %2291 = vmatpush.bf16.msra.mxu0 %v1488
    %2292 = vmatpush.bf16.msra.mxu0 %v1486
    %2293 = vmatpush.bf16.msra.mxu0 %v1484
    %2294 = vmatpush.bf16.msra.mxu0 %v1482
    %2295 = vmatpush.bf16.msra.mxu0 %v1480
    %2296 = vmatpush.bf16.msra.mxu0 %v1478
    %2297 = vmatpush.bf16.msra.mxu0 %v1476
    %2298 = vmatmul.bf16.gmra.mxu0 %v436
    %v2299 = vpop.f32.mrf.mxu0
    %v2300 = vadd.f32 %v2287, %v2299
    %v2301 = vpop.f32.mrf.mxu0
    %2302 = vdwg.mxu0
    %2303 = vmatpush.bf16.msra.mxu0 %v1506
    %2304 = vmatpush.bf16.msra.mxu0 %v1504
    %2305 = vmatpush.bf16.msra.mxu0 %v1502
    %2306 = vmatpush.bf16.msra.mxu0 %v1500
    %2307 = vmatpush.bf16.msra.mxu0 %v1498
    %2308 = vmatpush.bf16.msra.mxu0 %v1496
    %2309 = vmatpush.bf16.msra.mxu0 %v1494
    %2310 = vmatpush.bf16.msra.mxu0 %v1492
    %2311 = vmatmul.bf16.gmra.mxu0 %v437
    %v2312 = vpop.f32.mrf.mxu0
    %v2313 = vadd.f32 %v2300, %v2312
    %v2314 = vpop.f32.mrf.mxu0
    %2315 = vdwg.mxu0
    %2316 = vmatpush.bf16.msra.mxu0 %v1522
    %2317 = vmatpush.bf16.msra.mxu0 %v1520
    %2318 = vmatpush.bf16.msra.mxu0 %v1518
    %2319 = vmatpush.bf16.msra.mxu0 %v1516
    %2320 = vmatpush.bf16.msra.mxu0 %v1514
    %2321 = vmatpush.bf16.msra.mxu0 %v1512
    %2322 = vmatpush.bf16.msra.mxu0 %v1510
    %2323 = vmatpush.bf16.msra.mxu0 %v1508
    %2324 = vmatmul.bf16.gmra.mxu0 %v438
    %v2325 = vpop.f32.mrf.mxu0
    %v2326 = vadd.f32 %v2313, %v2325
    %v2327 = vpop.f32.mrf.mxu0
    %2328 = vdwg.mxu0
    %2329 = vmatpush.bf16.msra.mxu0 %v1538
    %2330 = vmatpush.bf16.msra.mxu0 %v1536
    %2331 = vmatpush.bf16.msra.mxu0 %v1534
    %2332 = vmatpush.bf16.msra.mxu0 %v1532
    %2333 = vmatpush.bf16.msra.mxu0 %v1530
    %2334 = vmatpush.bf16.msra.mxu0 %v1528
    %2335 = vmatpush.bf16.msra.mxu0 %v1526
    %2336 = vmatpush.bf16.msra.mxu0 %v1524
    %2337 = vmatmul.bf16.gmra.mxu0 %v439
    %v2338 = vpop.f32.mrf.mxu0
    %v2339 = vadd.f32 %v2326, %v2338
    %v2340 = vpop.f32.mrf.mxu0
    %2341 = vdwg.mxu0
    %2342 = vmatpush.bf16.msra.mxu0 %v1554
    %2343 = vmatpush.bf16.msra.mxu0 %v1552
    %2344 = vmatpush.bf16.msra.mxu0 %v1550
    %2345 = vmatpush.bf16.msra.mxu0 %v1548
    %2346 = vmatpush.bf16.msra.mxu0 %v1546
    %2347 = vmatpush.bf16.msra.mxu0 %v1544
    %2348 = vmatpush.bf16.msra.mxu0 %v1542
    %2349 = vmatpush.bf16.msra.mxu0 %v1540
    %2350 = vmatmul.bf16.gmra.mxu0 %v440
    %v2351 = vpop.f32.mrf.mxu0
    %v2352 = vadd.f32 %v2339, %v2351
    %v2353 = vpop.f32.mrf.mxu0
    %2354 = vdwg.mxu0
    %2355 = vmatpush.bf16.msra.mxu0 %v1570
    %2356 = vmatpush.bf16.msra.mxu0 %v1568
    %2357 = vmatpush.bf16.msra.mxu0 %v1566
    %2358 = vmatpush.bf16.msra.mxu0 %v1564
    %2359 = vmatpush.bf16.msra.mxu0 %v1562
    %2360 = vmatpush.bf16.msra.mxu0 %v1560
    %2361 = vmatpush.bf16.msra.mxu0 %v1558
    %2362 = vmatpush.bf16.msra.mxu0 %v1556
    %2363 = vmatmul.bf16.gmra.mxu0 %v441
    %v2364 = vpop.f32.mrf.mxu0
    %v2365 = vadd.f32 %v2352, %v2364
    %v2366 = vpop.f32.mrf.mxu0
    %2367 = vdwg.mxu0
    %2368 = vmatpush.bf16.msra.mxu0 %v1586
    %2369 = vmatpush.bf16.msra.mxu0 %v1584
    %2370 = vmatpush.bf16.msra.mxu0 %v1582
    %2371 = vmatpush.bf16.msra.mxu0 %v1580
    %2372 = vmatpush.bf16.msra.mxu0 %v1578
    %2373 = vmatpush.bf16.msra.mxu0 %v1576
    %2374 = vmatpush.bf16.msra.mxu0 %v1574
    %2375 = vmatpush.bf16.msra.mxu0 %v1572
    %2376 = vmatmul.bf16.gmra.mxu0 %v442
    %v2377 = vpop.f32.mrf.mxu0
    %v2378 = vadd.f32 %v2365, %v2377
    %v2379 = vpop.f32.mrf.mxu0
    %2380 = vdwg.mxu0
    %2381 = vmatpush.bf16.msra.mxu0 %v1602
    %2382 = vmatpush.bf16.msra.mxu0 %v1600
    %2383 = vmatpush.bf16.msra.mxu0 %v1598
    %2384 = vmatpush.bf16.msra.mxu0 %v1596
    %2385 = vmatpush.bf16.msra.mxu0 %v1594
    %2386 = vmatpush.bf16.msra.mxu0 %v1592
    %2387 = vmatpush.bf16.msra.mxu0 %v1590
    %2388 = vmatpush.bf16.msra.mxu0 %v1588
    %2389 = vmatmul.bf16.gmra.mxu0 %v443
    %v2390 = vpop.f32.mrf.mxu0
    %v2391 = vadd.f32 %v2378, %v2390
    %v2392 = vpop.f32.mrf.mxu0
    %2393 = vdwg.mxu0
    %2394 = vmatpush.bf16.msra.mxu0 %v1618
    %2395 = vmatpush.bf16.msra.mxu0 %v1616
    %2396 = vmatpush.bf16.msra.mxu0 %v1614
    %2397 = vmatpush.bf16.msra.mxu0 %v1612
    %2398 = vmatpush.bf16.msra.mxu0 %v1610
    %2399 = vmatpush.bf16.msra.mxu0 %v1608
    %2400 = vmatpush.bf16.msra.mxu0 %v1606
    %2401 = vmatpush.bf16.msra.mxu0 %v1604
    %2402 = vmatmul.bf16.gmra.mxu0 %v444
    %v2403 = vpop.f32.mrf.mxu0
    %v2404 = vadd.f32 %v2391, %v2403
    %v2405 = vpop.f32.mrf.mxu0
    %2406 = vdwg.mxu0
    %2407 = vmatpush.bf16.msra.mxu0 %v1634
    %2408 = vmatpush.bf16.msra.mxu0 %v1632
    %2409 = vmatpush.bf16.msra.mxu0 %v1630
    %2410 = vmatpush.bf16.msra.mxu0 %v1628
    %2411 = vmatpush.bf16.msra.mxu0 %v1626
    %2412 = vmatpush.bf16.msra.mxu0 %v1624
    %2413 = vmatpush.bf16.msra.mxu0 %v1622
    %2414 = vmatpush.bf16.msra.mxu0 %v1620
    %2415 = vmatmul.bf16.gmra.mxu0 %v445
    %v2416 = vpop.f32.mrf.mxu0
    %v2417 = vadd.f32 %v2404, %v2416
    %v2418 = vpop.f32.mrf.mxu0
    %2419 = vdwg.mxu0
    %2420 = vmatpush.bf16.msra.mxu0 0
    %2421 = vmatpush.bf16.msra.mxu0 0
    %2422 = vmatpush.bf16.msra.mxu0 0
    %2423 = vmatpush.bf16.msra.mxu0 0
    %2424 = vmatpush.bf16.msra.mxu0 0
    %2425 = vmatpush.bf16.msra.mxu0 %v1640
    %2426 = vmatpush.bf16.msra.mxu0 %v1638
    %2427 = vmatpush.bf16.msra.mxu0 %v1636
    %2428 = vmatmul.bf16.gmra.mxu0 %v1937
    %v2429 = vpop.f32.mrf.mxu0
    %v2430 = vadd.f32 %v2417, %v2429
    %v2431 = vpop.f32.mrf.mxu0
    %2432 = vdwg.mxu0
    %v2433 = vld [vmem:[%s4] sm:$0x3]
    %v2435 = vperm.slane %v2433, 0
    %v2436 = vperm.slane %v2433, 1
    %v2439 = vadd.f32 %v2183, %v2435
    %v2440 = vadd.f32 %v2430, %v2436
    %v2441 = vmax.f32 %v2439, 0.0
    %v2442 = vmax.f32 %v2440, 0.0
    %v2443 = vpack.c.bf16 %v2441, %v2441
    %v2444 = vpack.c.bf16 %v2442, %v2442
    %v2445 = vld [vmem:[%s5] sm:$0xff]
    %v2446 = vld [vmem:[%s5 + $0x8] sm:$0xff]
    %v2447 = vld [vmem:[%s5 + $0x10] sm:$0xff]
    %v2448 = vld [vmem:[%s5 + $0x18] sm:$0xff]
    %v2449 = vld [vmem:[%s5 + $0x20] sm:$0xff]
    %v2450 = vld [vmem:[%s5 + $0x28] sm:$0xff]
    %v2451 = vld [vmem:[%s5 + $0x30] sm:$0xff]
    %v2452 = vld [vmem:[%s5 + $0x38] sm:$0xff]
    %v2453 = vld [vmem:[%s5 + $0x40] sm:$0xff]
    %v2454 = vld [vmem:[%s5 + $0x48] sm:$0xff]
    %v2455 = vld [vmem:[%s5 + $0x50] sm:$0xff]
    %v2456 = vld [vmem:[%s5 + $0x58] sm:$0xff]
    %v2457 = vld [vmem:[%s5 + $0x60] sm:$0xff]
    %v2458 = vld [vmem:[%s5 + $0x68] sm:$0xff]
    %v2459 = vld [vmem:[%s5 + $0x70] sm:$0xff]
    %v2460 = vld [vmem:[%s5 + $0x78] sm:$0xff]
    %v2461 = vld [vmem:[%s5 + $0x80] sm:$0xff]
    %v2462 = vld [vmem:[%s5 + $0x88] sm:$0xff]
    %v2463 = vld [vmem:[%s5 + $0x90] sm:$0xff]
    %v2464 = vld [vmem:[%s5 + $0x98] sm:$0xff]
    %v2465 = vld [vmem:[%s5 + $0xa0] sm:$0xff]
    %v2466 = vld [vmem:[%s5 + $0xa8] sm:$0xff]
    %v2467 = vld [vmem:[%s5 + $0xb0] sm:$0xff]
    %v2468 = vld [vmem:[%s5 + $0xb8] sm:$0xff]
    %v2469 = vld [vmem:[%s5 + $0xc0] sm:$0xff]
    %v2470 = vld [vmem:[%s5 + $0xc8] sm:$0xff]
    %v2471 = vld [vmem:[%s5 + $0xd0] sm:$0xff]
    %v2472 = vld [vmem:[%s5 + $0xd8] sm:$0xff]
    %v2473 = vld [vmem:[%s5 + $0xe0] sm:$0xff]
    %v2474 = vld [vmem:[%s5 + $0xe8] sm:$0xff]
    %v2475 = vld [vmem:[%s5 + $0xf0] sm:$0xff]
    %v2476 = vld [vmem:[%s5 + $0xf8] sm:$0xff]
    %v2477 = vld [vmem:[%s6] sm:$0x3]
    %v2479 = vperm.slane %v2477, 0
    %v2480 = vperm.slane %v2477, 1
    %v2515 = vunpack.c.l.b16 %v2445
    %v2516 = vunpack.c.h.b16 %v2445
    %v2517 = vunpack.c.l.b16 %v2446
    %v2518 = vunpack.c.h.b16 %v2446
    %v2519 = vunpack.c.l.b16 %v2447
    %v2520 = vunpack.c.h.b16 %v2447
    %v2521 = vunpack.c.l.b16 %v2448
    %v2522 = vunpack.c.h.b16 %v2448
    %v2523 = vunpack.c.l.b16 %v2449
    %v2524 = vunpack.c.h.b16 %v2449
    %v2525 = vunpack.c.l.b16 %v2450
    %v2526 = vunpack.c.h.b16 %v2450
    %v2527 = vunpack.c.l.b16 %v2451
    %v2528 = vunpack.c.h.b16 %v2451
    %v2529 = vunpack.c.l.b16 %v2452
    %v2530 = vunpack.c.h.b16 %v2452
    %v2531 = vunpack.c.l.b16 %v2453
    %v2532 = vunpack.c.h.b16 %v2453
    %v2533 = vunpack.c.l.b16 %v2454
    %v2534 = vunpack.c.h.b16 %v2454
    %v2535 = vunpack.c.l.b16 %v2455
    %v2536 = vunpack.c.h.b16 %v2455
    %v2537 = vunpack.c.l.b16 %v2456
    %v2538 = vunpack.c.h.b16 %v2456
    %v2539 = vunpack.c.l.b16 %v2457
    %v2540 = vunpack.c.h.b16 %v2457
    %v2541 = vunpack.c.l.b16 %v2458
    %v2542 = vunpack.c.h.b16 %v2458
    %v2543 = vunpack.c.l.b16 %v2459
    %v2544 = vunpack.c.h.b16 %v2459
    %v2545 = vunpack.c.l.b16 %v2460
    %v2546 = vunpack.c.h.b16 %v2460
    %v2547 = vunpack.c.l.b16 %v2461
    %v2548 = vunpack.c.h.b16 %v2461
    %v2549 = vunpack.c.l.b16 %v2462
    %v2550 = vunpack.c.h.b16 %v2462
    %v2551 = vunpack.c.l.b16 %v2463
    %v2552 = vunpack.c.h.b16 %v2463
    %v2553 = vunpack.c.l.b16 %v2464
    %v2554 = vunpack.c.h.b16 %v2464
    %v2555 = vunpack.c.l.b16 %v2465
    %v2556 = vunpack.c.h.b16 %v2465
    %v2557 = vunpack.c.l.b16 %v2466
    %v2558 = vunpack.c.h.b16 %v2466
    %v2559 = vunpack.c.l.b16 %v2467
    %v2560 = vunpack.c.h.b16 %v2467
    %v2561 = vunpack.c.l.b16 %v2468
    %v2562 = vunpack.c.h.b16 %v2468
    %v2563 = vunpack.c.l.b16 %v2469
    %v2564 = vunpack.c.h.b16 %v2469
    %v2565 = vunpack.c.l.b16 %v2470
    %v2566 = vunpack.c.h.b16 %v2470
    %v2567 = vunpack.c.l.b16 %v2471
    %v2568 = vunpack.c.h.b16 %v2471
    %v2569 = vunpack.c.l.b16 %v2472
    %v2570 = vunpack.c.h.b16 %v2472
    %v2571 = vunpack.c.l.b16 %v2473
    %v2572 = vunpack.c.h.b16 %v2473
    %v2573 = vunpack.c.l.b16 %v2474
    %v2574 = vunpack.c.h.b16 %v2474
    %v2575 = vunpack.c.l.b16 %v2475
    %v2576 = vunpack.c.h.b16 %v2475
    %v2577 = vunpack.c.l.b16 %v2476
    %v2578 = vunpack.c.h.b16 %v2476
    %v2579 = vpack.c.b16 %v2517, %v2515
    %v2580 = vpack.c.b16 %v2518, %v2516
    %v2581 = vpack.c.b16 %v2521, %v2519
    %v2582 = vpack.c.b16 %v2522, %v2520
    %v2583 = vpack.c.b16 %v2525, %v2523
    %v2584 = vpack.c.b16 %v2526, %v2524
    %v2585 = vpack.c.b16 %v2529, %v2527
    %v2586 = vpack.c.b16 %v2530, %v2528
    %v2587 = vpack.c.b16 %v2533, %v2531
    %v2588 = vpack.c.b16 %v2534, %v2532
    %v2589 = vpack.c.b16 %v2537, %v2535
    %v2590 = vpack.c.b16 %v2538, %v2536
    %v2591 = vpack.c.b16 %v2541, %v2539
    %v2592 = vpack.c.b16 %v2542, %v2540
    %v2593 = vpack.c.b16 %v2545, %v2543
    %v2594 = vpack.c.b16 %v2546, %v2544
    %v2595 = vpack.c.b16 %v2549, %v2547
    %v2596 = vpack.c.b16 %v2550, %v2548
    %v2597 = vpack.c.b16 %v2553, %v2551
    %v2598 = vpack.c.b16 %v2554, %v2552
    %v2599 = vpack.c.b16 %v2557, %v2555
    %v2600 = vpack.c.b16 %v2558, %v2556
    %v2601 = vpack.c.b16 %v2561, %v2559
    %v2602 = vpack.c.b16 %v2562, %v2560
    %v2603 = vpack.c.b16 %v2565, %v2563
    %v2604 = vpack.c.b16 %v2566, %v2564
    %v2605 = vpack.c.b16 %v2569, %v2567
    %v2606 = vpack.c.b16 %v2570, %v2568
    %v2607 = vpack.c.b16 %v2573, %v2571
    %v2608 = vpack.c.b16 %v2574, %v2572
    %v2609 = vpack.c.b16 %v2577, %v2575
    %v2610 = vpack.c.b16 %v2578, %v2576
    %2643 = vmatpush.bf16.msra.mxu0 %v2593
    %2644 = vmatpush.bf16.msra.mxu0 %v2591
    %2645 = vmatpush.bf16.msra.mxu0 %v2589
    %2646 = vmatpush.bf16.msra.mxu0 %v2587
    %2647 = vmatpush.bf16.msra.mxu0 %v2585
    %2648 = vmatpush.bf16.msra.mxu0 %v2583
    %2649 = vmatpush.bf16.msra.mxu0 %v2581
    %2650 = vmatpush.bf16.msra.mxu0 %v2579
    %2651 = vmatmul.bf16.gmra.mxu0 %v2443
    %v2652 = vpop.f32.mrf.mxu0
    %v2653 = vadd.f32 %v2479, %v2652
    %v2654 = vpop.f32.mrf.mxu0
    %2655 = vdwg.mxu0
    %2656 = vmatpush.bf16.msra.mxu0 %v2609
    %2657 = vmatpush.bf16.msra.mxu0 %v2607
    %2658 = vmatpush.bf16.msra.mxu0 %v2605
    %2659 = vmatpush.bf16.msra.mxu0 %v2603
    %2660 = vmatpush.bf16.msra.mxu0 %v2601
    %2661 = vmatpush.bf16.msra.mxu0 %v2599
    %2662 = vmatpush.bf16.msra.mxu0 %v2597
    %2663 = vmatpush.bf16.msra.mxu0 %v2595
    %2664 = vmatmul.bf16.gmra.mxu0 %v2444
    %v2665 = vpop.f32.mrf.mxu0
    %v2666 = vadd.f32 %v2653, %v2665
    %v2667 = vpop.f32.mrf.mxu0
    %2668 = vdwg.mxu0
    %2669 = vmatpush.bf16.msra.mxu0 %v2594
    %2670 = vmatpush.bf16.msra.mxu0 %v2592
    %2671 = vmatpush.bf16.msra.mxu0 %v2590
    %2672 = vmatpush.bf16.msra.mxu0 %v2588
    %2673 = vmatpush.bf16.msra.mxu0 %v2586
    %2674 = vmatpush.bf16.msra.mxu0 %v2584
    %2675 = vmatpush.bf16.msra.mxu0 %v2582
    %2676 = vmatpush.bf16.msra.mxu0 %v2580
    %2677 = vmatmul.bf16.gmra.mxu0 %v2443
    %v2678 = vpop.f32.mrf.mxu0
    %v2679 = vadd.f32 %v2480, %v2678
    %v2680 = vpop.f32.mrf.mxu0
    %2681 = vdwg.mxu0
    %2682 = vmatpush.bf16.msra.mxu0 %v2610
    %2683 = vmatpush.bf16.msra.mxu0 %v2608
    %2684 = vmatpush.bf16.msra.mxu0 %v2606
    %2685 = vmatpush.bf16.msra.mxu0 %v2604
    %2686 = vmatpush.bf16.msra.mxu0 %v2602
    %2687 = vmatpush.bf16.msra.mxu0 %v2600
    %2688 = vmatpush.bf16.msra.mxu0 %v2598
    %2689 = vmatpush.bf16.msra.mxu0 %v2596
    %2690 = vmatmul.bf16.gmra.mxu0 %v2444
    %v2691 = vpop.f32.mrf.mxu0
    %v2692 = vadd.f32 %v2679, %v2691
    %v2693 = vpop.f32.mrf.mxu0
    %2694 = vdwg.mxu0
    %v2695 = vmax.f32 %v2666, 0.0
    %v2696 = vmax.f32 %v2692, 0.0
    %v2697 = vpack.c.bf16 %v2695, %v2695
    %v2698 = vpack.c.bf16 %v2696, %v2696
    %v2699 = vld [vmem:[%s7] sm:$0xff]
    %v2700 = vld [vmem:[%s7 + $0x8] sm:$0xff]
    %v2701 = vld [vmem:[%s7 + $0x10] sm:$0xff]
    %v2702 = vld [vmem:[%s7 + $0x18] sm:$0xff]
    %v2703 = vld [vmem:[%s7 + $0x20] sm:$0xff]
    %v2704 = vld [vmem:[%s7 + $0x28] sm:$0xff]
    %v2705 = vld [vmem:[%s7 + $0x30] sm:$0xff]
    %v2706 = vld [vmem:[%s7 + $0x38] sm:$0xff]
    %v2707 = vld [vmem:[%s7 + $0x40] sm:$0xff]
    %v2708 = vld [vmem:[%s7 + $0x48] sm:$0xff]
    %v2709 = vld [vmem:[%s7 + $0x50] sm:$0xff]
    %v2710 = vld [vmem:[%s7 + $0x58] sm:$0xff]
    %v2711 = vld [vmem:[%s7 + $0x60] sm:$0xff]
    %v2712 = vld [vmem:[%s7 + $0x68] sm:$0xff]
    %v2713 = vld [vmem:[%s7 + $0x70] sm:$0xff]
    %v2714 = vld [vmem:[%s7 + $0x78] sm:$0xff]
    %v2715 = vld [vmem:[%s7 + $0x80] sm:$0xff]
    %v2716 = vld [vmem:[%s7 + $0x88] sm:$0xff]
    %v2717 = vld [vmem:[%s7 + $0x90] sm:$0xff]
    %v2718 = vld [vmem:[%s7 + $0x98] sm:$0xff]
    %v2719 = vld [vmem:[%s7 + $0xa0] sm:$0xff]
    %v2720 = vld [vmem:[%s7 + $0xa8] sm:$0xff]
    %v2721 = vld [vmem:[%s7 + $0xb0] sm:$0xff]
    %v2722 = vld [vmem:[%s7 + $0xb8] sm:$0xff]
    %v2723 = vld [vmem:[%s7 + $0xc0] sm:$0xff]
    %v2724 = vld [vmem:[%s7 + $0xc8] sm:$0xff]
    %v2725 = vld [vmem:[%s7 + $0xd0] sm:$0xff]
    %v2726 = vld [vmem:[%s7 + $0xd8] sm:$0xff]
    %v2727 = vld [vmem:[%s7 + $0xe0] sm:$0xff]
    %v2728 = vld [vmem:[%s7 + $0xe8] sm:$0xff]
    %v2729 = vld [vmem:[%s7 + $0xf0] sm:$0xff]
    %v2730 = vld [vmem:[%s7 + $0xf8] sm:$0xff]
    %v2731 = vld [vmem:[%s8] sm:$0x3]
    %v2733 = vperm.slane %v2731, 0
    %v2734 = vperm.slane %v2731, 1
    %v2769 = vunpack.c.l.b16 %v2699
    %v2770 = vunpack.c.h.b16 %v2699
    %v2771 = vunpack.c.l.b16 %v2700
    %v2772 = vunpack.c.h.b16 %v2700
    %v2773 = vunpack.c.l.b16 %v2701
    %v2774 = vunpack.c.h.b16 %v2701
    %v2775 = vunpack.c.l.b16 %v2702
    %v2776 = vunpack.c.h.b16 %v2702
    %v2777 = vunpack.c.l.b16 %v2703
    %v2778 = vunpack.c.h.b16 %v2703
    %v2779 = vunpack.c.l.b16 %v2704
    %v2780 = vunpack.c.h.b16 %v2704
    %v2781 = vunpack.c.l.b16 %v2705
    %v2782 = vunpack.c.h.b16 %v2705
    %v2783 = vunpack.c.l.b16 %v2706
    %v2784 = vunpack.c.h.b16 %v2706
    %v2785 = vunpack.c.l.b16 %v2707
    %v2786 = vunpack.c.h.b16 %v2707
    %v2787 = vunpack.c.l.b16 %v2708
    %v2788 = vunpack.c.h.b16 %v2708
    %v2789 = vunpack.c.l.b16 %v2709
    %v2790 = vunpack.c.h.b16 %v2709
    %v2791 = vunpack.c.l.b16 %v2710
    %v2792 = vunpack.c.h.b16 %v2710
    %v2793 = vunpack.c.l.b16 %v2711
    %v2794 = vunpack.c.h.b16 %v2711
    %v2795 = vunpack.c.l.b16 %v2712
    %v2796 = vunpack.c.h.b16 %v2712
    %v2797 = vunpack.c.l.b16 %v2713
    %v2798 = vunpack.c.h.b16 %v2713
    %v2799 = vunpack.c.l.b16 %v2714
    %v2800 = vunpack.c.h.b16 %v2714
    %v2801 = vunpack.c.l.b16 %v2715
    %v2802 = vunpack.c.h.b16 %v2715
    %v2803 = vunpack.c.l.b16 %v2716
    %v2804 = vunpack.c.h.b16 %v2716
    %v2805 = vunpack.c.l.b16 %v2717
    %v2806 = vunpack.c.h.b16 %v2717
    %v2807 = vunpack.c.l.b16 %v2718
    %v2808 = vunpack.c.h.b16 %v2718
    %v2809 = vunpack.c.l.b16 %v2719
    %v2810 = vunpack.c.h.b16 %v2719
    %v2811 = vunpack.c.l.b16 %v2720
    %v2812 = vunpack.c.h.b16 %v2720
    %v2813 = vunpack.c.l.b16 %v2721
    %v2814 = vunpack.c.h.b16 %v2721
    %v2815 = vunpack.c.l.b16 %v2722
    %v2816 = vunpack.c.h.b16 %v2722
    %v2817 = vunpack.c.l.b16 %v2723
    %v2818 = vunpack.c.h.b16 %v2723
    %v2819 = vunpack.c.l.b16 %v2724
    %v2820 = vunpack.c.h.b16 %v2724
    %v2821 = vunpack.c.l.b16 %v2725
    %v2822 = vunpack.c.h.b16 %v2725
    %v2823 = vunpack.c.l.b16 %v2726
    %v2824 = vunpack.c.h.b16 %v2726
    %v2825 = vunpack.c.l.b16 %v2727
    %v2826 = vunpack.c.h.b16 %v2727
    %v2827 = vunpack.c.l.b16 %v2728
    %v2828 = vunpack.c.h.b16 %v2728
    %v2829 = vunpack.c.l.b16 %v2729
    %v2830 = vunpack.c.h.b16 %v2729
    %v2831 = vunpack.c.l.b16 %v2730
    %v2832 = vunpack.c.h.b16 %v2730
    %v2833 = vpack.c.b16 %v2771, %v2769
    %v2834 = vpack.c.b16 %v2772, %v2770
    %v2835 = vpack.c.b16 %v2775, %v2773
    %v2836 = vpack.c.b16 %v2776, %v2774
    %v2837 = vpack.c.b16 %v2779, %v2777
    %v2838 = vpack.c.b16 %v2780, %v2778
    %v2839 = vpack.c.b16 %v2783, %v2781
    %v2840 = vpack.c.b16 %v2784, %v2782
    %v2841 = vpack.c.b16 %v2787, %v2785
    %v2842 = vpack.c.b16 %v2788, %v2786
    %v2843 = vpack.c.b16 %v2791, %v2789
    %v2844 = vpack.c.b16 %v2792, %v2790
    %v2845 = vpack.c.b16 %v2795, %v2793
    %v2846 = vpack.c.b16 %v2796, %v2794
    %v2847 = vpack.c.b16 %v2799, %v2797
    %v2848 = vpack.c.b16 %v2800, %v2798
    %v2849 = vpack.c.b16 %v2803, %v2801
    %v2850 = vpack.c.b16 %v2804, %v2802
    %v2851 = vpack.c.b16 %v2807, %v2805
    %v2852 = vpack.c.b16 %v2808, %v2806
    %v2853 = vpack.c.b16 %v2811, %v2809
    %v2854 = vpack.c.b16 %v2812, %v2810
    %v2855 = vpack.c.b16 %v2815, %v2813
    %v2856 = vpack.c.b16 %v2816, %v2814
    %v2857 = vpack.c.b16 %v2819, %v2817
    %v2858 = vpack.c.b16 %v2820, %v2818
    %v2859 = vpack.c.b16 %v2823, %v2821
    %v2860 = vpack.c.b16 %v2824, %v2822
    %v2861 = vpack.c.b16 %v2827, %v2825
    %v2862 = vpack.c.b16 %v2828, %v2826
    %v2863 = vpack.c.b16 %v2831, %v2829
    %v2864 = vpack.c.b16 %v2832, %v2830
    %2897 = vmatpush.bf16.msra.mxu0 %v2847
    %2898 = vmatpush.bf16.msra.mxu0 %v2845
    %2899 = vmatpush.bf16.msra.mxu0 %v2843
    %2900 = vmatpush.bf16.msra.mxu0 %v2841
    %2901 = vmatpush.bf16.msra.mxu0 %v2839
    %2902 = vmatpush.bf16.msra.mxu0 %v2837
    %2903 = vmatpush.bf16.msra.mxu0 %v2835
    %2904 = vmatpush.bf16.msra.mxu0 %v2833
    %2905 = vmatmul.bf16.gmra.mxu0 %v2697
    %v2906 = vpop.f32.mrf.mxu0
    %v2907 = vadd.f32 %v2733, %v2906
    %v2908 = vpop.f32.mrf.mxu0
    %2909 = vdwg.mxu0
    %2910 = vmatpush.bf16.msra.mxu0 %v2863
    %2911 = vmatpush.bf16.msra.mxu0 %v2861
    %2912 = vmatpush.bf16.msra.mxu0 %v2859
    %2913 = vmatpush.bf16.msra.mxu0 %v2857
    %2914 = vmatpush.bf16.msra.mxu0 %v2855
    %2915 = vmatpush.bf16.msra.mxu0 %v2853
    %2916 = vmatpush.bf16.msra.mxu0 %v2851
    %2917 = vmatpush.bf16.msra.mxu0 %v2849
    %2918 = vmatmul.bf16.gmra.mxu0 %v2698
    %v2919 = vpop.f32.mrf.mxu0
    %v2920 = vadd.f32 %v2907, %v2919
    %v2921 = vpop.f32.mrf.mxu0
    %2922 = vdwg.mxu0
    %2923 = vmatpush.bf16.msra.mxu0 %v2848
    %2924 = vmatpush.bf16.msra.mxu0 %v2846
    %2925 = vmatpush.bf16.msra.mxu0 %v2844
    %2926 = vmatpush.bf16.msra.mxu0 %v2842
    %2927 = vmatpush.bf16.msra.mxu0 %v2840
    %2928 = vmatpush.bf16.msra.mxu0 %v2838
    %2929 = vmatpush.bf16.msra.mxu0 %v2836
    %2930 = vmatpush.bf16.msra.mxu0 %v2834
    %2931 = vmatmul.bf16.gmra.mxu0 %v2697
    %v2932 = vpop.f32.mrf.mxu0
    %v2933 = vadd.f32 %v2734, %v2932
    %v2934 = vpop.f32.mrf.mxu0
    %2935 = vdwg.mxu0
    %2936 = vmatpush.bf16.msra.mxu0 %v2864
    %2937 = vmatpush.bf16.msra.mxu0 %v2862
    %2938 = vmatpush.bf16.msra.mxu0 %v2860
    %2939 = vmatpush.bf16.msra.mxu0 %v2858
    %2940 = vmatpush.bf16.msra.mxu0 %v2856
    %2941 = vmatpush.bf16.msra.mxu0 %v2854
    %2942 = vmatpush.bf16.msra.mxu0 %v2852
    %2943 = vmatpush.bf16.msra.mxu0 %v2850
    %2944 = vmatmul.bf16.gmra.mxu0 %v2698
    %v2945 = vpop.f32.mrf.mxu0
    %v2946 = vadd.f32 %v2933, %v2945
    %v2947 = vpop.f32.mrf.mxu0
    %2948 = vdwg.mxu0
    %v2949 = vmax.f32 %v2920, 0.0
    %v2950 = vmax.f32 %v2946, 0.0
    %v2951 = vpack.c.bf16 %v2949, %v2949
    %v2952 = vpack.c.bf16 %v2950, %v2950
    %v2953 = vld [vmem:[%s9] sm:$0xff]
    %v2954 = vld [vmem:[%s9 + $0x8] sm:$0xff]
    %v2955 = vld [vmem:[%s9 + $0x10] sm:$0xff]
    %v2956 = vld [vmem:[%s9 + $0x18] sm:$0xff]
    %v2957 = vld [vmem:[%s9 + $0x20] sm:$0xff]
    %v2958 = vld [vmem:[%s9 + $0x28] sm:$0xff]
    %v2959 = vld [vmem:[%s9 + $0x30] sm:$0xff]
    %v2960 = vld [vmem:[%s9 + $0x38] sm:$0xff]
    %v2961 = vld [vmem:[%s9 + $0x40] sm:$0xff]
    %v2962 = vld [vmem:[%s9 + $0x48] sm:$0xf]
    %v2963 = vld [vmem:[%s9 + $0x4c] sm:$0xff]
    %v2964 = vld [vmem:[%s9 + $0x54] sm:$0xff]
    %v2965 = vld [vmem:[%s9 + $0x5c] sm:$0xff]
    %v2966 = vld [vmem:[%s9 + $0x64] sm:$0xff]
    %v2967 = vld [vmem:[%s9 + $0x6c] sm:$0xff]
    %v2968 = vld [vmem:[%s9 + $0x74] sm:$0xff]
    %v2969 = vld [vmem:[%s9 + $0x7c] sm:$0xff]
    %v2970 = vld [vmem:[%s9 + $0x84] sm:$0xff]
    %v2971 = vld [vmem:[%s9 + $0x8c] sm:$0xff]
    %v2972 = vld [vmem:[%s9 + $0x94] sm:$0xf]
    %v2973 = vld [vmem:[%s9 + $0x98] sm:$0xff]
    %v2974 = vld [vmem:[%s9 + $0xa0] sm:$0xff]
    %v2975 = vld [vmem:[%s9 + $0xa8] sm:$0xff]
    %v2976 = vld [vmem:[%s9 + $0xb0] sm:$0xff]
    %v2977 = vld [vmem:[%s9 + $0xb8] sm:$0xff]
    %v2978 = vld [vmem:[%s9 + $0xc0] sm:$0xff]
    %v2979 = vld [vmem:[%s9 + $0xc8] sm:$0xff]
    %v2980 = vld [vmem:[%s9 + $0xd0] sm:$0xff]
    %v2981 = vld [vmem:[%s9 + $0xd8] sm:$0xff]
    %v2982 = vld [vmem:[%s9 + $0xe0] sm:$0xf]
    %v2983 = vld [vmem:[%s9 + $0xe4] sm:$0xff]
    %v2984 = vld [vmem:[%s9 + $0xec] sm:$0xff]
    %v2985 = vld [vmem:[%s9 + $0xf4] sm:$0xff]
    %v2986 = vld [vmem:[%s9 + $0xfc] sm:$0xff]
    %v2987 = vld [vmem:[%s9 + $0x104] sm:$0xff]
    %v2988 = vld [vmem:[%s9 + $0x10c] sm:$0xff]
    %v2989 = vld [vmem:[%s9 + $0x114] sm:$0xff]
    %v2990 = vld [vmem:[%s9 + $0x11c] sm:$0xff]
    %v2991 = vld [vmem:[%s9 + $0x124] sm:$0xff]
    %v2992 = vld [vmem:[%s9 + $0x12c] sm:$0xf]
    %v2993 = vld [vmem:[%s9 + $0x130] sm:$0xff]
    %v2994 = vld [vmem:[%s9 + $0x138] sm:$0xff]
    %v2995 = vld [vmem:[%s9 + $0x140] sm:$0xff]
    %v2996 = vld [vmem:[%s9 + $0x148] sm:$0xff]
    %v2997 = vld [vmem:[%s9 + $0x150] sm:$0xff]
    %v2998 = vld [vmem:[%s9 + $0x158] sm:$0xff]
    %v2999 = vld [vmem:[%s9 + $0x160] sm:$0xff]
    %v3000 = vld [vmem:[%s9 + $0x168] sm:$0xff]
    %v3001 = vld [vmem:[%s9 + $0x170] sm:$0xff]
    %v3002 = vld [vmem:[%s9 + $0x178] sm:$0xf]
    %v3003 = vld [vmem:[%s9 + $0x17c] sm:$0xff]
    %v3004 = vld [vmem:[%s9 + $0x184] sm:$0xff]
    %v3005 = vld [vmem:[%s9 + $0x18c] sm:$0xff]
    %v3006 = vld [vmem:[%s9 + $0x194] sm:$0xff]
    %v3007 = vld [vmem:[%s9 + $0x19c] sm:$0xff]
    %v3008 = vld [vmem:[%s9 + $0x1a4] sm:$0xff]
    %v3009 = vld [vmem:[%s9 + $0x1ac] sm:$0xff]
    %v3010 = vld [vmem:[%s9 + $0x1b4] sm:$0xff]
    %v3011 = vld [vmem:[%s9 + $0x1bc] sm:$0xff]
    %v3012 = vld [vmem:[%s9 + $0x1c4] sm:$0xf]
    %v3013 = vld [vmem:[%s9 + $0x1c8] sm:$0xff]
    %v3014 = vld [vmem:[%s9 + $0x1d0] sm:$0xff]
    %v3015 = vld [vmem:[%s9 + $0x1d8] sm:$0xff]
    %v3016 = vld [vmem:[%s9 + $0x1e0] sm:$0xff]
    %v3017 = vld [vmem:[%s9 + $0x1e8] sm:$0xff]
    %v3018 = vld [vmem:[%s9 + $0x1f0] sm:$0xff]
    %v3019 = vld [vmem:[%s9 + $0x1f8] sm:$0xff]
    %v3020 = vld [vmem:[%s9 + $0x200] sm:$0xff]
    %v3021 = vld [vmem:[%s9 + $0x208] sm:$0xff]
    %v3022 = vld [vmem:[%s9 + $0x210] sm:$0xf]
    %v3023 = vld [vmem:[%s9 + $0x214] sm:$0xff]
    %v3024 = vld [vmem:[%s9 + $0x21c] sm:$0xff]
    %v3025 = vld [vmem:[%s9 + $0x224] sm:$0xff]
    %v3026 = vld [vmem:[%s9 + $0x22c] sm:$0xff]
    %v3027 = vld [vmem:[%s9 + $0x234] sm:$0xff]
    %v3028 = vld [vmem:[%s9 + $0x23c] sm:$0xff]
    %v3029 = vld [vmem:[%s9 + $0x244] sm:$0xff]
    %v3030 = vld [vmem:[%s9 + $0x24c] sm:$0xff]
    %v3031 = vld [vmem:[%s9 + $0x254] sm:$0xff]
    %v3032 = vld [vmem:[%s9 + $0x25c] sm:$0xf]
    %v3033 = vld [vmem:[%s9 + $0x260] sm:$0xff]
    %v3034 = vld [vmem:[%s9 + $0x268] sm:$0xff]
    %v3035 = vld [vmem:[%s9 + $0x270] sm:$0xff]
    %v3036 = vld [vmem:[%s9 + $0x278] sm:$0xff]
    %v3037 = vld [vmem:[%s9 + $0x280] sm:$0xff]
    %v3038 = vld [vmem:[%s9 + $0x288] sm:$0xff]
    %v3039 = vld [vmem:[%s9 + $0x290] sm:$0xff]
    %v3040 = vld [vmem:[%s9 + $0x298] sm:$0xff]
    %v3041 = vld [vmem:[%s9 + $0x2a0] sm:$0xff]
    %v3042 = vld [vmem:[%s9 + $0x2a8] sm:$0xf]
    %v3043 = vld [vmem:[%s9 + $0x2ac] sm:$0xff]
    %v3044 = vld [vmem:[%s9 + $0x2b4] sm:$0xff]
    %v3045 = vld [vmem:[%s9 + $0x2bc] sm:$0xff]
    %v3046 = vld [vmem:[%s9 + $0x2c4] sm:$0xff]
    %v3047 = vld [vmem:[%s9 + $0x2cc] sm:$0xff]
    %v3048 = vld [vmem:[%s9 + $0x2d4] sm:$0xff]
    %v3049 = vld [vmem:[%s9 + $0x2dc] sm:$0xff]
    %v3050 = vld [vmem:[%s9 + $0x2e4] sm:$0xff]
    %v3051 = vld [vmem:[%s9 + $0x2ec] sm:$0xff]
    %v3052 = vld [vmem:[%s9 + $0x2f4] sm:$0xf]
    %v3053 = vld [vmem:[%s9 + $0x2f8] sm:$0xff]
    %v3054 = vld [vmem:[%s9 + $0x300] sm:$0xff]
    %v3055 = vld [vmem:[%s9 + $0x308] sm:$0xff]
    %v3056 = vld [vmem:[%s9 + $0x310] sm:$0xff]
    %v3057 = vld [vmem:[%s9 + $0x318] sm:$0xff]
    %v3058 = vld [vmem:[%s9 + $0x320] sm:$0xff]
    %v3059 = vld [vmem:[%s9 + $0x328] sm:$0xff]
    %v3060 = vld [vmem:[%s9 + $0x330] sm:$0xff]
    %v3061 = vld [vmem:[%s9 + $0x338] sm:$0xff]
    %v3062 = vld [vmem:[%s9 + $0x340] sm:$0xf]
    %v3063 = vld [vmem:[%s9 + $0x344] sm:$0xff]
    %v3064 = vld [vmem:[%s9 + $0x34c] sm:$0xff]
    %v3065 = vld [vmem:[%s9 + $0x354] sm:$0xff]
    %v3066 = vld [vmem:[%s9 + $0x35c] sm:$0xff]
    %v3067 = vld [vmem:[%s9 + $0x364] sm:$0xff]
    %v3068 = vld [vmem:[%s9 + $0x36c] sm:$0xff]
    %v3069 = vld [vmem:[%s9 + $0x374] sm:$0xff]
    %v3070 = vld [vmem:[%s9 + $0x37c] sm:$0xff]
    %v3071 = vld [vmem:[%s9 + $0x384] sm:$0xff]
    %v3072 = vld [vmem:[%s9 + $0x38c] sm:$0xf]
    %v3073 = vld [vmem:[%s9 + $0x390] sm:$0xff]
    %v3074 = vld [vmem:[%s9 + $0x398] sm:$0xff]
    %v3075 = vld [vmem:[%s9 + $0x3a0] sm:$0xff]
    %v3076 = vld [vmem:[%s9 + $0x3a8] sm:$0xff]
    %v3077 = vld [vmem:[%s9 + $0x3b0] sm:$0xff]
    %v3078 = vld [vmem:[%s9 + $0x3b8] sm:$0xff]
    %v3079 = vld [vmem:[%s9 + $0x3c0] sm:$0xff]
    %v3080 = vld [vmem:[%s9 + $0x3c8] sm:$0xff]
    %v3081 = vld [vmem:[%s9 + $0x3d0] sm:$0xff]
    %v3082 = vld [vmem:[%s9 + $0x3d8] sm:$0xf]
    %v3083 = vld [vmem:[%s9 + $0x3dc] sm:$0xff]
    %v3084 = vld [vmem:[%s9 + $0x3e4] sm:$0xff]
    %v3085 = vld [vmem:[%s9 + $0x3ec] sm:$0xff]
    %v3086 = vld [vmem:[%s9 + $0x3f4] sm:$0xff]
    %v3087 = vld [vmem:[%s9 + $0x3fc] sm:$0xff]
    %v3088 = vld [vmem:[%s9 + $0x404] sm:$0xff]
    %v3089 = vld [vmem:[%s9 + $0x40c] sm:$0xff]
    %v3090 = vld [vmem:[%s9 + $0x414] sm:$0xff]
    %v3091 = vld [vmem:[%s9 + $0x41c] sm:$0xff]
    %v3092 = vld [vmem:[%s9 + $0x424] sm:$0xf]
    %v3093 = vld [vmem:[%s9 + $0x428] sm:$0xff]
    %v3094 = vld [vmem:[%s9 + $0x430] sm:$0xff]
    %v3095 = vld [vmem:[%s9 + $0x438] sm:$0xff]
    %v3096 = vld [vmem:[%s9 + $0x440] sm:$0xff]
    %v3097 = vld [vmem:[%s9 + $0x448] sm:$0xff]
    %v3098 = vld [vmem:[%s9 + $0x450] sm:$0xff]
    %v3099 = vld [vmem:[%s9 + $0x458] sm:$0xff]
    %v3100 = vld [vmem:[%s9 + $0x460] sm:$0xff]
    %v3101 = vld [vmem:[%s9 + $0x468] sm:$0xff]
    %v3102 = vld [vmem:[%s9 + $0x470] sm:$0xf]
    %v3103 = vld [vmem:[%s9 + $0x474] sm:$0xff]
    %v3104 = vld [vmem:[%s9 + $0x47c] sm:$0xff]
    %v3105 = vld [vmem:[%s9 + $0x484] sm:$0xff]
    %v3106 = vld [vmem:[%s9 + $0x48c] sm:$0xff]
    %v3107 = vld [vmem:[%s9 + $0x494] sm:$0xff]
    %v3108 = vld [vmem:[%s9 + $0x49c] sm:$0xff]
    %v3109 = vld [vmem:[%s9 + $0x4a4] sm:$0xff]
    %v3110 = vld [vmem:[%s9 + $0x4ac] sm:$0xff]
    %v3111 = vld [vmem:[%s9 + $0x4b4] sm:$0xff]
    %v3112 = vld [vmem:[%s9 + $0x4bc] sm:$0xf]
    %v3113 = vld [vmem:[%s9 + $0x4c0] sm:$0xff]
    %v3114 = vld [vmem:[%s9 + $0x4c8] sm:$0xff]
    %v3115 = vld [vmem:[%s9 + $0x4d0] sm:$0xff]
    %v3116 = vld [vmem:[%s9 + $0x4d8] sm:$0xff]
    %v3117 = vld [vmem:[%s9 + $0x4e0] sm:$0xff]
    %v3118 = vld [vmem:[%s9 + $0x4e8] sm:$0xff]
    %v3119 = vld [vmem:[%s9 + $0x4f0] sm:$0xff]
    %v3120 = vld [vmem:[%s9 + $0x4f8] sm:$0xff]
    %v3121 = vld [vmem:[%s9 + $0x500] sm:$0xff]
    %v3122 = vld [vmem:[%s9 + $0x508] sm:$0xf]
    %v3123 = vld [vmem:[%s9 + $0x50c] sm:$0xff]
    %v3124 = vld [vmem:[%s9 + $0x514] sm:$0xff]
    %v3125 = vld [vmem:[%s9 + $0x51c] sm:$0xff]
    %v3126 = vld [vmem:[%s9 + $0x524] sm:$0xff]
    %v3127 = vld [vmem:[%s9 + $0x52c] sm:$0xff]
    %v3128 = vld [vmem:[%s9 + $0x534] sm:$0xff]
    %v3129 = vld [vmem:[%s9 + $0x53c] sm:$0xff]
    %v3130 = vld [vmem:[%s9 + $0x544] sm:$0xff]
    %v3131 = vld [vmem:[%s9 + $0x54c] sm:$0xff]
    %v3132 = vld [vmem:[%s9 + $0x554] sm:$0xf]
    %v3133 = vld [vmem:[%s9 + $0x558] sm:$0xff]
    %v3134 = vld [vmem:[%s9 + $0x560] sm:$0xff]
    %v3135 = vld [vmem:[%s9 + $0x568] sm:$0xff]
    %v3136 = vld [vmem:[%s9 + $0x570] sm:$0xff]
    %v3137 = vld [vmem:[%s9 + $0x578] sm:$0xff]
    %v3138 = vld [vmem:[%s9 + $0x580] sm:$0xff]
    %v3139 = vld [vmem:[%s9 + $0x588] sm:$0xff]
    %v3140 = vld [vmem:[%s9 + $0x590] sm:$0xff]
    %v3141 = vld [vmem:[%s9 + $0x598] sm:$0xff]
    %v3142 = vld [vmem:[%s9 + $0x5a0] sm:$0xf]
    %v3143 = vld [vmem:[%s9 + $0x5a4] sm:$0xff]
    %v3144 = vld [vmem:[%s9 + $0x5ac] sm:$0xff]
    %v3145 = vld [vmem:[%s9 + $0x5b4] sm:$0xff]
    %v3146 = vld [vmem:[%s9 + $0x5bc] sm:$0xff]
    %v3147 = vld [vmem:[%s9 + $0x5c4] sm:$0xff]
    %v3148 = vld [vmem:[%s9 + $0x5cc] sm:$0xff]
    %v3149 = vld [vmem:[%s9 + $0x5d4] sm:$0xff]
    %v3150 = vld [vmem:[%s9 + $0x5dc] sm:$0xff]
    %v3151 = vld [vmem:[%s9 + $0x5e4] sm:$0xff]
    %v3152 = vld [vmem:[%s9 + $0x5ec] sm:$0xf]
    %v3153 = vld [vmem:[%s9 + $0x5f0] sm:$0xff]
    %v3154 = vld [vmem:[%s9 + $0x5f8] sm:$0xff]
    %v3155 = vld [vmem:[%s9 + $0x600] sm:$0xff]
    %v3156 = vld [vmem:[%s9 + $0x608] sm:$0xff]
    %v3157 = vld [vmem:[%s9 + $0x610] sm:$0xff]
    %v3158 = vld [vmem:[%s9 + $0x618] sm:$0xff]
    %v3159 = vld [vmem:[%s9 + $0x620] sm:$0xff]
    %v3160 = vld [vmem:[%s9 + $0x628] sm:$0xff]
    %v3161 = vld [vmem:[%s9 + $0x630] sm:$0xff]
    %v3162 = vld [vmem:[%s9 + $0x638] sm:$0xf]
    %v3163 = vld [vmem:[%s9 + $0x63c] sm:$0xff]
    %v3164 = vld [vmem:[%s9 + $0x644] sm:$0xff]
    %v3165 = vld [vmem:[%s9 + $0x64c] sm:$0xff]
    %v3166 = vld [vmem:[%s9 + $0x654] sm:$0xff]
    %v3167 = vld [vmem:[%s9 + $0x65c] sm:$0xff]
    %v3168 = vld [vmem:[%s9 + $0x664] sm:$0xff]
    %v3169 = vld [vmem:[%s9 + $0x66c] sm:$0xff]
    %v3170 = vld [vmem:[%s9 + $0x674] sm:$0xff]
    %v3171 = vld [vmem:[%s9 + $0x67c] sm:$0xff]
    %v3172 = vld [vmem:[%s9 + $0x684] sm:$0xf]
    %v3173 = vld [vmem:[%s9 + $0x688] sm:$0xff]
    %v3174 = vld [vmem:[%s9 + $0x690] sm:$0xff]
    %v3175 = vld [vmem:[%s9 + $0x698] sm:$0xff]
    %v3176 = vld [vmem:[%s9 + $0x6a0] sm:$0xff]
    %v3177 = vld [vmem:[%s9 + $0x6a8] sm:$0xff]
    %v3178 = vld [vmem:[%s9 + $0x6b0] sm:$0xff]
    %v3179 = vld [vmem:[%s9 + $0x6b8] sm:$0xff]
    %v3180 = vld [vmem:[%s9 + $0x6c0] sm:$0xff]
    %v3181 = vld [vmem:[%s9 + $0x6c8] sm:$0xff]
    %v3182 = vld [vmem:[%s9 + $0x6d0] sm:$0xf]
    %v3183 = vld [vmem:[%s9 + $0x6d4] sm:$0xff]
    %v3184 = vld [vmem:[%s9 + $0x6dc] sm:$0xff]
    %v3185 = vld [vmem:[%s9 + $0x6e4] sm:$0xff]
    %v3186 = vld [vmem:[%s9 + $0x6ec] sm:$0xff]
    %v3187 = vld [vmem:[%s9 + $0x6f4] sm:$0xff]
    %v3188 = vld [vmem:[%s9 + $0x6fc] sm:$0xff]
    %v3189 = vld [vmem:[%s9 + $0x704] sm:$0xff]
    %v3190 = vld [vmem:[%s9 + $0x70c] sm:$0xff]
    %v3191 = vld [vmem:[%s9 + $0x714] sm:$0xff]
    %v3192 = vld [vmem:[%s9 + $0x71c] sm:$0xf]
    %v3193 = vld [vmem:[%s9 + $0x720] sm:$0xff]
    %v3194 = vld [vmem:[%s9 + $0x728] sm:$0xff]
    %v3195 = vld [vmem:[%s9 + $0x730] sm:$0xff]
    %v3196 = vld [vmem:[%s9 + $0x738] sm:$0xff]
    %v3197 = vld [vmem:[%s9 + $0x740] sm:$0xff]
    %v3198 = vld [vmem:[%s9 + $0x748] sm:$0xff]
    %v3199 = vld [vmem:[%s9 + $0x750] sm:$0xff]
    %v3200 = vld [vmem:[%s9 + $0x758] sm:$0xff]
    %v3201 = vld [vmem:[%s9 + $0x760] sm:$0xff]
    %v3202 = vld [vmem:[%s9 + $0x768] sm:$0xf]
    %v3203 = vld [vmem:[%s9 + $0x76c] sm:$0xff]
    %v3204 = vld [vmem:[%s9 + $0x774] sm:$0xff]
    %v3205 = vld [vmem:[%s9 + $0x77c] sm:$0xff]
    %v3206 = vld [vmem:[%s9 + $0x784] sm:$0xff]
    %v3207 = vld [vmem:[%s9 + $0x78c] sm:$0xff]
    %v3208 = vld [vmem:[%s9 + $0x794] sm:$0xff]
    %v3209 = vld [vmem:[%s9 + $0x79c] sm:$0xff]
    %v3210 = vld [vmem:[%s9 + $0x7a4] sm:$0xff]
    %v3211 = vld [vmem:[%s9 + $0x7ac] sm:$0xff]
    %v3212 = vld [vmem:[%s9 + $0x7b4] sm:$0xf]
    %v3213 = vld [vmem:[%s9 + $0x7b8] sm:$0xff]
    %v3214 = vld [vmem:[%s9 + $0x7c0] sm:$0xff]
    %v3215 = vld [vmem:[%s9 + $0x7c8] sm:$0xff]
    %v3216 = vld [vmem:[%s9 + $0x7d0] sm:$0xff]
    %v3217 = vld [vmem:[%s9 + $0x7d8] sm:$0xff]
    %v3218 = vld [vmem:[%s9 + $0x7e0] sm:$0xff]
    %v3219 = vld [vmem:[%s9 + $0x7e8] sm:$0xff]
    %v3220 = vld [vmem:[%s9 + $0x7f0] sm:$0xff]
    %v3221 = vld [vmem:[%s9 + $0x7f8] sm:$0xff]
    %v3222 = vld [vmem:[%s9 + $0x800] sm:$0xf]
    %v3223 = vld [vmem:[%s9 + $0x804] sm:$0xff]
    %v3224 = vld [vmem:[%s9 + $0x80c] sm:$0xff]
    %v3225 = vld [vmem:[%s9 + $0x814] sm:$0xff]
    %v3226 = vld [vmem:[%s9 + $0x81c] sm:$0xff]
    %v3227 = vld [vmem:[%s9 + $0x824] sm:$0xff]
    %v3228 = vld [vmem:[%s9 + $0x82c] sm:$0xff]
    %v3229 = vld [vmem:[%s9 + $0x834] sm:$0xff]
    %v3230 = vld [vmem:[%s9 + $0x83c] sm:$0xff]
    %v3231 = vld [vmem:[%s9 + $0x844] sm:$0xff]
    %v3232 = vld [vmem:[%s9 + $0x84c] sm:$0xf]
    %v3233 = vld [vmem:[%s9 + $0x850] sm:$0xff]
    %v3234 = vld [vmem:[%s9 + $0x858] sm:$0xff]
    %v3235 = vld [vmem:[%s9 + $0x860] sm:$0xff]
    %v3236 = vld [vmem:[%s9 + $0x868] sm:$0xff]
    %v3237 = vld [vmem:[%s9 + $0x870] sm:$0xff]
    %v3238 = vld [vmem:[%s9 + $0x878] sm:$0xff]
    %v3239 = vld [vmem:[%s9 + $0x880] sm:$0xff]
    %v3240 = vld [vmem:[%s9 + $0x888] sm:$0xff]
    %v3241 = vld [vmem:[%s9 + $0x890] sm:$0xff]
    %v3242 = vld [vmem:[%s9 + $0x898] sm:$0xf]
    %v3243 = vld [vmem:[%s9 + $0x89c] sm:$0xff]
    %v3244 = vld [vmem:[%s9 + $0x8a4] sm:$0xff]
    %v3245 = vld [vmem:[%s9 + $0x8ac] sm:$0xff]
    %v3246 = vld [vmem:[%s9 + $0x8b4] sm:$0xff]
    %v3247 = vld [vmem:[%s9 + $0x8bc] sm:$0xff]
    %v3248 = vld [vmem:[%s9 + $0x8c4] sm:$0xff]
    %v3249 = vld [vmem:[%s9 + $0x8cc] sm:$0xff]
    %v3250 = vld [vmem:[%s9 + $0x8d4] sm:$0xff]
    %v3251 = vld [vmem:[%s9 + $0x8dc] sm:$0xff]
    %v3252 = vld [vmem:[%s9 + $0x8e4] sm:$0xf]
    %v3253 = vld [vmem:[%s9 + $0x8e8] sm:$0xff]
    %v3254 = vld [vmem:[%s9 + $0x8f0] sm:$0xff]
    %v3255 = vld [vmem:[%s9 + $0x8f8] sm:$0xff]
    %v3256 = vld [vmem:[%s9 + $0x900] sm:$0xff]
    %v3257 = vld [vmem:[%s9 + $0x908] sm:$0xff]
    %v3258 = vld [vmem:[%s9 + $0x910] sm:$0xff]
    %v3259 = vld [vmem:[%s9 + $0x918] sm:$0xff]
    %v3260 = vld [vmem:[%s9 + $0x920] sm:$0xff]
    %v3261 = vld [vmem:[%s9 + $0x928] sm:$0xff]
    %v3262 = vld [vmem:[%s9 + $0x930] sm:$0xf]
    %v3263 = vld [vmem:[%s9 + $0x934] sm:$0xff]
    %v3264 = vld [vmem:[%s9 + $0x93c] sm:$0xff]
    %v3265 = vld [vmem:[%s9 + $0x944] sm:$0xff]
    %v3266 = vld [vmem:[%s9 + $0x94c] sm:$0xff]
    %v3267 = vld [vmem:[%s9 + $0x954] sm:$0xff]
    %v3268 = vld [vmem:[%s9 + $0x95c] sm:$0xff]
    %v3269 = vld [vmem:[%s9 + $0x964] sm:$0xff]
    %v3270 = vld [vmem:[%s9 + $0x96c] sm:$0xff]
    %v3271 = vld [vmem:[%s9 + $0x974] sm:$0xff]
    %v3272 = vld [vmem:[%s9 + $0x97c] sm:$0xf]
    %v3273 = vld [vmem:[%s10] sm:$0xff]
    %v3274 = vld [vmem:[%s10 + $0x8] sm:$0xff]
    %v3275 = vld [vmem:[%s10 + $0x10] sm:$0x7]
    %v3279 = vperm.slane %v3273, 0
    %v3280 = vperm.slane %v3273, 1
    %v3281 = vperm.slane %v3273, 2
    %v3282 = vperm.slane %v3273, 3
    %v3283 = vperm.slane %v3273, 4
    %v3284 = vperm.slane %v3273, 5
    %v3285 = vperm.slane %v3273, 6
    %v3286 = vperm.slane %v3273, 7
    %v3287 = vperm.slane %v3274, 0
    %v3288 = vperm.slane %v3274, 1
    %v3289 = vperm.slane %v3274, 2
    %v3290 = vperm.slane %v3274, 3
    %v3291 = vperm.slane %v3274, 4
    %v3292 = vperm.slane %v3274, 5
    %v3293 = vperm.slane %v3274, 6
    %v3294 = vperm.slane %v3274, 7
    %v3295 = vperm.slane %v3275, 0
    %v3296 = vperm.slane %v3275, 1
    %v3297 = vperm.slane %v3275, 2
    %v3637 = vunpack.c.l.b16 %v2953
    %v3638 = vunpack.c.h.b16 %v2953
    %v3639 = vunpack.c.l.b16 %v2954
    %v3640 = vunpack.c.h.b16 %v2954
    %v3641 = vunpack.c.l.b16 %v2955
    %v3642 = vunpack.c.h.b16 %v2955
    %v3643 = vunpack.c.l.b16 %v2956
    %v3644 = vunpack.c.h.b16 %v2956
    %v3645 = vunpack.c.l.b16 %v2957
    %v3646 = vunpack.c.h.b16 %v2957
    %v3647 = vunpack.c.l.b16 %v2958
    %v3648 = vunpack.c.h.b16 %v2958
    %v3649 = vunpack.c.l.b16 %v2959
    %v3650 = vunpack.c.h.b16 %v2959
    %v3651 = vunpack.c.l.b16 %v2960
    %v3652 = vunpack.c.h.b16 %v2960
    %v3653 = vunpack.c.l.b16 %v2961
    %v3654 = vunpack.c.h.b16 %v2961
    %v3655 = vunpack.c.l.b16 %v2962
    %v3656 = vunpack.c.l.b16 %v2963
    %v3657 = vunpack.c.h.b16 %v2963
    %v3658 = vunpack.c.l.b16 %v2964
    %v3659 = vunpack.c.h.b16 %v2964
    %v3660 = vunpack.c.l.b16 %v2965
    %v3661 = vunpack.c.h.b16 %v2965
    %v3662 = vunpack.c.l.b16 %v2966
    %v3663 = vunpack.c.h.b16 %v2966
    %v3664 = vunpack.c.l.b16 %v2967
    %v3665 = vunpack.c.h.b16 %v2967
    %v3666 = vunpack.c.l.b16 %v2968
    %v3667 = vunpack.c.h.b16 %v2968
    %v3668 = vunpack.c.l.b16 %v2969
    %v3669 = vunpack.c.h.b16 %v2969
    %v3670 = vunpack.c.l.b16 %v2970
    %v3671 = vunpack.c.h.b16 %v2970
    %v3672 = vunpack.c.l.b16 %v2971
    %v3673 = vunpack.c.h.b16 %v2971
    %v3674 = vunpack.c.l.b16 %v2972
    %v3675 = vunpack.c.l.b16 %v2973
    %v3676 = vunpack.c.h.b16 %v2973
    %v3677 = vunpack.c.l.b16 %v2974
    %v3678 = vunpack.c.h.b16 %v2974
    %v3679 = vunpack.c.l.b16 %v2975
    %v3680 = vunpack.c.h.b16 %v2975
    %v3681 = vunpack.c.l.b16 %v2976
    %v3682 = vunpack.c.h.b16 %v2976
    %v3683 = vunpack.c.l.b16 %v2977
    %v3684 = vunpack.c.h.b16 %v2977
    %v3685 = vunpack.c.l.b16 %v2978
    %v3686 = vunpack.c.h.b16 %v2978
    %v3687 = vunpack.c.l.b16 %v2979
    %v3688 = vunpack.c.h.b16 %v2979
    %v3689 = vunpack.c.l.b16 %v2980
    %v3690 = vunpack.c.h.b16 %v2980
    %v3691 = vunpack.c.l.b16 %v2981
    %v3692 = vunpack.c.h.b16 %v2981
    %v3693 = vunpack.c.l.b16 %v2982
    %v3694 = vunpack.c.l.b16 %v2983
    %v3695 = vunpack.c.h.b16 %v2983
    %v3696 = vunpack.c.l.b16 %v2984
    %v3697 = vunpack.c.h.b16 %v2984
    %v3698 = vunpack.c.l.b16 %v2985
    %v3699 = vunpack.c.h.b16 %v2985
    %v3700 = vunpack.c.l.b16 %v2986
    %v3701 = vunpack.c.h.b16 %v2986
    %v3702 = vunpack.c.l.b16 %v2987
    %v3703 = vunpack.c.h.b16 %v2987
    %v3704 = vunpack.c.l.b16 %v2988
    %v3705 = vunpack.c.h.b16 %v2988
    %v3706 = vunpack.c.l.b16 %v2989
    %v3707 = vunpack.c.h.b16 %v2989
    %v3708 = vunpack.c.l.b16 %v2990
    %v3709 = vunpack.c.h.b16 %v2990
    %v3710 = vunpack.c.l.b16 %v2991
    %v3711 = vunpack.c.h.b16 %v2991
    %v3712 = vunpack.c.l.b16 %v2992
    %v3713 = vunpack.c.l.b16 %v2993
    %v3714 = vunpack.c.h.b16 %v2993
    %v3715 = vunpack.c.l.b16 %v2994
    %v3716 = vunpack.c.h.b16 %v2994
    %v3717 = vunpack.c.l.b16 %v2995
    %v3718 = vunpack.c.h.b16 %v2995
    %v3719 = vunpack.c.l.b16 %v2996
    %v3720 = vunpack.c.h.b16 %v2996
    %v3721 = vunpack.c.l.b16 %v2997
    %v3722 = vunpack.c.h.b16 %v2997
    %v3723 = vunpack.c.l.b16 %v2998
    %v3724 = vunpack.c.h.b16 %v2998
    %v3725 = vunpack.c.l.b16 %v2999
    %v3726 = vunpack.c.h.b16 %v2999
    %v3727 = vunpack.c.l.b16 %v3000
    %v3728 = vunpack.c.h.b16 %v3000
    %v3729 = vunpack.c.l.b16 %v3001
    %v3730 = vunpack.c.h.b16 %v3001
    %v3731 = vunpack.c.l.b16 %v3002
    %v3732 = vunpack.c.l.b16 %v3003
    %v3733 = vunpack.c.h.b16 %v3003
    %v3734 = vunpack.c.l.b16 %v3004
    %v3735 = vunpack.c.h.b16 %v3004
    %v3736 = vunpack.c.l.b16 %v3005
    %v3737 = vunpack.c.h.b16 %v3005
    %v3738 = vunpack.c.l.b16 %v3006
    %v3739 = vunpack.c.h.b16 %v3006
    %v3740 = vunpack.c.l.b16 %v3007
    %v3741 = vunpack.c.h.b16 %v3007
    %v3742 = vunpack.c.l.b16 %v3008
    %v3743 = vunpack.c.h.b16 %v3008
    %v3744 = vunpack.c.l.b16 %v3009
    %v3745 = vunpack.c.h.b16 %v3009
    %v3746 = vunpack.c.l.b16 %v3010
    %v3747 = vunpack.c.h.b16 %v3010
    %v3748 = vunpack.c.l.b16 %v3011
    %v3749 = vunpack.c.h.b16 %v3011
    %v3750 = vunpack.c.l.b16 %v3012
    %v3751 = vunpack.c.l.b16 %v3013
    %v3752 = vunpack.c.h.b16 %v3013
    %v3753 = vunpack.c.l.b16 %v3014
    %v3754 = vunpack.c.h.b16 %v3014
    %v3755 = vunpack.c.l.b16 %v3015
    %v3756 = vunpack.c.h.b16 %v3015
    %v3757 = vunpack.c.l.b16 %v3016
    %v3758 = vunpack.c.h.b16 %v3016
    %v3759 = vunpack.c.l.b16 %v3017
    %v3760 = vunpack.c.h.b16 %v3017
    %v3761 = vunpack.c.l.b16 %v3018
    %v3762 = vunpack.c.h.b16 %v3018
    %v3763 = vunpack.c.l.b16 %v3019
    %v3764 = vunpack.c.h.b16 %v3019
    %v3765 = vunpack.c.l.b16 %v3020
    %v3766 = vunpack.c.h.b16 %v3020
    %v3767 = vunpack.c.l.b16 %v3021
    %v3768 = vunpack.c.h.b16 %v3021
    %v3769 = vunpack.c.l.b16 %v3022
    %v3770 = vunpack.c.l.b16 %v3023
    %v3771 = vunpack.c.h.b16 %v3023
    %v3772 = vunpack.c.l.b16 %v3024
    %v3773 = vunpack.c.h.b16 %v3024
    %v3774 = vunpack.c.l.b16 %v3025
    %v3775 = vunpack.c.h.b16 %v3025
    %v3776 = vunpack.c.l.b16 %v3026
    %v3777 = vunpack.c.h.b16 %v3026
    %v3778 = vunpack.c.l.b16 %v3027
    %v3779 = vunpack.c.h.b16 %v3027
    %v3780 = vunpack.c.l.b16 %v3028
    %v3781 = vunpack.c.h.b16 %v3028
    %v3782 = vunpack.c.l.b16 %v3029
    %v3783 = vunpack.c.h.b16 %v3029
    %v3784 = vunpack.c.l.b16 %v3030
    %v3785 = vunpack.c.h.b16 %v3030
    %v3786 = vunpack.c.l.b16 %v3031
    %v3787 = vunpack.c.h.b16 %v3031
    %v3788 = vunpack.c.l.b16 %v3032
    %v3789 = vunpack.c.l.b16 %v3033
    %v3790 = vunpack.c.h.b16 %v3033
    %v3791 = vunpack.c.l.b16 %v3034
    %v3792 = vunpack.c.h.b16 %v3034
    %v3793 = vunpack.c.l.b16 %v3035
    %v3794 = vunpack.c.h.b16 %v3035
    %v3795 = vunpack.c.l.b16 %v3036
    %v3796 = vunpack.c.h.b16 %v3036
    %v3797 = vunpack.c.l.b16 %v3037
    %v3798 = vunpack.c.h.b16 %v3037
    %v3799 = vunpack.c.l.b16 %v3038
    %v3800 = vunpack.c.h.b16 %v3038
    %v3801 = vunpack.c.l.b16 %v3039
    %v3802 = vunpack.c.h.b16 %v3039
    %v3803 = vunpack.c.l.b16 %v3040
    %v3804 = vunpack.c.h.b16 %v3040
    %v3805 = vunpack.c.l.b16 %v3041
    %v3806 = vunpack.c.h.b16 %v3041
    %v3807 = vunpack.c.l.b16 %v3042
    %v3808 = vunpack.c.l.b16 %v3043
    %v3809 = vunpack.c.h.b16 %v3043
    %v3810 = vunpack.c.l.b16 %v3044
    %v3811 = vunpack.c.h.b16 %v3044
    %v3812 = vunpack.c.l.b16 %v3045
    %v3813 = vunpack.c.h.b16 %v3045
    %v3814 = vunpack.c.l.b16 %v3046
    %v3815 = vunpack.c.h.b16 %v3046
    %v3816 = vunpack.c.l.b16 %v3047
    %v3817 = vunpack.c.h.b16 %v3047
    %v3818 = vunpack.c.l.b16 %v3048
    %v3819 = vunpack.c.h.b16 %v3048
    %v3820 = vunpack.c.l.b16 %v3049
    %v3821 = vunpack.c.h.b16 %v3049
    %v3822 = vunpack.c.l.b16 %v3050
    %v3823 = vunpack.c.h.b16 %v3050
    %v3824 = vunpack.c.l.b16 %v3051
    %v3825 = vunpack.c.h.b16 %v3051
    %v3826 = vunpack.c.l.b16 %v3052
    %v3827 = vunpack.c.l.b16 %v3053
    %v3828 = vunpack.c.h.b16 %v3053
    %v3829 = vunpack.c.l.b16 %v3054
    %v3830 = vunpack.c.h.b16 %v3054
    %v3831 = vunpack.c.l.b16 %v3055
    %v3832 = vunpack.c.h.b16 %v3055
    %v3833 = vunpack.c.l.b16 %v3056
    %v3834 = vunpack.c.h.b16 %v3056
    %v3835 = vunpack.c.l.b16 %v3057
    %v3836 = vunpack.c.h.b16 %v3057
    %v3837 = vunpack.c.l.b16 %v3058
    %v3838 = vunpack.c.h.b16 %v3058
    %v3839 = vunpack.c.l.b16 %v3059
    %v3840 = vunpack.c.h.b16 %v3059
    %v3841 = vunpack.c.l.b16 %v3060
    %v3842 = vunpack.c.h.b16 %v3060
    %v3843 = vunpack.c.l.b16 %v3061
    %v3844 = vunpack.c.h.b16 %v3061
    %v3845 = vunpack.c.l.b16 %v3062
    %v3846 = vunpack.c.l.b16 %v3063
    %v3847 = vunpack.c.h.b16 %v3063
    %v3848 = vunpack.c.l.b16 %v3064
    %v3849 = vunpack.c.h.b16 %v3064
    %v3850 = vunpack.c.l.b16 %v3065
    %v3851 = vunpack.c.h.b16 %v3065
    %v3852 = vunpack.c.l.b16 %v3066
    %v3853 = vunpack.c.h.b16 %v3066
    %v3854 = vunpack.c.l.b16 %v3067
    %v3855 = vunpack.c.h.b16 %v3067
    %v3856 = vunpack.c.l.b16 %v3068
    %v3857 = vunpack.c.h.b16 %v3068
    %v3858 = vunpack.c.l.b16 %v3069
    %v3859 = vunpack.c.h.b16 %v3069
    %v3860 = vunpack.c.l.b16 %v3070
    %v3861 = vunpack.c.h.b16 %v3070
    %v3862 = vunpack.c.l.b16 %v3071
    %v3863 = vunpack.c.h.b16 %v3071
    %v3864 = vunpack.c.l.b16 %v3072
    %v3865 = vunpack.c.l.b16 %v3073
    %v3866 = vunpack.c.h.b16 %v3073
    %v3867 = vunpack.c.l.b16 %v3074
    %v3868 = vunpack.c.h.b16 %v3074
    %v3869 = vunpack.c.l.b16 %v3075
    %v3870 = vunpack.c.h.b16 %v3075
    %v3871 = vunpack.c.l.b16 %v3076
    %v3872 = vunpack.c.h.b16 %v3076
    %v3873 = vunpack.c.l.b16 %v3077
    %v3874 = vunpack.c.h.b16 %v3077
    %v3875 = vunpack.c.l.b16 %v3078
    %v3876 = vunpack.c.h.b16 %v3078
    %v3877 = vunpack.c.l.b16 %v3079
    %v3878 = vunpack.c.h.b16 %v3079
    %v3879 = vunpack.c.l.b16 %v3080
    %v3880 = vunpack.c.h.b16 %v3080
    %v3881 = vunpack.c.l.b16 %v3081
    %v3882 = vunpack.c.h.b16 %v3081
    %v3883 = vunpack.c.l.b16 %v3082
    %v3884 = vunpack.c.l.b16 %v3083
    %v3885 = vunpack.c.h.b16 %v3083
    %v3886 = vunpack.c.l.b16 %v3084
    %v3887 = vunpack.c.h.b16 %v3084
    %v3888 = vunpack.c.l.b16 %v3085
    %v3889 = vunpack.c.h.b16 %v3085
    %v3890 = vunpack.c.l.b16 %v3086
    %v3891 = vunpack.c.h.b16 %v3086
    %v3892 = vunpack.c.l.b16 %v3087
    %v3893 = vunpack.c.h.b16 %v3087
    %v3894 = vunpack.c.l.b16 %v3088
    %v3895 = vunpack.c.h.b16 %v3088
    %v3896 = vunpack.c.l.b16 %v3089
    %v3897 = vunpack.c.h.b16 %v3089
    %v3898 = vunpack.c.l.b16 %v3090
    %v3899 = vunpack.c.h.b16 %v3090
    %v3900 = vunpack.c.l.b16 %v3091
    %v3901 = vunpack.c.h.b16 %v3091
    %v3902 = vunpack.c.l.b16 %v3092
    %v3903 = vunpack.c.l.b16 %v3093
    %v3904 = vunpack.c.h.b16 %v3093
    %v3905 = vunpack.c.l.b16 %v3094
    %v3906 = vunpack.c.h.b16 %v3094
    %v3907 = vunpack.c.l.b16 %v3095
    %v3908 = vunpack.c.h.b16 %v3095
    %v3909 = vunpack.c.l.b16 %v3096
    %v3910 = vunpack.c.h.b16 %v3096
    %v3911 = vunpack.c.l.b16 %v3097
    %v3912 = vunpack.c.h.b16 %v3097
    %v3913 = vunpack.c.l.b16 %v3098
    %v3914 = vunpack.c.h.b16 %v3098
    %v3915 = vunpack.c.l.b16 %v3099
    %v3916 = vunpack.c.h.b16 %v3099
    %v3917 = vunpack.c.l.b16 %v3100
    %v3918 = vunpack.c.h.b16 %v3100
    %v3919 = vunpack.c.l.b16 %v3101
    %v3920 = vunpack.c.h.b16 %v3101
    %v3921 = vunpack.c.l.b16 %v3102
    %v3922 = vunpack.c.l.b16 %v3103
    %v3923 = vunpack.c.h.b16 %v3103
    %v3924 = vunpack.c.l.b16 %v3104
    %v3925 = vunpack.c.h.b16 %v3104
    %v3926 = vunpack.c.l.b16 %v3105
    %v3927 = vunpack.c.h.b16 %v3105
    %v3928 = vunpack.c.l.b16 %v3106
    %v3929 = vunpack.c.h.b16 %v3106
    %v3930 = vunpack.c.l.b16 %v3107
    %v3931 = vunpack.c.h.b16 %v3107
    %v3932 = vunpack.c.l.b16 %v3108
    %v3933 = vunpack.c.h.b16 %v3108
    %v3934 = vunpack.c.l.b16 %v3109
    %v3935 = vunpack.c.h.b16 %v3109
    %v3936 = vunpack.c.l.b16 %v3110
    %v3937 = vunpack.c.h.b16 %v3110
    %v3938 = vunpack.c.l.b16 %v3111
    %v3939 = vunpack.c.h.b16 %v3111
    %v3940 = vunpack.c.l.b16 %v3112
    %v3941 = vunpack.c.l.b16 %v3113
    %v3942 = vunpack.c.h.b16 %v3113
    %v3943 = vunpack.c.l.b16 %v3114
    %v3944 = vunpack.c.h.b16 %v3114
    %v3945 = vunpack.c.l.b16 %v3115
    %v3946 = vunpack.c.h.b16 %v3115
    %v3947 = vunpack.c.l.b16 %v3116
    %v3948 = vunpack.c.h.b16 %v3116
    %v3949 = vunpack.c.l.b16 %v3117
    %v3950 = vunpack.c.h.b16 %v3117
    %v3951 = vunpack.c.l.b16 %v3118
    %v3952 = vunpack.c.h.b16 %v3118
    %v3953 = vunpack.c.l.b16 %v3119
    %v3954 = vunpack.c.h.b16 %v3119
    %v3955 = vunpack.c.l.b16 %v3120
    %v3956 = vunpack.c.h.b16 %v3120
    %v3957 = vunpack.c.l.b16 %v3121
    %v3958 = vunpack.c.h.b16 %v3121
    %v3959 = vunpack.c.l.b16 %v3122
    %v3960 = vunpack.c.l.b16 %v3123
    %v3961 = vunpack.c.h.b16 %v3123
    %v3962 = vunpack.c.l.b16 %v3124
    %v3963 = vunpack.c.h.b16 %v3124
    %v3964 = vunpack.c.l.b16 %v3125
    %v3965 = vunpack.c.h.b16 %v3125
    %v3966 = vunpack.c.l.b16 %v3126
    %v3967 = vunpack.c.h.b16 %v3126
    %v3968 = vunpack.c.l.b16 %v3127
    %v3969 = vunpack.c.h.b16 %v3127
    %v3970 = vunpack.c.l.b16 %v3128
    %v3971 = vunpack.c.h.b16 %v3128
    %v3972 = vunpack.c.l.b16 %v3129
    %v3973 = vunpack.c.h.b16 %v3129
    %v3974 = vunpack.c.l.b16 %v3130
    %v3975 = vunpack.c.h.b16 %v3130
    %v3976 = vunpack.c.l.b16 %v3131
    %v3977 = vunpack.c.h.b16 %v3131
    %v3978 = vunpack.c.l.b16 %v3132
    %v3979 = vunpack.c.l.b16 %v3133
    %v3980 = vunpack.c.h.b16 %v3133
    %v3981 = vunpack.c.l.b16 %v3134
    %v3982 = vunpack.c.h.b16 %v3134
    %v3983 = vunpack.c.l.b16 %v3135
    %v3984 = vunpack.c.h.b16 %v3135
    %v3985 = vunpack.c.l.b16 %v3136
    %v3986 = vunpack.c.h.b16 %v3136
    %v3987 = vunpack.c.l.b16 %v3137
    %v3988 = vunpack.c.h.b16 %v3137
    %v3989 = vunpack.c.l.b16 %v3138
    %v3990 = vunpack.c.h.b16 %v3138
    %v3991 = vunpack.c.l.b16 %v3139
    %v3992 = vunpack.c.h.b16 %v3139
    %v3993 = vunpack.c.l.b16 %v3140
    %v3994 = vunpack.c.h.b16 %v3140
    %v3995 = vunpack.c.l.b16 %v3141
    %v3996 = vunpack.c.h.b16 %v3141
    %v3997 = vunpack.c.l.b16 %v3142
    %v3998 = vunpack.c.l.b16 %v3143
    %v3999 = vunpack.c.h.b16 %v3143
    %v4000 = vunpack.c.l.b16 %v3144
    %v4001 = vunpack.c.h.b16 %v3144
    %v4002 = vunpack.c.l.b16 %v3145
    %v4003 = vunpack.c.h.b16 %v3145
    %v4004 = vunpack.c.l.b16 %v3146
    %v4005 = vunpack.c.h.b16 %v3146
    %v4006 = vunpack.c.l.b16 %v3147
    %v4007 = vunpack.c.h.b16 %v3147
    %v4008 = vunpack.c.l.b16 %v3148
    %v4009 = vunpack.c.h.b16 %v3148
    %v4010 = vunpack.c.l.b16 %v3149
    %v4011 = vunpack.c.h.b16 %v3149
    %v4012 = vunpack.c.l.b16 %v3150
    %v4013 = vunpack.c.h.b16 %v3150
    %v4014 = vunpack.c.l.b16 %v3151
    %v4015 = vunpack.c.h.b16 %v3151
    %v4016 = vunpack.c.l.b16 %v3152
    %v4017 = vunpack.c.l.b16 %v3153
    %v4018 = vunpack.c.h.b16 %v3153
    %v4019 = vunpack.c.l.b16 %v3154
    %v4020 = vunpack.c.h.b16 %v3154
    %v4021 = vunpack.c.l.b16 %v3155
    %v4022 = vunpack.c.h.b16 %v3155
    %v4023 = vunpack.c.l.b16 %v3156
    %v4024 = vunpack.c.h.b16 %v3156
    %v4025 = vunpack.c.l.b16 %v3157
    %v4026 = vunpack.c.h.b16 %v3157
    %v4027 = vunpack.c.l.b16 %v3158
    %v4028 = vunpack.c.h.b16 %v3158
    %v4029 = vunpack.c.l.b16 %v3159
    %v4030 = vunpack.c.h.b16 %v3159
    %v4031 = vunpack.c.l.b16 %v3160
    %v4032 = vunpack.c.h.b16 %v3160
    %v4033 = vunpack.c.l.b16 %v3161
    %v4034 = vunpack.c.h.b16 %v3161
    %v4035 = vunpack.c.l.b16 %v3162
    %v4036 = vunpack.c.l.b16 %v3163
    %v4037 = vunpack.c.h.b16 %v3163
    %v4038 = vunpack.c.l.b16 %v3164
    %v4039 = vunpack.c.h.b16 %v3164
    %v4040 = vunpack.c.l.b16 %v3165
    %v4041 = vunpack.c.h.b16 %v3165
    %v4042 = vunpack.c.l.b16 %v3166
    %v4043 = vunpack.c.h.b16 %v3166
    %v4044 = vunpack.c.l.b16 %v3167
    %v4045 = vunpack.c.h.b16 %v3167
    %v4046 = vunpack.c.l.b16 %v3168
    %v4047 = vunpack.c.h.b16 %v3168
    %v4048 = vunpack.c.l.b16 %v3169
    %v4049 = vunpack.c.h.b16 %v3169
    %v4050 = vunpack.c.l.b16 %v3170
    %v4051 = vunpack.c.h.b16 %v3170
    %v4052 = vunpack.c.l.b16 %v3171
    %v4053 = vunpack.c.h.b16 %v3171
    %v4054 = vunpack.c.l.b16 %v3172
    %v4055 = vunpack.c.l.b16 %v3173
    %v4056 = vunpack.c.h.b16 %v3173
    %v4057 = vunpack.c.l.b16 %v3174
    %v4058 = vunpack.c.h.b16 %v3174
    %v4059 = vunpack.c.l.b16 %v3175
    %v4060 = vunpack.c.h.b16 %v3175
    %v4061 = vunpack.c.l.b16 %v3176
    %v4062 = vunpack.c.h.b16 %v3176
    %v4063 = vunpack.c.l.b16 %v3177
    %v4064 = vunpack.c.h.b16 %v3177
    %v4065 = vunpack.c.l.b16 %v3178
    %v4066 = vunpack.c.h.b16 %v3178
    %v4067 = vunpack.c.l.b16 %v3179
    %v4068 = vunpack.c.h.b16 %v3179
    %v4069 = vunpack.c.l.b16 %v3180
    %v4070 = vunpack.c.h.b16 %v3180
    %v4071 = vunpack.c.l.b16 %v3181
    %v4072 = vunpack.c.h.b16 %v3181
    %v4073 = vunpack.c.l.b16 %v3182
    %v4074 = vunpack.c.l.b16 %v3183
    %v4075 = vunpack.c.h.b16 %v3183
    %v4076 = vunpack.c.l.b16 %v3184
    %v4077 = vunpack.c.h.b16 %v3184
    %v4078 = vunpack.c.l.b16 %v3185
    %v4079 = vunpack.c.h.b16 %v3185
    %v4080 = vunpack.c.l.b16 %v3186
    %v4081 = vunpack.c.h.b16 %v3186
    %v4082 = vunpack.c.l.b16 %v3187
    %v4083 = vunpack.c.h.b16 %v3187
    %v4084 = vunpack.c.l.b16 %v3188
    %v4085 = vunpack.c.h.b16 %v3188
    %v4086 = vunpack.c.l.b16 %v3189
    %v4087 = vunpack.c.h.b16 %v3189
    %v4088 = vunpack.c.l.b16 %v3190
    %v4089 = vunpack.c.h.b16 %v3190
    %v4090 = vunpack.c.l.b16 %v3191
    %v4091 = vunpack.c.h.b16 %v3191
    %v4092 = vunpack.c.l.b16 %v3192
    %v4093 = vunpack.c.l.b16 %v3193
    %v4094 = vunpack.c.h.b16 %v3193
    %v4095 = vunpack.c.l.b16 %v3194
    %v4096 = vunpack.c.h.b16 %v3194
    %v4097 = vunpack.c.l.b16 %v3195
    %v4098 = vunpack.c.h.b16 %v3195
    %v4099 = vunpack.c.l.b16 %v3196
    %v4100 = vunpack.c.h.b16 %v3196
    %v4101 = vunpack.c.l.b16 %v3197
    %v4102 = vunpack.c.h.b16 %v3197
    %v4103 = vunpack.c.l.b16 %v3198
    %v4104 = vunpack.c.h.b16 %v3198
    %v4105 = vunpack.c.l.b16 %v3199
    %v4106 = vunpack.c.h.b16 %v3199
    %v4107 = vunpack.c.l.b16 %v3200
    %v4108 = vunpack.c.h.b16 %v3200
    %v4109 = vunpack.c.l.b16 %v3201
    %v4110 = vunpack.c.h.b16 %v3201
    %v4111 = vunpack.c.l.b16 %v3202
    %v4112 = vunpack.c.l.b16 %v3203
    %v4113 = vunpack.c.h.b16 %v3203
    %v4114 = vunpack.c.l.b16 %v3204
    %v4115 = vunpack.c.h.b16 %v3204
    %v4116 = vunpack.c.l.b16 %v3205
    %v4117 = vunpack.c.h.b16 %v3205
    %v4118 = vunpack.c.l.b16 %v3206
    %v4119 = vunpack.c.h.b16 %v3206
    %v4120 = vunpack.c.l.b16 %v3207
    %v4121 = vunpack.c.h.b16 %v3207
    %v4122 = vunpack.c.l.b16 %v3208
    %v4123 = vunpack.c.h.b16 %v3208
    %v4124 = vunpack.c.l.b16 %v3209
    %v4125 = vunpack.c.h.b16 %v3209
    %v4126 = vunpack.c.l.b16 %v3210
    %v4127 = vunpack.c.h.b16 %v3210
    %v4128 = vunpack.c.l.b16 %v3211
    %v4129 = vunpack.c.h.b16 %v3211
    %v4130 = vunpack.c.l.b16 %v3212
    %v4131 = vunpack.c.l.b16 %v3213
    %v4132 = vunpack.c.h.b16 %v3213
    %v4133 = vunpack.c.l.b16 %v3214
    %v4134 = vunpack.c.h.b16 %v3214
    %v4135 = vunpack.c.l.b16 %v3215
    %v4136 = vunpack.c.h.b16 %v3215
    %v4137 = vunpack.c.l.b16 %v3216
    %v4138 = vunpack.c.h.b16 %v3216
    %v4139 = vunpack.c.l.b16 %v3217
    %v4140 = vunpack.c.h.b16 %v3217
    %v4141 = vunpack.c.l.b16 %v3218
    %v4142 = vunpack.c.h.b16 %v3218
    %v4143 = vunpack.c.l.b16 %v3219
    %v4144 = vunpack.c.h.b16 %v3219
    %v4145 = vunpack.c.l.b16 %v3220
    %v4146 = vunpack.c.h.b16 %v3220
    %v4147 = vunpack.c.l.b16 %v3221
    %v4148 = vunpack.c.h.b16 %v3221
    %v4149 = vunpack.c.l.b16 %v3222
    %v4150 = vunpack.c.l.b16 %v3223
    %v4151 = vunpack.c.h.b16 %v3223
    %v4152 = vunpack.c.l.b16 %v3224
    %v4153 = vunpack.c.h.b16 %v3224
    %v4154 = vunpack.c.l.b16 %v3225
    %v4155 = vunpack.c.h.b16 %v3225
    %v4156 = vunpack.c.l.b16 %v3226
    %v4157 = vunpack.c.h.b16 %v3226
    %v4158 = vunpack.c.l.b16 %v3227
    %v4159 = vunpack.c.h.b16 %v3227
    %v4160 = vunpack.c.l.b16 %v3228
    %v4161 = vunpack.c.h.b16 %v3228
    %v4162 = vunpack.c.l.b16 %v3229
    %v4163 = vunpack.c.h.b16 %v3229
    %v4164 = vunpack.c.l.b16 %v3230
    %v4165 = vunpack.c.h.b16 %v3230
    %v4166 = vunpack.c.l.b16 %v3231
    %v4167 = vunpack.c.h.b16 %v3231
    %v4168 = vunpack.c.l.b16 %v3232
    %v4169 = vunpack.c.l.b16 %v3233
    %v4170 = vunpack.c.h.b16 %v3233
    %v4171 = vunpack.c.l.b16 %v3234
    %v4172 = vunpack.c.h.b16 %v3234
    %v4173 = vunpack.c.l.b16 %v3235
    %v4174 = vunpack.c.h.b16 %v3235
    %v4175 = vunpack.c.l.b16 %v3236
    %v4176 = vunpack.c.h.b16 %v3236
    %v4177 = vunpack.c.l.b16 %v3237
    %v4178 = vunpack.c.h.b16 %v3237
    %v4179 = vunpack.c.l.b16 %v3238
    %v4180 = vunpack.c.h.b16 %v3238
    %v4181 = vunpack.c.l.b16 %v3239
    %v4182 = vunpack.c.h.b16 %v3239
    %v4183 = vunpack.c.l.b16 %v3240
    %v4184 = vunpack.c.h.b16 %v3240
    %v4185 = vunpack.c.l.b16 %v3241
    %v4186 = vunpack.c.h.b16 %v3241
    %v4187 = vunpack.c.l.b16 %v3242
    %v4188 = vunpack.c.l.b16 %v3243
    %v4189 = vunpack.c.h.b16 %v3243
    %v4190 = vunpack.c.l.b16 %v3244
    %v4191 = vunpack.c.h.b16 %v3244
    %v4192 = vunpack.c.l.b16 %v3245
    %v4193 = vunpack.c.h.b16 %v3245
    %v4194 = vunpack.c.l.b16 %v3246
    %v4195 = vunpack.c.h.b16 %v3246
    %v4196 = vunpack.c.l.b16 %v3247
    %v4197 = vunpack.c.h.b16 %v3247
    %v4198 = vunpack.c.l.b16 %v3248
    %v4199 = vunpack.c.h.b16 %v3248
    %v4200 = vunpack.c.l.b16 %v3249
    %v4201 = vunpack.c.h.b16 %v3249
    %v4202 = vunpack.c.l.b16 %v3250
    %v4203 = vunpack.c.h.b16 %v3250
    %v4204 = vunpack.c.l.b16 %v3251
    %v4205 = vunpack.c.h.b16 %v3251
    %v4206 = vunpack.c.l.b16 %v3252
    %v4207 = vunpack.c.l.b16 %v3253
    %v4208 = vunpack.c.h.b16 %v3253
    %v4209 = vunpack.c.l.b16 %v3254
    %v4210 = vunpack.c.h.b16 %v3254
    %v4211 = vunpack.c.l.b16 %v3255
    %v4212 = vunpack.c.h.b16 %v3255
    %v4213 = vunpack.c.l.b16 %v3256
    %v4214 = vunpack.c.h.b16 %v3256
    %v4215 = vunpack.c.l.b16 %v3257
    %v4216 = vunpack.c.h.b16 %v3257
    %v4217 = vunpack.c.l.b16 %v3258
    %v4218 = vunpack.c.h.b16 %v3258
    %v4219 = vunpack.c.l.b16 %v3259
    %v4220 = vunpack.c.h.b16 %v3259
    %v4221 = vunpack.c.l.b16 %v3260
    %v4222 = vunpack.c.h.b16 %v3260
    %v4223 = vunpack.c.l.b16 %v3261
    %v4224 = vunpack.c.h.b16 %v3261
    %v4225 = vunpack.c.l.b16 %v3262
    %v4226 = vunpack.c.l.b16 %v3263
    %v4227 = vunpack.c.h.b16 %v3263
    %v4228 = vunpack.c.l.b16 %v3264
    %v4229 = vunpack.c.h.b16 %v3264
    %v4230 = vunpack.c.l.b16 %v3265
    %v4231 = vunpack.c.h.b16 %v3265
    %v4232 = vunpack.c.l.b16 %v3266
    %v4233 = vunpack.c.h.b16 %v3266
    %v4234 = vunpack.c.l.b16 %v3267
    %v4235 = vunpack.c.h.b16 %v3267
    %v4236 = vunpack.c.l.b16 %v3268
    %v4237 = vunpack.c.h.b16 %v3268
    %v4238 = vunpack.c.l.b16 %v3269
    %v4239 = vunpack.c.h.b16 %v3269
    %v4240 = vunpack.c.l.b16 %v3270
    %v4241 = vunpack.c.h.b16 %v3270
    %v4242 = vunpack.c.l.b16 %v3271
    %v4243 = vunpack.c.h.b16 %v3271
    %v4244 = vunpack.c.l.b16 %v3272
    %v4245 = vpack.c.b16 %v3656, %v3637
    %v4246 = vpack.c.b16 %v3657, %v3638
    %v4247 = vpack.c.b16 %v3658, %v3639
    %v4248 = vpack.c.b16 %v3659, %v3640
    %v4249 = vpack.c.b16 %v3660, %v3641
    %v4250 = vpack.c.b16 %v3661, %v3642
    %v4251 = vpack.c.b16 %v3662, %v3643
    %v4252 = vpack.c.b16 %v3663, %v3644
    %v4253 = vpack.c.b16 %v3664, %v3645
    %v4254 = vpack.c.b16 %v3665, %v3646
    %v4255 = vpack.c.b16 %v3666, %v3647
    %v4256 = vpack.c.b16 %v3667, %v3648
    %v4257 = vpack.c.b16 %v3668, %v3649
    %v4258 = vpack.c.b16 %v3669, %v3650
    %v4259 = vpack.c.b16 %v3670, %v3651
    %v4260 = vpack.c.b16 %v3671, %v3652
    %v4261 = vpack.c.b16 %v3672, %v3653
    %v4262 = vpack.c.b16 %v3673, %v3654
    %v4263 = vpack.c.b16 %v3674, %v3655
    %v4264 = vpack.c.b16 %v3694, %v3675
    %v4265 = vpack.c.b16 %v3695, %v3676
    %v4266 = vpack.c.b16 %v3696, %v3677
    %v4267 = vpack.c.b16 %v3697, %v3678
    %v4268 = vpack.c.b16 %v3698, %v3679
    %v4269 = vpack.c.b16 %v3699, %v3680
    %v4270 = vpack.c.b16 %v3700, %v3681
    %v4271 = vpack.c.b16 %v3701, %v3682
    %v4272 = vpack.c.b16 %v3702, %v3683
    %v4273 = vpack.c.b16 %v3703, %v3684
    %v4274 = vpack.c.b16 %v3704, %v3685
    %v4275 = vpack.c.b16 %v3705, %v3686
    %v4276 = vpack.c.b16 %v3706, %v3687
    %v4277 = vpack.c.b16 %v3707, %v3688
    %v4278 = vpack.c.b16 %v3708, %v3689
    %v4279 = vpack.c.b16 %v3709, %v3690
    %v4280 = vpack.c.b16 %v3710, %v3691
    %v4281 = vpack.c.b16 %v3711, %v3692
    %v4282 = vpack.c.b16 %v3712, %v3693
    %v4283 = vpack.c.b16 %v3732, %v3713
    %v4284 = vpack.c.b16 %v3733, %v3714
    %v4285 = vpack.c.b16 %v3734, %v3715
    %v4286 = vpack.c.b16 %v3735, %v3716
    %v4287 = vpack.c.b16 %v3736, %v3717
    %v4288 = vpack.c.b16 %v3737, %v3718
    %v4289 = vpack.c.b16 %v3738, %v3719
    %v4290 = vpack.c.b16 %v3739, %v3720
    %v4291 = vpack.c.b16 %v3740, %v3721
    %v4292 = vpack.c.b16 %v3741, %v3722
    %v4293 = vpack.c.b16 %v3742, %v3723
    %v4294 = vpack.c.b16 %v3743, %v3724
    %v4295 = vpack.c.b16 %v3744, %v3725
    %v4296 = vpack.c.b16 %v3745, %v3726
    %v4297 = vpack.c.b16 %v3746, %v3727
    %v4298 = vpack.c.b16 %v3747, %v3728
    %v4299 = vpack.c.b16 %v3748, %v3729
    %v4300 = vpack.c.b16 %v3749, %v3730
    %v4301 = vpack.c.b16 %v3750, %v3731
    %v4302 = vpack.c.b16 %v3770, %v3751
    %v4303 = vpack.c.b16 %v3771, %v3752
    %v4304 = vpack.c.b16 %v3772, %v3753
    %v4305 = vpack.c.b16 %v3773, %v3754
    %v4306 = vpack.c.b16 %v3774, %v3755
    %v4307 = vpack.c.b16 %v3775, %v3756
    %v4308 = vpack.c.b16 %v3776, %v3757
    %v4309 = vpack.c.b16 %v3777, %v3758
    %v4310 = vpack.c.b16 %v3778, %v3759
    %v4311 = vpack.c.b16 %v3779, %v3760
    %v4312 = vpack.c.b16 %v3780, %v3761
    %v4313 = vpack.c.b16 %v3781, %v3762
    %v4314 = vpack.c.b16 %v3782, %v3763
    %v4315 = vpack.c.b16 %v3783, %v3764
    %v4316 = vpack.c.b16 %v3784, %v3765
    %v4317 = vpack.c.b16 %v3785, %v3766
    %v4318 = vpack.c.b16 %v3786, %v3767
    %v4319 = vpack.c.b16 %v3787, %v3768
    %v4320 = vpack.c.b16 %v3788, %v3769
    %v4321 = vpack.c.b16 %v3808, %v3789
    %v4322 = vpack.c.b16 %v3809, %v3790
    %v4323 = vpack.c.b16 %v3810, %v3791
    %v4324 = vpack.c.b16 %v3811, %v3792
    %v4325 = vpack.c.b16 %v3812, %v3793
    %v4326 = vpack.c.b16 %v3813, %v3794
    %v4327 = vpack.c.b16 %v3814, %v3795
    %v4328 = vpack.c.b16 %v3815, %v3796
    %v4329 = vpack.c.b16 %v3816, %v3797
    %v4330 = vpack.c.b16 %v3817, %v3798
    %v4331 = vpack.c.b16 %v3818, %v3799
    %v4332 = vpack.c.b16 %v3819, %v3800
    %v4333 = vpack.c.b16 %v3820, %v3801
    %v4334 = vpack.c.b16 %v3821, %v3802
    %v4335 = vpack.c.b16 %v3822, %v3803
    %v4336 = vpack.c.b16 %v3823, %v3804
    %v4337 = vpack.c.b16 %v3824, %v3805
    %v4338 = vpack.c.b16 %v3825, %v3806
    %v4339 = vpack.c.b16 %v3826, %v3807
    %v4340 = vpack.c.b16 %v3846, %v3827
    %v4341 = vpack.c.b16 %v3847, %v3828
    %v4342 = vpack.c.b16 %v3848, %v3829
    %v4343 = vpack.c.b16 %v3849, %v3830
    %v4344 = vpack.c.b16 %v3850, %v3831
    %v4345 = vpack.c.b16 %v3851, %v3832
    %v4346 = vpack.c.b16 %v3852, %v3833
    %v4347 = vpack.c.b16 %v3853, %v3834
    %v4348 = vpack.c.b16 %v3854, %v3835
    %v4349 = vpack.c.b16 %v3855, %v3836
    %v4350 = vpack.c.b16 %v3856, %v3837
    %v4351 = vpack.c.b16 %v3857, %v3838
    %v4352 = vpack.c.b16 %v3858, %v3839
    %v4353 = vpack.c.b16 %v3859, %v3840
    %v4354 = vpack.c.b16 %v3860, %v3841
    %v4355 = vpack.c.b16 %v3861, %v3842
    %v4356 = vpack.c.b16 %v3862, %v3843
    %v4357 = vpack.c.b16 %v3863, %v3844
    %v4358 = vpack.c.b16 %v3864, %v3845
    %v4359 = vpack.c.b16 %v3884, %v3865
    %v4360 = vpack.c.b16 %v3885, %v3866
    %v4361 = vpack.c.b16 %v3886, %v3867
    %v4362 = vpack.c.b16 %v3887, %v3868
    %v4363 = vpack.c.b16 %v3888, %v3869
    %v4364 = vpack.c.b16 %v3889, %v3870
    %v4365 = vpack.c.b16 %v3890, %v3871
    %v4366 = vpack.c.b16 %v3891, %v3872
    %v4367 = vpack.c.b16 %v3892, %v3873
    %v4368 = vpack.c.b16 %v3893, %v3874
    %v4369 = vpack.c.b16 %v3894, %v3875
    %v4370 = vpack.c.b16 %v3895, %v3876
    %v4371 = vpack.c.b16 %v3896, %v3877
    %v4372 = vpack.c.b16 %v3897, %v3878
    %v4373 = vpack.c.b16 %v3898, %v3879
    %v4374 = vpack.c.b16 %v3899, %v3880
    %v4375 = vpack.c.b16 %v3900, %v3881
    %v4376 = vpack.c.b16 %v3901, %v3882
    %v4377 = vpack.c.b16 %v3902, %v3883
    %v4378 = vpack.c.b16 %v3922, %v3903
    %v4379 = vpack.c.b16 %v3923, %v3904
    %v4380 = vpack.c.b16 %v3924, %v3905
    %v4381 = vpack.c.b16 %v3925, %v3906
    %v4382 = vpack.c.b16 %v3926, %v3907
    %v4383 = vpack.c.b16 %v3927, %v3908
    %v4384 = vpack.c.b16 %v3928, %v3909
    %v4385 = vpack.c.b16 %v3929, %v3910
    %v4386 = vpack.c.b16 %v3930, %v3911
    %v4387 = vpack.c.b16 %v3931, %v3912
    %v4388 = vpack.c.b16 %v3932, %v3913
    %v4389 = vpack.c.b16 %v3933, %v3914
    %v4390 = vpack.c.b16 %v3934, %v3915
    %v4391 = vpack.c.b16 %v3935, %v3916
    %v4392 = vpack.c.b16 %v3936, %v3917
    %v4393 = vpack.c.b16 %v3937, %v3918
    %v4394 = vpack.c.b16 %v3938, %v3919
    %v4395 = vpack.c.b16 %v3939, %v3920
    %v4396 = vpack.c.b16 %v3940, %v3921
    %v4397 = vpack.c.b16 %v3960, %v3941
    %v4398 = vpack.c.b16 %v3961, %v3942
    %v4399 = vpack.c.b16 %v3962, %v3943
    %v4400 = vpack.c.b16 %v3963, %v3944
    %v4401 = vpack.c.b16 %v3964, %v3945
    %v4402 = vpack.c.b16 %v3965, %v3946
    %v4403 = vpack.c.b16 %v3966, %v3947
    %v4404 = vpack.c.b16 %v3967, %v3948
    %v4405 = vpack.c.b16 %v3968, %v3949
    %v4406 = vpack.c.b16 %v3969, %v3950
    %v4407 = vpack.c.b16 %v3970, %v3951
    %v4408 = vpack.c.b16 %v3971, %v3952
    %v4409 = vpack.c.b16 %v3972, %v3953
    %v4410 = vpack.c.b16 %v3973, %v3954
    %v4411 = vpack.c.b16 %v3974, %v3955
    %v4412 = vpack.c.b16 %v3975, %v3956
    %v4413 = vpack.c.b16 %v3976, %v3957
    %v4414 = vpack.c.b16 %v3977, %v3958
    %v4415 = vpack.c.b16 %v3978, %v3959
    %v4416 = vpack.c.b16 %v3998, %v3979
    %v4417 = vpack.c.b16 %v3999, %v3980
    %v4418 = vpack.c.b16 %v4000, %v3981
    %v4419 = vpack.c.b16 %v4001, %v3982
    %v4420 = vpack.c.b16 %v4002, %v3983
    %v4421 = vpack.c.b16 %v4003, %v3984
    %v4422 = vpack.c.b16 %v4004, %v3985
    %v4423 = vpack.c.b16 %v4005, %v3986
    %v4424 = vpack.c.b16 %v4006, %v3987
    %v4425 = vpack.c.b16 %v4007, %v3988
    %v4426 = vpack.c.b16 %v4008, %v3989
    %v4427 = vpack.c.b16 %v4009, %v3990
    %v4428 = vpack.c.b16 %v4010, %v3991
    %v4429 = vpack.c.b16 %v4011, %v3992
    %v4430 = vpack.c.b16 %v4012, %v3993
    %v4431 = vpack.c.b16 %v4013, %v3994
    %v4432 = vpack.c.b16 %v4014, %v3995
    %v4433 = vpack.c.b16 %v4015, %v3996
    %v4434 = vpack.c.b16 %v4016, %v3997
    %v4435 = vpack.c.b16 %v4036, %v4017
    %v4436 = vpack.c.b16 %v4037, %v4018
    %v4437 = vpack.c.b16 %v4038, %v4019
    %v4438 = vpack.c.b16 %v4039, %v4020
    %v4439 = vpack.c.b16 %v4040, %v4021
    %v4440 = vpack.c.b16 %v4041, %v4022
    %v4441 = vpack.c.b16 %v4042, %v4023
    %v4442 = vpack.c.b16 %v4043, %v4024
    %v4443 = vpack.c.b16 %v4044, %v4025
    %v4444 = vpack.c.b16 %v4045, %v4026
    %v4445 = vpack.c.b16 %v4046, %v4027
    %v4446 = vpack.c.b16 %v4047, %v4028
    %v4447 = vpack.c.b16 %v4048, %v4029
    %v4448 = vpack.c.b16 %v4049, %v4030
    %v4449 = vpack.c.b16 %v4050, %v4031
    %v4450 = vpack.c.b16 %v4051, %v4032
    %v4451 = vpack.c.b16 %v4052, %v4033
    %v4452 = vpack.c.b16 %v4053, %v4034
    %v4453 = vpack.c.b16 %v4054, %v4035
    %v4454 = vpack.c.b16 %v4074, %v4055
    %v4455 = vpack.c.b16 %v4075, %v4056
    %v4456 = vpack.c.b16 %v4076, %v4057
    %v4457 = vpack.c.b16 %v4077, %v4058
    %v4458 = vpack.c.b16 %v4078, %v4059
    %v4459 = vpack.c.b16 %v4079, %v4060
    %v4460 = vpack.c.b16 %v4080, %v4061
    %v4461 = vpack.c.b16 %v4081, %v4062
    %v4462 = vpack.c.b16 %v4082, %v4063
    %v4463 = vpack.c.b16 %v4083, %v4064
    %v4464 = vpack.c.b16 %v4084, %v4065
    %v4465 = vpack.c.b16 %v4085, %v4066
    %v4466 = vpack.c.b16 %v4086, %v4067
    %v4467 = vpack.c.b16 %v4087, %v4068
    %v4468 = vpack.c.b16 %v4088, %v4069
    %v4469 = vpack.c.b16 %v4089, %v4070
    %v4470 = vpack.c.b16 %v4090, %v4071
    %v4471 = vpack.c.b16 %v4091, %v4072
    %v4472 = vpack.c.b16 %v4092, %v4073
    %v4473 = vpack.c.b16 %v4112, %v4093
    %v4474 = vpack.c.b16 %v4113, %v4094
    %v4475 = vpack.c.b16 %v4114, %v4095
    %v4476 = vpack.c.b16 %v4115, %v4096
    %v4477 = vpack.c.b16 %v4116, %v4097
    %v4478 = vpack.c.b16 %v4117, %v4098
    %v4479 = vpack.c.b16 %v4118, %v4099
    %v4480 = vpack.c.b16 %v4119, %v4100
    %v4481 = vpack.c.b16 %v4120, %v4101
    %v4482 = vpack.c.b16 %v4121, %v4102
    %v4483 = vpack.c.b16 %v4122, %v4103
    %v4484 = vpack.c.b16 %v4123, %v4104
    %v4485 = vpack.c.b16 %v4124, %v4105
    %v4486 = vpack.c.b16 %v4125, %v4106
    %v4487 = vpack.c.b16 %v4126, %v4107
    %v4488 = vpack.c.b16 %v4127, %v4108
    %v4489 = vpack.c.b16 %v4128, %v4109
    %v4490 = vpack.c.b16 %v4129, %v4110
    %v4491 = vpack.c.b16 %v4130, %v4111
    %v4492 = vpack.c.b16 %v4150, %v4131
    %v4493 = vpack.c.b16 %v4151, %v4132
    %v4494 = vpack.c.b16 %v4152, %v4133
    %v4495 = vpack.c.b16 %v4153, %v4134
    %v4496 = vpack.c.b16 %v4154, %v4135
    %v4497 = vpack.c.b16 %v4155, %v4136
    %v4498 = vpack.c.b16 %v4156, %v4137
    %v4499 = vpack.c.b16 %v4157, %v4138
    %v4500 = vpack.c.b16 %v4158, %v4139
    %v4501 = vpack.c.b16 %v4159, %v4140
    %v4502 = vpack.c.b16 %v4160, %v4141
    %v4503 = vpack.c.b16 %v4161, %v4142
    %v4504 = vpack.c.b16 %v4162, %v4143
    %v4505 = vpack.c.b16 %v4163, %v4144
    %v4506 = vpack.c.b16 %v4164, %v4145
    %v4507 = vpack.c.b16 %v4165, %v4146
    %v4508 = vpack.c.b16 %v4166, %v4147
    %v4509 = vpack.c.b16 %v4167, %v4148
    %v4510 = vpack.c.b16 %v4168, %v4149
    %v4511 = vpack.c.b16 %v4188, %v4169
    %v4512 = vpack.c.b16 %v4189, %v4170
    %v4513 = vpack.c.b16 %v4190, %v4171
    %v4514 = vpack.c.b16 %v4191, %v4172
    %v4515 = vpack.c.b16 %v4192, %v4173
    %v4516 = vpack.c.b16 %v4193, %v4174
    %v4517 = vpack.c.b16 %v4194, %v4175
    %v4518 = vpack.c.b16 %v4195, %v4176
    %v4519 = vpack.c.b16 %v4196, %v4177
    %v4520 = vpack.c.b16 %v4197, %v4178
    %v4521 = vpack.c.b16 %v4198, %v4179
    %v4522 = vpack.c.b16 %v4199, %v4180
    %v4523 = vpack.c.b16 %v4200, %v4181
    %v4524 = vpack.c.b16 %v4201, %v4182
    %v4525 = vpack.c.b16 %v4202, %v4183
    %v4526 = vpack.c.b16 %v4203, %v4184
    %v4527 = vpack.c.b16 %v4204, %v4185
    %v4528 = vpack.c.b16 %v4205, %v4186
    %v4529 = vpack.c.b16 %v4206, %v4187
    %v4530 = vpack.c.b16 %v4226, %v4207
    %v4531 = vpack.c.b16 %v4227, %v4208
    %v4532 = vpack.c.b16 %v4228, %v4209
    %v4533 = vpack.c.b16 %v4229, %v4210
    %v4534 = vpack.c.b16 %v4230, %v4211
    %v4535 = vpack.c.b16 %v4231, %v4212
    %v4536 = vpack.c.b16 %v4232, %v4213
    %v4537 = vpack.c.b16 %v4233, %v4214
    %v4538 = vpack.c.b16 %v4234, %v4215
    %v4539 = vpack.c.b16 %v4235, %v4216
    %v4540 = vpack.c.b16 %v4236, %v4217
    %v4541 = vpack.c.b16 %v4237, %v4218
    %v4542 = vpack.c.b16 %v4238, %v4219
    %v4543 = vpack.c.b16 %v4239, %v4220
    %v4544 = vpack.c.b16 %v4240, %v4221
    %v4545 = vpack.c.b16 %v4241, %v4222
    %v4546 = vpack.c.b16 %v4242, %v4223
    %v4547 = vpack.c.b16 %v4243, %v4224
    %v4548 = vpack.c.b16 %v4244, %v4225
    %4853 = vmatpush.bf16.msra.mxu0 %v4378
    %4854 = vmatpush.bf16.msra.mxu0 %v4359
    %4855 = vmatpush.bf16.msra.mxu0 %v4340
    %4856 = vmatpush.bf16.msra.mxu0 %v4321
    %4857 = vmatpush.bf16.msra.mxu0 %v4302
    %4858 = vmatpush.bf16.msra.mxu0 %v4283
    %4859 = vmatpush.bf16.msra.mxu0 %v4264
    %4860 = vmatpush.bf16.msra.mxu0 %v4245
    %4861 = vmatmul.bf16.gmra.mxu0 %v2951
    %v4862 = vpop.f32.mrf.mxu0
    %v4863 = vadd.f32 %v3279, %v4862
    %v4864 = vpop.f32.mrf.mxu0
    %4865 = vdwg.mxu0
    %4866 = vmatpush.bf16.msra.mxu0 %v4530
    %4867 = vmatpush.bf16.msra.mxu0 %v4511
    %4868 = vmatpush.bf16.msra.mxu0 %v4492
    %4869 = vmatpush.bf16.msra.mxu0 %v4473
    %4870 = vmatpush.bf16.msra.mxu0 %v4454
    %4871 = vmatpush.bf16.msra.mxu0 %v4435
    %4872 = vmatpush.bf16.msra.mxu0 %v4416
    %4873 = vmatpush.bf16.msra.mxu0 %v4397
    %4874 = vmatmul.bf16.gmra.mxu0 %v2952
    %v4875 = vpop.f32.mrf.mxu0
    %v4876 = vadd.f32 %v4863, %v4875
    %v4877 = vpop.f32.mrf.mxu0
    %4878 = vdwg.mxu0
    %4879 = vmatpush.bf16.msra.mxu0 %v4379
    %4880 = vmatpush.bf16.msra.mxu0 %v4360
    %4881 = vmatpush.bf16.msra.mxu0 %v4341
    %4882 = vmatpush.bf16.msra.mxu0 %v4322
    %4883 = vmatpush.bf16.msra.mxu0 %v4303
    %4884 = vmatpush.bf16.msra.mxu0 %v4284
    %4885 = vmatpush.bf16.msra.mxu0 %v4265
    %4886 = vmatpush.bf16.msra.mxu0 %v4246
    %4887 = vmatmul.bf16.gmra.mxu0 %v2951
    %v4888 = vpop.f32.mrf.mxu0
    %v4889 = vadd.f32 %v3280, %v4888
    %v4890 = vpop.f32.mrf.mxu0
    %4891 = vdwg.mxu0
    %4892 = vmatpush.bf16.msra.mxu0 %v4531
    %4893 = vmatpush.bf16.msra.mxu0 %v4512
    %4894 = vmatpush.bf16.msra.mxu0 %v4493
    %4895 = vmatpush.bf16.msra.mxu0 %v4474
    %4896 = vmatpush.bf16.msra.mxu0 %v4455
    %4897 = vmatpush.bf16.msra.mxu0 %v4436
    %4898 = vmatpush.bf16.msra.mxu0 %v4417
    %4899 = vmatpush.bf16.msra.mxu0 %v4398
    %4900 = vmatmul.bf16.gmra.mxu0 %v2952
    %v4901 = vpop.f32.mrf.mxu0
    %v4902 = vadd.f32 %v4889, %v4901
    %v4903 = vpop.f32.mrf.mxu0
    %4904 = vdwg.mxu0
    %4905 = vmatpush.bf16.msra.mxu0 %v4380
    %4906 = vmatpush.bf16.msra.mxu0 %v4361
    %4907 = vmatpush.bf16.msra.mxu0 %v4342
    %4908 = vmatpush.bf16.msra.mxu0 %v4323
    %4909 = vmatpush.bf16.msra.mxu0 %v4304
    %4910 = vmatpush.bf16.msra.mxu0 %v4285
    %4911 = vmatpush.bf16.msra.mxu0 %v4266
    %4912 = vmatpush.bf16.msra.mxu0 %v4247
    %4913 = vmatmul.bf16.gmra.mxu0 %v2951
    %v4914 = vpop.f32.mrf.mxu0
    %v4915 = vadd.f32 %v3281, %v4914
    %v4916 = vpop.f32.mrf.mxu0
    %4917 = vdwg.mxu0
    %4918 = vmatpush.bf16.msra.mxu0 %v4532
    %4919 = vmatpush.bf16.msra.mxu0 %v4513
    %4920 = vmatpush.bf16.msra.mxu0 %v4494
    %4921 = vmatpush.bf16.msra.mxu0 %v4475
    %4922 = vmatpush.bf16.msra.mxu0 %v4456
    %4923 = vmatpush.bf16.msra.mxu0 %v4437
    %4924 = vmatpush.bf16.msra.mxu0 %v4418
    %4925 = vmatpush.bf16.msra.mxu0 %v4399
    %4926 = vmatmul.bf16.gmra.mxu0 %v2952
    %v4927 = vpop.f32.mrf.mxu0
    %v4928 = vadd.f32 %v4915, %v4927
    %v4929 = vpop.f32.mrf.mxu0
    %4930 = vdwg.mxu0
    %4931 = vmatpush.bf16.msra.mxu0 %v4381
    %4932 = vmatpush.bf16.msra.mxu0 %v4362
    %4933 = vmatpush.bf16.msra.mxu0 %v4343
    %4934 = vmatpush.bf16.msra.mxu0 %v4324
    %4935 = vmatpush.bf16.msra.mxu0 %v4305
    %4936 = vmatpush.bf16.msra.mxu0 %v4286
    %4937 = vmatpush.bf16.msra.mxu0 %v4267
    %4938 = vmatpush.bf16.msra.mxu0 %v4248
    %4939 = vmatmul.bf16.gmra.mxu0 %v2951
    %v4940 = vpop.f32.mrf.mxu0
    %v4941 = vadd.f32 %v3282, %v4940
    %v4942 = vpop.f32.mrf.mxu0
    %4943 = vdwg.mxu0
    %4944 = vmatpush.bf16.msra.mxu0 %v4533
    %4945 = vmatpush.bf16.msra.mxu0 %v4514
    %4946 = vmatpush.bf16.msra.mxu0 %v4495
    %4947 = vmatpush.bf16.msra.mxu0 %v4476
    %4948 = vmatpush.bf16.msra.mxu0 %v4457
    %4949 = vmatpush.bf16.msra.mxu0 %v4438
    %4950 = vmatpush.bf16.msra.mxu0 %v4419
    %4951 = vmatpush.bf16.msra.mxu0 %v4400
    %4952 = vmatmul.bf16.gmra.mxu0 %v2952
    %v4953 = vpop.f32.mrf.mxu0
    %v4954 = vadd.f32 %v4941, %v4953
    %v4955 = vpop.f32.mrf.mxu0
    %4956 = vdwg.mxu0
    %4957 = vmatpush.bf16.msra.mxu0 %v4382
    %4958 = vmatpush.bf16.msra.mxu0 %v4363
    %4959 = vmatpush.bf16.msra.mxu0 %v4344
    %4960 = vmatpush.bf16.msra.mxu0 %v4325
    %4961 = vmatpush.bf16.msra.mxu0 %v4306
    %4962 = vmatpush.bf16.msra.mxu0 %v4287
    %4963 = vmatpush.bf16.msra.mxu0 %v4268
    %4964 = vmatpush.bf16.msra.mxu0 %v4249
    %4965 = vmatmul.bf16.gmra.mxu0 %v2951
    %v4966 = vpop.f32.mrf.mxu0
    %v4967 = vadd.f32 %v3283, %v4966
    %v4968 = vpop.f32.mrf.mxu0
    %4969 = vdwg.mxu0
    %4970 = vmatpush.bf16.msra.mxu0 %v4534
    %4971 = vmatpush.bf16.msra.mxu0 %v4515
    %4972 = vmatpush.bf16.msra.mxu0 %v4496
    %4973 = vmatpush.bf16.msra.mxu0 %v4477
    %4974 = vmatpush.bf16.msra.mxu0 %v4458
    %4975 = vmatpush.bf16.msra.mxu0 %v4439
    %4976 = vmatpush.bf16.msra.mxu0 %v4420
    %4977 = vmatpush.bf16.msra.mxu0 %v4401
    %4978 = vmatmul.bf16.gmra.mxu0 %v2952
    %v4979 = vpop.f32.mrf.mxu0
    %v4980 = vadd.f32 %v4967, %v4979
    %v4981 = vpop.f32.mrf.mxu0
    %4982 = vdwg.mxu0
    %4983 = vmatpush.bf16.msra.mxu0 %v4383
    %4984 = vmatpush.bf16.msra.mxu0 %v4364
    %4985 = vmatpush.bf16.msra.mxu0 %v4345
    %4986 = vmatpush.bf16.msra.mxu0 %v4326
    %4987 = vmatpush.bf16.msra.mxu0 %v4307
    %4988 = vmatpush.bf16.msra.mxu0 %v4288
    %4989 = vmatpush.bf16.msra.mxu0 %v4269
    %4990 = vmatpush.bf16.msra.mxu0 %v4250
    %4991 = vmatmul.bf16.gmra.mxu0 %v2951
    %v4992 = vpop.f32.mrf.mxu0
    %v4993 = vadd.f32 %v3284, %v4992
    %v4994 = vpop.f32.mrf.mxu0
    %4995 = vdwg.mxu0
    %4996 = vmatpush.bf16.msra.mxu0 %v4535
    %4997 = vmatpush.bf16.msra.mxu0 %v4516
    %4998 = vmatpush.bf16.msra.mxu0 %v4497
    %4999 = vmatpush.bf16.msra.mxu0 %v4478
    %5000 = vmatpush.bf16.msra.mxu0 %v4459
    %5001 = vmatpush.bf16.msra.mxu0 %v4440
    %5002 = vmatpush.bf16.msra.mxu0 %v4421
    %5003 = vmatpush.bf16.msra.mxu0 %v4402
    %5004 = vmatmul.bf16.gmra.mxu0 %v2952
    %v5005 = vpop.f32.mrf.mxu0
    %v5006 = vadd.f32 %v4993, %v5005
    %v5007 = vpop.f32.mrf.mxu0
    %5008 = vdwg.mxu0
    %5009 = vmatpush.bf16.msra.mxu0 %v4384
    %5010 = vmatpush.bf16.msra.mxu0 %v4365
    %5011 = vmatpush.bf16.msra.mxu0 %v4346
    %5012 = vmatpush.bf16.msra.mxu0 %v4327
    %5013 = vmatpush.bf16.msra.mxu0 %v4308
    %5014 = vmatpush.bf16.msra.mxu0 %v4289
    %5015 = vmatpush.bf16.msra.mxu0 %v4270
    %5016 = vmatpush.bf16.msra.mxu0 %v4251
    %5017 = vmatmul.bf16.gmra.mxu0 %v2951
    %v5018 = vpop.f32.mrf.mxu0
    %v5019 = vadd.f32 %v3285, %v5018
    %v5020 = vpop.f32.mrf.mxu0
    %5021 = vdwg.mxu0
    %5022 = vmatpush.bf16.msra.mxu0 %v4536
    %5023 = vmatpush.bf16.msra.mxu0 %v4517
    %5024 = vmatpush.bf16.msra.mxu0 %v4498
    %5025 = vmatpush.bf16.msra.mxu0 %v4479
    %5026 = vmatpush.bf16.msra.mxu0 %v4460
    %5027 = vmatpush.bf16.msra.mxu0 %v4441
    %5028 = vmatpush.bf16.msra.mxu0 %v4422
    %5029 = vmatpush.bf16.msra.mxu0 %v4403
    %5030 = vmatmul.bf16.gmra.mxu0 %v2952
    %v5031 = vpop.f32.mrf.mxu0
    %v5032 = vadd.f32 %v5019, %v5031
    %v5033 = vpop.f32.mrf.mxu0
    %5034 = vdwg.mxu0
    %5035 = vmatpush.bf16.msra.mxu0 %v4385
    %5036 = vmatpush.bf16.msra.mxu0 %v4366
    %5037 = vmatpush.bf16.msra.mxu0 %v4347
    %5038 = vmatpush.bf16.msra.mxu0 %v4328
    %5039 = vmatpush.bf16.msra.mxu0 %v4309
    %5040 = vmatpush.bf16.msra.mxu0 %v4290
    %5041 = vmatpush.bf16.msra.mxu0 %v4271
    %5042 = vmatpush.bf16.msra.mxu0 %v4252
    %5043 = vmatmul.bf16.gmra.mxu0 %v2951
    %v5044 = vpop.f32.mrf.mxu0
    %v5045 = vadd.f32 %v3286, %v5044
    %v5046 = vpop.f32.mrf.mxu0
    %5047 = vdwg.mxu0
    %5048 = vmatpush.bf16.msra.mxu0 %v4537
    %5049 = vmatpush.bf16.msra.mxu0 %v4518
    %5050 = vmatpush.bf16.msra.mxu0 %v4499
    %5051 = vmatpush.bf16.msra.mxu0 %v4480
    %5052 = vmatpush.bf16.msra.mxu0 %v4461
    %5053 = vmatpush.bf16.msra.mxu0 %v4442
    %5054 = vmatpush.bf16.msra.mxu0 %v4423
    %5055 = vmatpush.bf16.msra.mxu0 %v4404
    %5056 = vmatmul.bf16.gmra.mxu0 %v2952
    %v5057 = vpop.f32.mrf.mxu0
    %v5058 = vadd.f32 %v5045, %v5057
    %v5059 = vpop.f32.mrf.mxu0
    %5060 = vdwg.mxu0
    %5061 = vmatpush.bf16.msra.mxu0 %v4386
    %5062 = vmatpush.bf16.msra.mxu0 %v4367
    %5063 = vmatpush.bf16.msra.mxu0 %v4348
    %5064 = vmatpush.bf16.msra.mxu0 %v4329
    %5065 = vmatpush.bf16.msra.mxu0 %v4310
    %5066 = vmatpush.bf16.msra.mxu0 %v4291
    %5067 = vmatpush.bf16.msra.mxu0 %v4272
    %5068 = vmatpush.bf16.msra.mxu0 %v4253
    %5069 = vmatmul.bf16.gmra.mxu0 %v2951
    %v5070 = vpop.f32.mrf.mxu0
    %v5071 = vadd.f32 %v3287, %v5070
    %v5072 = vpop.f32.mrf.mxu0
    %5073 = vdwg.mxu0
    %5074 = vmatpush.bf16.msra.mxu0 %v4538
    %5075 = vmatpush.bf16.msra.mxu0 %v4519
    %5076 = vmatpush.bf16.msra.mxu0 %v4500
    %5077 = vmatpush.bf16.msra.mxu0 %v4481
    %5078 = vmatpush.bf16.msra.mxu0 %v4462
    %5079 = vmatpush.bf16.msra.mxu0 %v4443
    %5080 = vmatpush.bf16.msra.mxu0 %v4424
    %5081 = vmatpush.bf16.msra.mxu0 %v4405
    %5082 = vmatmul.bf16.gmra.mxu0 %v2952
    %v5083 = vpop.f32.mrf.mxu0
    %v5084 = vadd.f32 %v5071, %v5083
    %v5085 = vpop.f32.mrf.mxu0
    %5086 = vdwg.mxu0
    %5087 = vmatpush.bf16.msra.mxu0 %v4387
    %5088 = vmatpush.bf16.msra.mxu0 %v4368
    %5089 = vmatpush.bf16.msra.mxu0 %v4349
    %5090 = vmatpush.bf16.msra.mxu0 %v4330
    %5091 = vmatpush.bf16.msra.mxu0 %v4311
    %5092 = vmatpush.bf16.msra.mxu0 %v4292
    %5093 = vmatpush.bf16.msra.mxu0 %v4273
    %5094 = vmatpush.bf16.msra.mxu0 %v4254
    %5095 = vmatmul.bf16.gmra.mxu0 %v2951
    %v5096 = vpop.f32.mrf.mxu0
    %v5097 = vadd.f32 %v3288, %v5096
    %v5098 = vpop.f32.mrf.mxu0
    %5099 = vdwg.mxu0
    %5100 = vmatpush.bf16.msra.mxu0 %v4539
    %5101 = vmatpush.bf16.msra.mxu0 %v4520
    %5102 = vmatpush.bf16.msra.mxu0 %v4501
    %5103 = vmatpush.bf16.msra.mxu0 %v4482
    %5104 = vmatpush.bf16.msra.mxu0 %v4463
    %5105 = vmatpush.bf16.msra.mxu0 %v4444
    %5106 = vmatpush.bf16.msra.mxu0 %v4425
    %5107 = vmatpush.bf16.msra.mxu0 %v4406
    %5108 = vmatmul.bf16.gmra.mxu0 %v2952
    %v5109 = vpop.f32.mrf.mxu0
    %v5110 = vadd.f32 %v5097, %v5109
    %v5111 = vpop.f32.mrf.mxu0
    %5112 = vdwg.mxu0
    %5113 = vmatpush.bf16.msra.mxu0 %v4388
    %5114 = vmatpush.bf16.msra.mxu0 %v4369
    %5115 = vmatpush.bf16.msra.mxu0 %v4350
    %5116 = vmatpush.bf16.msra.mxu0 %v4331
    %5117 = vmatpush.bf16.msra.mxu0 %v4312
    %5118 = vmatpush.bf16.msra.mxu0 %v4293
    %5119 = vmatpush.bf16.msra.mxu0 %v4274
    %5120 = vmatpush.bf16.msra.mxu0 %v4255
    %5121 = vmatmul.bf16.gmra.mxu0 %v2951
    %v5122 = vpop.f32.mrf.mxu0
    %v5123 = vadd.f32 %v3289, %v5122
    %v5124 = vpop.f32.mrf.mxu0
    %5125 = vdwg.mxu0
    %5126 = vmatpush.bf16.msra.mxu0 %v4540
    %5127 = vmatpush.bf16.msra.mxu0 %v4521
    %5128 = vmatpush.bf16.msra.mxu0 %v4502
    %5129 = vmatpush.bf16.msra.mxu0 %v4483
    %5130 = vmatpush.bf16.msra.mxu0 %v4464
    %5131 = vmatpush.bf16.msra.mxu0 %v4445
    %5132 = vmatpush.bf16.msra.mxu0 %v4426
    %5133 = vmatpush.bf16.msra.mxu0 %v4407
    %5134 = vmatmul.bf16.gmra.mxu0 %v2952
    %v5135 = vpop.f32.mrf.mxu0
    %v5136 = vadd.f32 %v5123, %v5135
    %v5137 = vpop.f32.mrf.mxu0
    %5138 = vdwg.mxu0
    %5139 = vmatpush.bf16.msra.mxu0 %v4389
    %5140 = vmatpush.bf16.msra.mxu0 %v4370
    %5141 = vmatpush.bf16.msra.mxu0 %v4351
    %5142 = vmatpush.bf16.msra.mxu0 %v4332
    %5143 = vmatpush.bf16.msra.mxu0 %v4313
    %5144 = vmatpush.bf16.msra.mxu0 %v4294
    %5145 = vmatpush.bf16.msra.mxu0 %v4275
    %5146 = vmatpush.bf16.msra.mxu0 %v4256
    %5147 = vmatmul.bf16.gmra.mxu0 %v2951
    %v5148 = vpop.f32.mrf.mxu0
    %v5149 = vadd.f32 %v3290, %v5148
    %v5150 = vpop.f32.mrf.mxu0
    %5151 = vdwg.mxu0
    %5152 = vmatpush.bf16.msra.mxu0 %v4541
    %5153 = vmatpush.bf16.msra.mxu0 %v4522
    %5154 = vmatpush.bf16.msra.mxu0 %v4503
    %5155 = vmatpush.bf16.msra.mxu0 %v4484
    %5156 = vmatpush.bf16.msra.mxu0 %v4465
    %5157 = vmatpush.bf16.msra.mxu0 %v4446
    %5158 = vmatpush.bf16.msra.mxu0 %v4427
    %5159 = vmatpush.bf16.msra.mxu0 %v4408
    %5160 = vmatmul.bf16.gmra.mxu0 %v2952
    %v5161 = vpop.f32.mrf.mxu0
    %v5162 = vadd.f32 %v5149, %v5161
    %v5163 = vpop.f32.mrf.mxu0
    %5164 = vdwg.mxu0
    %5165 = vmatpush.bf16.msra.mxu0 %v4390
    %5166 = vmatpush.bf16.msra.mxu0 %v4371
    %5167 = vmatpush.bf16.msra.mxu0 %v4352
    %5168 = vmatpush.bf16.msra.mxu0 %v4333
    %5169 = vmatpush.bf16.msra.mxu0 %v4314
    %5170 = vmatpush.bf16.msra.mxu0 %v4295
    %5171 = vmatpush.bf16.msra.mxu0 %v4276
    %5172 = vmatpush.bf16.msra.mxu0 %v4257
    %5173 = vmatmul.bf16.gmra.mxu0 %v2951
    %v5174 = vpop.f32.mrf.mxu0
    %v5175 = vadd.f32 %v3291, %v5174
    %v5176 = vpop.f32.mrf.mxu0
    %5177 = vdwg.mxu0
    %5178 = vmatpush.bf16.msra.mxu0 %v4542
    %5179 = vmatpush.bf16.msra.mxu0 %v4523
    %5180 = vmatpush.bf16.msra.mxu0 %v4504
    %5181 = vmatpush.bf16.msra.mxu0 %v4485
    %5182 = vmatpush.bf16.msra.mxu0 %v4466
    %5183 = vmatpush.bf16.msra.mxu0 %v4447
    %5184 = vmatpush.bf16.msra.mxu0 %v4428
    %5185 = vmatpush.bf16.msra.mxu0 %v4409
    %5186 = vmatmul.bf16.gmra.mxu0 %v2952
    %v5187 = vpop.f32.mrf.mxu0
    %v5188 = vadd.f32 %v5175, %v5187
    %v5189 = vpop.f32.mrf.mxu0
    %5190 = vdwg.mxu0
    %5191 = vmatpush.bf16.msra.mxu0 %v4391
    %5192 = vmatpush.bf16.msra.mxu0 %v4372
    %5193 = vmatpush.bf16.msra.mxu0 %v4353
    %5194 = vmatpush.bf16.msra.mxu0 %v4334
    %5195 = vmatpush.bf16.msra.mxu0 %v4315
    %5196 = vmatpush.bf16.msra.mxu0 %v4296
    %5197 = vmatpush.bf16.msra.mxu0 %v4277
    %5198 = vmatpush.bf16.msra.mxu0 %v4258
    %5199 = vmatmul.bf16.gmra.mxu0 %v2951
    %v5200 = vpop.f32.mrf.mxu0
    %v5201 = vadd.f32 %v3292, %v5200
    %v5202 = vpop.f32.mrf.mxu0
    %5203 = vdwg.mxu0
    %5204 = vmatpush.bf16.msra.mxu0 %v4543
    %5205 = vmatpush.bf16.msra.mxu0 %v4524
    %5206 = vmatpush.bf16.msra.mxu0 %v4505
    %5207 = vmatpush.bf16.msra.mxu0 %v4486
    %5208 = vmatpush.bf16.msra.mxu0 %v4467
    %5209 = vmatpush.bf16.msra.mxu0 %v4448
    %5210 = vmatpush.bf16.msra.mxu0 %v4429
    %5211 = vmatpush.bf16.msra.mxu0 %v4410
    %5212 = vmatmul.bf16.gmra.mxu0 %v2952
    %v5213 = vpop.f32.mrf.mxu0
    %v5214 = vadd.f32 %v5201, %v5213
    %v5215 = vpop.f32.mrf.mxu0
    %5216 = vdwg.mxu0
    %5217 = vmatpush.bf16.msra.mxu0 %v4392
    %5218 = vmatpush.bf16.msra.mxu0 %v4373
    %5219 = vmatpush.bf16.msra.mxu0 %v4354
    %5220 = vmatpush.bf16.msra.mxu0 %v4335
    %5221 = vmatpush.bf16.msra.mxu0 %v4316
    %5222 = vmatpush.bf16.msra.mxu0 %v4297
    %5223 = vmatpush.bf16.msra.mxu0 %v4278
    %5224 = vmatpush.bf16.msra.mxu0 %v4259
    %5225 = vmatmul.bf16.gmra.mxu0 %v2951
    %v5226 = vpop.f32.mrf.mxu0
    %v5227 = vadd.f32 %v3293, %v5226
    %v5228 = vpop.f32.mrf.mxu0
    %5229 = vdwg.mxu0
    %5230 = vmatpush.bf16.msra.mxu0 %v4544
    %5231 = vmatpush.bf16.msra.mxu0 %v4525
    %5232 = vmatpush.bf16.msra.mxu0 %v4506
    %5233 = vmatpush.bf16.msra.mxu0 %v4487
    %5234 = vmatpush.bf16.msra.mxu0 %v4468
    %5235 = vmatpush.bf16.msra.mxu0 %v4449
    %5236 = vmatpush.bf16.msra.mxu0 %v4430
    %5237 = vmatpush.bf16.msra.mxu0 %v4411
    %5238 = vmatmul.bf16.gmra.mxu0 %v2952
    %v5239 = vpop.f32.mrf.mxu0
    %v5240 = vadd.f32 %v5227, %v5239
    %v5241 = vpop.f32.mrf.mxu0
    %5242 = vdwg.mxu0
    %5243 = vmatpush.bf16.msra.mxu0 %v4393
    %5244 = vmatpush.bf16.msra.mxu0 %v4374
    %5245 = vmatpush.bf16.msra.mxu0 %v4355
    %5246 = vmatpush.bf16.msra.mxu0 %v4336
    %5247 = vmatpush.bf16.msra.mxu0 %v4317
    %5248 = vmatpush.bf16.msra.mxu0 %v4298
    %5249 = vmatpush.bf16.msra.mxu0 %v4279
    %5250 = vmatpush.bf16.msra.mxu0 %v4260
    %5251 = vmatmul.bf16.gmra.mxu0 %v2951
    %v5252 = vpop.f32.mrf.mxu0
    %v5253 = vadd.f32 %v3294, %v5252
    %v5254 = vpop.f32.mrf.mxu0
    %5255 = vdwg.mxu0
    %5256 = vmatpush.bf16.msra.mxu0 %v4545
    %5257 = vmatpush.bf16.msra.mxu0 %v4526
    %5258 = vmatpush.bf16.msra.mxu0 %v4507
    %5259 = vmatpush.bf16.msra.mxu0 %v4488
    %5260 = vmatpush.bf16.msra.mxu0 %v4469
    %5261 = vmatpush.bf16.msra.mxu0 %v4450
    %5262 = vmatpush.bf16.msra.mxu0 %v4431
    %5263 = vmatpush.bf16.msra.mxu0 %v4412
    %5264 = vmatmul.bf16.gmra.mxu0 %v2952
    %v5265 = vpop.f32.mrf.mxu0
    %v5266 = vadd.f32 %v5253, %v5265
    %v5267 = vpop.f32.mrf.mxu0
    %5268 = vdwg.mxu0
    %5269 = vmatpush.bf16.msra.mxu0 %v4394
    %5270 = vmatpush.bf16.msra.mxu0 %v4375
    %5271 = vmatpush.bf16.msra.mxu0 %v4356
    %5272 = vmatpush.bf16.msra.mxu0 %v4337
    %5273 = vmatpush.bf16.msra.mxu0 %v4318
    %5274 = vmatpush.bf16.msra.mxu0 %v4299
    %5275 = vmatpush.bf16.msra.mxu0 %v4280
    %5276 = vmatpush.bf16.msra.mxu0 %v4261
    %5277 = vmatmul.bf16.gmra.mxu0 %v2951
    %v5278 = vpop.f32.mrf.mxu0
    %v5279 = vadd.f32 %v3295, %v5278
    %v5280 = vpop.f32.mrf.mxu0
    %5281 = vdwg.mxu0
    %5282 = vmatpush.bf16.msra.mxu0 %v4546
    %5283 = vmatpush.bf16.msra.mxu0 %v4527
    %5284 = vmatpush.bf16.msra.mxu0 %v4508
    %5285 = vmatpush.bf16.msra.mxu0 %v4489
    %5286 = vmatpush.bf16.msra.mxu0 %v4470
    %5287 = vmatpush.bf16.msra.mxu0 %v4451
    %5288 = vmatpush.bf16.msra.mxu0 %v4432
    %5289 = vmatpush.bf16.msra.mxu0 %v4413
    %5290 = vmatmul.bf16.gmra.mxu0 %v2952
    %v5291 = vpop.f32.mrf.mxu0
    %v5292 = vadd.f32 %v5279, %v5291
    %v5293 = vpop.f32.mrf.mxu0
    %5294 = vdwg.mxu0
    %5295 = vmatpush.bf16.msra.mxu0 %v4395
    %5296 = vmatpush.bf16.msra.mxu0 %v4376
    %5297 = vmatpush.bf16.msra.mxu0 %v4357
    %5298 = vmatpush.bf16.msra.mxu0 %v4338
    %5299 = vmatpush.bf16.msra.mxu0 %v4319
    %5300 = vmatpush.bf16.msra.mxu0 %v4300
    %5301 = vmatpush.bf16.msra.mxu0 %v4281
    %5302 = vmatpush.bf16.msra.mxu0 %v4262
    %5303 = vmatmul.bf16.gmra.mxu0 %v2951
    %v5304 = vpop.f32.mrf.mxu0
    %v5305 = vadd.f32 %v3296, %v5304
    %v5306 = vpop.f32.mrf.mxu0
    %5307 = vdwg.mxu0
    %5308 = vmatpush.bf16.msra.mxu0 %v4547
    %5309 = vmatpush.bf16.msra.mxu0 %v4528
    %5310 = vmatpush.bf16.msra.mxu0 %v4509
    %5311 = vmatpush.bf16.msra.mxu0 %v4490
    %5312 = vmatpush.bf16.msra.mxu0 %v4471
    %5313 = vmatpush.bf16.msra.mxu0 %v4452
    %5314 = vmatpush.bf16.msra.mxu0 %v4433
    %5315 = vmatpush.bf16.msra.mxu0 %v4414
    %5316 = vmatmul.bf16.gmra.mxu0 %v2952
    %v5317 = vpop.f32.mrf.mxu0
    %v5318 = vadd.f32 %v5305, %v5317
    %v5319 = vpop.f32.mrf.mxu0
    %5320 = vdwg.mxu0
    %5321 = vmatpush.bf16.msra.mxu0 %v4396
    %5322 = vmatpush.bf16.msra.mxu0 %v4377
    %5323 = vmatpush.bf16.msra.mxu0 %v4358
    %5324 = vmatpush.bf16.msra.mxu0 %v4339
    %5325 = vmatpush.bf16.msra.mxu0 %v4320
    %5326 = vmatpush.bf16.msra.mxu0 %v4301
    %5327 = vmatpush.bf16.msra.mxu0 %v4282
    %5328 = vmatpush.bf16.msra.mxu0 %v4263
    %5329 = vmatmul.bf16.gmra.mxu0 %v2951
    %v5330 = vpop.f32.mrf.mxu0
    %v5331 = vadd.f32 %v3297, %v5330
    %v5332 = vpop.f32.mrf.mxu0
    %5333 = vdwg.mxu0
    %5334 = vmatpush.bf16.msra.mxu0 %v4548
    %5335 = vmatpush.bf16.msra.mxu0 %v4529
    %5336 = vmatpush.bf16.msra.mxu0 %v4510
    %5337 = vmatpush.bf16.msra.mxu0 %v4491
    %5338 = vmatpush.bf16.msra.mxu0 %v4472
    %5339 = vmatpush.bf16.msra.mxu0 %v4453
    %5340 = vmatpush.bf16.msra.mxu0 %v4434
    %5341 = vmatpush.bf16.msra.mxu0 %v4415
    %5342 = vmatmul.bf16.gmra.mxu0 %v2952
    %v5343 = vpop.f32.mrf.mxu0
    %v5344 = vadd.f32 %v5331, %v5343
    %v5345 = vpop.f32.mrf.mxu0
    %5346 = vdwg.mxu0
    %v5347 = vxor.u32 %v4876, 2147483648
    %v5348 = vxor.u32 %v4902, 2147483648
    %v5349 = vxor.u32 %v4928, 2147483648
    %v5350 = vxor.u32 %v4954, 2147483648
    %v5351 = vxor.u32 %v4980, 2147483648
    %v5352 = vxor.u32 %v5006, 2147483648
    %v5353 = vxor.u32 %v5032, 2147483648
    %v5354 = vxor.u32 %v5058, 2147483648
    %v5355 = vxor.u32 %v5084, 2147483648
    %v5356 = vxor.u32 %v5110, 2147483648
    %v5357 = vxor.u32 %v5136, 2147483648
    %v5358 = vxor.u32 %v5162, 2147483648
    %v5359 = vxor.u32 %v5188, 2147483648
    %v5360 = vxor.u32 %v5214, 2147483648
    %v5361 = vxor.u32 %v5240, 2147483648
    %v5362 = vxor.u32 %v5266, 2147483648
    %v5363 = vxor.u32 %v5292, 2147483648
    %v5364 = vxor.u32 %v5318, 2147483648
    %v5365 = vxor.u32 %v5344, 2147483648
    %v5366 = vmul.f32 %v5347, 1.442695
    %v5367 = vpow.pop %v5366
    %v5368 = vmul.f32 %v5348, 1.442695
    %v5369 = vpow.pop %v5368
    %v5370 = vmul.f32 %v5349, 1.442695
    %v5371 = vpow.pop %v5370
    %v5372 = vmul.f32 %v5350, 1.442695
    %v5373 = vpow.pop %v5372
    %v5374 = vmul.f32 %v5351, 1.442695
    %v5375 = vpow.pop %v5374
    %v5376 = vmul.f32 %v5352, 1.442695
    %v5377 = vpow.pop %v5376
    %v5378 = vmul.f32 %v5353, 1.442695
    %v5379 = vpow.pop %v5378
    %v5380 = vmul.f32 %v5354, 1.442695
    %v5381 = vpow.pop %v5380
    %v5382 = vmul.f32 %v5355, 1.442695
    %v5383 = vpow.pop %v5382
    %v5384 = vmul.f32 %v5356, 1.442695
    %v5385 = vpow.pop %v5384
    %v5386 = vmul.f32 %v5357, 1.442695
    %v5387 = vpow.pop %v5386
    %v5388 = vmul.f32 %v5358, 1.442695
    %v5389 = vpow.pop %v5388
    %v5390 = vmul.f32 %v5359, 1.442695
    %v5391 = vpow.pop %v5390
    %v5392 = vmul.f32 %v5360, 1.442695
    %v5393 = vpow.pop %v5392
    %v5394 = vmul.f32 %v5361, 1.442695
    %v5395 = vpow.pop %v5394
    %v5396 = vmul.f32 %v5362, 1.442695
    %v5397 = vpow.pop %v5396
    %v5398 = vmul.f32 %v5363, 1.442695
    %v5399 = vpow.pop %v5398
    %v5400 = vmul.f32 %v5364, 1.442695
    %v5401 = vpow.pop %v5400
    %v5402 = vmul.f32 %v5365, 1.442695
    %v5403 = vpow.pop %v5402
    %v5404 = vadd.f32 %v5367, 1.0
    %v5405 = vadd.f32 %v5369, 1.0
    %v5406 = vadd.f32 %v5371, 1.0
    %v5407 = vadd.f32 %v5373, 1.0
    %v5408 = vadd.f32 %v5375, 1.0
    %v5409 = vadd.f32 %v5377, 1.0
    %v5410 = vadd.f32 %v5379, 1.0
    %v5411 = vadd.f32 %v5381, 1.0
    %v5412 = vadd.f32 %v5383, 1.0
    %v5413 = vadd.f32 %v5385, 1.0
    %v5414 = vadd.f32 %v5387, 1.0
    %v5415 = vadd.f32 %v5389, 1.0
    %v5416 = vadd.f32 %v5391, 1.0
    %v5417 = vadd.f32 %v5393, 1.0
    %v5418 = vadd.f32 %v5395, 1.0
    %v5419 = vadd.f32 %v5397, 1.0
    %v5420 = vadd.f32 %v5399, 1.0
    %v5421 = vadd.f32 %v5401, 1.0
    %v5422 = vadd.f32 %v5403, 1.0
    %v5423 = vrcp.pop %v5404
    %v5424 = vmul.f32 %v5404, %v5423
    %v5425 = vsub.f32 1.0, %v5424
    %v5426 = vmul.f32 %v5423, %v5425
    %v5427 = vadd.f32 %v5423, %v5426
    %vm5428 = vweird.f32 %v5404
    %vm5429 = vweird.f32 %v5423
    %vm5430 = vmor %vm5428, %vm5429
    %v5431 = vsel %vm5430, %v5423, %v5427
    %v5432 = vand.u32 2147483647, %v5404
    %vm5433 = vcmp.eq.f32.partialorder %v5432, 8.507059e+37
    %v5434 = vand.u32 %v5404, 2147483648
    %v5435 = vor.u32 1.1754944e-38, %v5434
    %v5436 = vsel %vm5433, %v5435, %v5431
    %v5437 = vmul.f32 1.0, %v5436
    %v5438 = vrcp.pop %v5405
    %v5439 = vmul.f32 %v5405, %v5438
    %v5440 = vsub.f32 1.0, %v5439
    %v5441 = vmul.f32 %v5438, %v5440
    %v5442 = vadd.f32 %v5438, %v5441
    %vm5443 = vweird.f32 %v5405
    %vm5444 = vweird.f32 %v5438
    %vm5445 = vmor %vm5443, %vm5444
    %v5446 = vsel %vm5445, %v5438, %v5442
    %v5447 = vand.u32 2147483647, %v5405
    %vm5448 = vcmp.eq.f32.partialorder %v5447, 8.507059e+37
    %v5449 = vand.u32 %v5405, 2147483648
    %v5450 = vor.u32 1.1754944e-38, %v5449
    %v5451 = vsel %vm5448, %v5450, %v5446
    %v5452 = vmul.f32 1.0, %v5451
    %v5453 = vrcp.pop %v5406
    %v5454 = vmul.f32 %v5406, %v5453
    %v5455 = vsub.f32 1.0, %v5454
    %v5456 = vmul.f32 %v5453, %v5455
    %v5457 = vadd.f32 %v5453, %v5456
    %vm5458 = vweird.f32 %v5406
    %vm5459 = vweird.f32 %v5453
    %vm5460 = vmor %vm5458, %vm5459
    %v5461 = vsel %vm5460, %v5453, %v5457
    %v5462 = vand.u32 2147483647, %v5406
    %vm5463 = vcmp.eq.f32.partialorder %v5462, 8.507059e+37
    %v5464 = vand.u32 %v5406, 2147483648
    %v5465 = vor.u32 1.1754944e-38, %v5464
    %v5466 = vsel %vm5463, %v5465, %v5461
    %v5467 = vmul.f32 1.0, %v5466
    %v5468 = vrcp.pop %v5407
    %v5469 = vmul.f32 %v5407, %v5468
    %v5470 = vsub.f32 1.0, %v5469
    %v5471 = vmul.f32 %v5468, %v5470
    %v5472 = vadd.f32 %v5468, %v5471
    %vm5473 = vweird.f32 %v5407
    %vm5474 = vweird.f32 %v5468
    %vm5475 = vmor %vm5473, %vm5474
    %v5476 = vsel %vm5475, %v5468, %v5472
    %v5477 = vand.u32 2147483647, %v5407
    %vm5478 = vcmp.eq.f32.partialorder %v5477, 8.507059e+37
    %v5479 = vand.u32 %v5407, 2147483648
    %v5480 = vor.u32 1.1754944e-38, %v5479
    %v5481 = vsel %vm5478, %v5480, %v5476
    %v5482 = vmul.f32 1.0, %v5481
    %v5483 = vrcp.pop %v5408
    %v5484 = vmul.f32 %v5408, %v5483
    %v5485 = vsub.f32 1.0, %v5484
    %v5486 = vmul.f32 %v5483, %v5485
    %v5487 = vadd.f32 %v5483, %v5486
    %vm5488 = vweird.f32 %v5408
    %vm5489 = vweird.f32 %v5483
    %vm5490 = vmor %vm5488, %vm5489
    %v5491 = vsel %vm5490, %v5483, %v5487
    %v5492 = vand.u32 2147483647, %v5408
    %vm5493 = vcmp.eq.f32.partialorder %v5492, 8.507059e+37
    %v5494 = vand.u32 %v5408, 2147483648
    %v5495 = vor.u32 1.1754944e-38, %v5494
    %v5496 = vsel %vm5493, %v5495, %v5491
    %v5497 = vmul.f32 1.0, %v5496
    %v5498 = vrcp.pop %v5409
    %v5499 = vmul.f32 %v5409, %v5498
    %v5500 = vsub.f32 1.0, %v5499
    %v5501 = vmul.f32 %v5498, %v5500
    %v5502 = vadd.f32 %v5498, %v5501
    %vm5503 = vweird.f32 %v5409
    %vm5504 = vweird.f32 %v5498
    %vm5505 = vmor %vm5503, %vm5504
    %v5506 = vsel %vm5505, %v5498, %v5502
    %v5507 = vand.u32 2147483647, %v5409
    %vm5508 = vcmp.eq.f32.partialorder %v5507, 8.507059e+37
    %v5509 = vand.u32 %v5409, 2147483648
    %v5510 = vor.u32 1.1754944e-38, %v5509
    %v5511 = vsel %vm5508, %v5510, %v5506
    %v5512 = vmul.f32 1.0, %v5511
    %v5513 = vrcp.pop %v5410
    %v5514 = vmul.f32 %v5410, %v5513
    %v5515 = vsub.f32 1.0, %v5514
    %v5516 = vmul.f32 %v5513, %v5515
    %v5517 = vadd.f32 %v5513, %v5516
    %vm5518 = vweird.f32 %v5410
    %vm5519 = vweird.f32 %v5513
    %vm5520 = vmor %vm5518, %vm5519
    %v5521 = vsel %vm5520, %v5513, %v5517
    %v5522 = vand.u32 2147483647, %v5410
    %vm5523 = vcmp.eq.f32.partialorder %v5522, 8.507059e+37
    %v5524 = vand.u32 %v5410, 2147483648
    %v5525 = vor.u32 1.1754944e-38, %v5524
    %v5526 = vsel %vm5523, %v5525, %v5521
    %v5527 = vmul.f32 1.0, %v5526
    %v5528 = vrcp.pop %v5411
    %v5529 = vmul.f32 %v5411, %v5528
    %v5530 = vsub.f32 1.0, %v5529
    %v5531 = vmul.f32 %v5528, %v5530
    %v5532 = vadd.f32 %v5528, %v5531
    %vm5533 = vweird.f32 %v5411
    %vm5534 = vweird.f32 %v5528
    %vm5535 = vmor %vm5533, %vm5534
    %v5536 = vsel %vm5535, %v5528, %v5532
    %v5537 = vand.u32 2147483647, %v5411
    %vm5538 = vcmp.eq.f32.partialorder %v5537, 8.507059e+37
    %v5539 = vand.u32 %v5411, 2147483648
    %v5540 = vor.u32 1.1754944e-38, %v5539
    %v5541 = vsel %vm5538, %v5540, %v5536
    %v5542 = vmul.f32 1.0, %v5541
    %v5543 = vrcp.pop %v5412
    %v5544 = vmul.f32 %v5412, %v5543
    %v5545 = vsub.f32 1.0, %v5544
    %v5546 = vmul.f32 %v5543, %v5545
    %v5547 = vadd.f32 %v5543, %v5546
    %vm5548 = vweird.f32 %v5412
    %vm5549 = vweird.f32 %v5543
    %vm5550 = vmor %vm5548, %vm5549
    %v5551 = vsel %vm5550, %v5543, %v5547
    %v5552 = vand.u32 2147483647, %v5412
    %vm5553 = vcmp.eq.f32.partialorder %v5552, 8.507059e+37
    %v5554 = vand.u32 %v5412, 2147483648
    %v5555 = vor.u32 1.1754944e-38, %v5554
    %v5556 = vsel %vm5553, %v5555, %v5551
    %v5557 = vmul.f32 1.0, %v5556
    %v5558 = vrcp.pop %v5413
    %v5559 = vmul.f32 %v5413, %v5558
    %v5560 = vsub.f32 1.0, %v5559
    %v5561 = vmul.f32 %v5558, %v5560
    %v5562 = vadd.f32 %v5558, %v5561
    %vm5563 = vweird.f32 %v5413
    %vm5564 = vweird.f32 %v5558
    %vm5565 = vmor %vm5563, %vm5564
    %v5566 = vsel %vm5565, %v5558, %v5562
    %v5567 = vand.u32 2147483647, %v5413
    %vm5568 = vcmp.eq.f32.partialorder %v5567, 8.507059e+37
    %v5569 = vand.u32 %v5413, 2147483648
    %v5570 = vor.u32 1.1754944e-38, %v5569
    %v5571 = vsel %vm5568, %v5570, %v5566
    %v5572 = vmul.f32 1.0, %v5571
    %v5573 = vrcp.pop %v5414
    %v5574 = vmul.f32 %v5414, %v5573
    %v5575 = vsub.f32 1.0, %v5574
    %v5576 = vmul.f32 %v5573, %v5575
    %v5577 = vadd.f32 %v5573, %v5576
    %vm5578 = vweird.f32 %v5414
    %vm5579 = vweird.f32 %v5573
    %vm5580 = vmor %vm5578, %vm5579
    %v5581 = vsel %vm5580, %v5573, %v5577
    %v5582 = vand.u32 2147483647, %v5414
    %vm5583 = vcmp.eq.f32.partialorder %v5582, 8.507059e+37
    %v5584 = vand.u32 %v5414, 2147483648
    %v5585 = vor.u32 1.1754944e-38, %v5584
    %v5586 = vsel %vm5583, %v5585, %v5581
    %v5587 = vmul.f32 1.0, %v5586
    %v5588 = vrcp.pop %v5415
    %v5589 = vmul.f32 %v5415, %v5588
    %v5590 = vsub.f32 1.0, %v5589
    %v5591 = vmul.f32 %v5588, %v5590
    %v5592 = vadd.f32 %v5588, %v5591
    %vm5593 = vweird.f32 %v5415
    %vm5594 = vweird.f32 %v5588
    %vm5595 = vmor %vm5593, %vm5594
    %v5596 = vsel %vm5595, %v5588, %v5592
    %v5597 = vand.u32 2147483647, %v5415
    %vm5598 = vcmp.eq.f32.partialorder %v5597, 8.507059e+37
    %v5599 = vand.u32 %v5415, 2147483648
    %v5600 = vor.u32 1.1754944e-38, %v5599
    %v5601 = vsel %vm5598, %v5600, %v5596
    %v5602 = vmul.f32 1.0, %v5601
    %v5603 = vrcp.pop %v5416
    %v5604 = vmul.f32 %v5416, %v5603
    %v5605 = vsub.f32 1.0, %v5604
    %v5606 = vmul.f32 %v5603, %v5605
    %v5607 = vadd.f32 %v5603, %v5606
    %vm5608 = vweird.f32 %v5416
    %vm5609 = vweird.f32 %v5603
    %vm5610 = vmor %vm5608, %vm5609
    %v5611 = vsel %vm5610, %v5603, %v5607
    %v5612 = vand.u32 2147483647, %v5416
    %vm5613 = vcmp.eq.f32.partialorder %v5612, 8.507059e+37
    %v5614 = vand.u32 %v5416, 2147483648
    %v5615 = vor.u32 1.1754944e-38, %v5614
    %v5616 = vsel %vm5613, %v5615, %v5611
    %v5617 = vmul.f32 1.0, %v5616
    %v5618 = vrcp.pop %v5417
    %v5619 = vmul.f32 %v5417, %v5618
    %v5620 = vsub.f32 1.0, %v5619
    %v5621 = vmul.f32 %v5618, %v5620
    %v5622 = vadd.f32 %v5618, %v5621
    %vm5623 = vweird.f32 %v5417
    %vm5624 = vweird.f32 %v5618
    %vm5625 = vmor %vm5623, %vm5624
    %v5626 = vsel %vm5625, %v5618, %v5622
    %v5627 = vand.u32 2147483647, %v5417
    %vm5628 = vcmp.eq.f32.partialorder %v5627, 8.507059e+37
    %v5629 = vand.u32 %v5417, 2147483648
    %v5630 = vor.u32 1.1754944e-38, %v5629
    %v5631 = vsel %vm5628, %v5630, %v5626
    %v5632 = vmul.f32 1.0, %v5631
    %v5633 = vrcp.pop %v5418
    %v5634 = vmul.f32 %v5418, %v5633
    %v5635 = vsub.f32 1.0, %v5634
    %v5636 = vmul.f32 %v5633, %v5635
    %v5637 = vadd.f32 %v5633, %v5636
    %vm5638 = vweird.f32 %v5418
    %vm5639 = vweird.f32 %v5633
    %vm5640 = vmor %vm5638, %vm5639
    %v5641 = vsel %vm5640, %v5633, %v5637
    %v5642 = vand.u32 2147483647, %v5418
    %vm5643 = vcmp.eq.f32.partialorder %v5642, 8.507059e+37
    %v5644 = vand.u32 %v5418, 2147483648
    %v5645 = vor.u32 1.1754944e-38, %v5644
    %v5646 = vsel %vm5643, %v5645, %v5641
    %v5647 = vmul.f32 1.0, %v5646
    %v5648 = vrcp.pop %v5419
    %v5649 = vmul.f32 %v5419, %v5648
    %v5650 = vsub.f32 1.0, %v5649
    %v5651 = vmul.f32 %v5648, %v5650
    %v5652 = vadd.f32 %v5648, %v5651
    %vm5653 = vweird.f32 %v5419
    %vm5654 = vweird.f32 %v5648
    %vm5655 = vmor %vm5653, %vm5654
    %v5656 = vsel %vm5655, %v5648, %v5652
    %v5657 = vand.u32 2147483647, %v5419
    %vm5658 = vcmp.eq.f32.partialorder %v5657, 8.507059e+37
    %v5659 = vand.u32 %v5419, 2147483648
    %v5660 = vor.u32 1.1754944e-38, %v5659
    %v5661 = vsel %vm5658, %v5660, %v5656
    %v5662 = vmul.f32 1.0, %v5661
    %v5663 = vrcp.pop %v5420
    %v5664 = vmul.f32 %v5420, %v5663
    %v5665 = vsub.f32 1.0, %v5664
    %v5666 = vmul.f32 %v5663, %v5665
    %v5667 = vadd.f32 %v5663, %v5666
    %vm5668 = vweird.f32 %v5420
    %vm5669 = vweird.f32 %v5663
    %vm5670 = vmor %vm5668, %vm5669
    %v5671 = vsel %vm5670, %v5663, %v5667
    %v5672 = vand.u32 2147483647, %v5420
    %vm5673 = vcmp.eq.f32.partialorder %v5672, 8.507059e+37
    %v5674 = vand.u32 %v5420, 2147483648
    %v5675 = vor.u32 1.1754944e-38, %v5674
    %v5676 = vsel %vm5673, %v5675, %v5671
    %v5677 = vmul.f32 1.0, %v5676
    %v5678 = vrcp.pop %v5421
    %v5679 = vmul.f32 %v5421, %v5678
    %v5680 = vsub.f32 1.0, %v5679
    %v5681 = vmul.f32 %v5678, %v5680
    %v5682 = vadd.f32 %v5678, %v5681
    %vm5683 = vweird.f32 %v5421
    %vm5684 = vweird.f32 %v5678
    %vm5685 = vmor %vm5683, %vm5684
    %v5686 = vsel %vm5685, %v5678, %v5682
    %v5687 = vand.u32 2147483647, %v5421
    %vm5688 = vcmp.eq.f32.partialorder %v5687, 8.507059e+37
    %v5689 = vand.u32 %v5421, 2147483648
    %v5690 = vor.u32 1.1754944e-38, %v5689
    %v5691 = vsel %vm5688, %v5690, %v5686
    %v5692 = vmul.f32 1.0, %v5691
    %v5693 = vrcp.pop %v5422
    %v5694 = vmul.f32 %v5422, %v5693
    %v5695 = vsub.f32 1.0, %v5694
    %v5696 = vmul.f32 %v5693, %v5695
    %v5697 = vadd.f32 %v5693, %v5696
    %vm5698 = vweird.f32 %v5422
    %vm5699 = vweird.f32 %v5693
    %vm5700 = vmor %vm5698, %vm5699
    %v5701 = vsel %vm5700, %v5693, %v5697
    %v5702 = vand.u32 2147483647, %v5422
    %vm5703 = vcmp.eq.f32.partialorder %v5702, 8.507059e+37
    %v5704 = vand.u32 %v5422, 2147483648
    %v5705 = vor.u32 1.1754944e-38, %v5704
    %v5706 = vsel %vm5703, %v5705, %v5701
    %v5707 = vmul.f32 1.0, %v5706
    %5708 = vst [vmem:[#allocation2] sm:$0xff] %v5437
    %5709 = vst [vmem:[#allocation2 + $0x8] sm:$0xff] %v5452
    %5710 = vst [vmem:[#allocation2 + $0x10] sm:$0xff] %v5467
    %5711 = vst [vmem:[#allocation2 + $0x18] sm:$0xff] %v5482
    %5712 = vst [vmem:[#allocation2 + $0x20] sm:$0xff] %v5497
    %5713 = vst [vmem:[#allocation2 + $0x28] sm:$0xff] %v5512
    %5714 = vst [vmem:[#allocation2 + $0x30] sm:$0xff] %v5527
    %5715 = vst [vmem:[#allocation2 + $0x38] sm:$0xff] %v5542
    %5716 = vst [vmem:[#allocation2 + $0x40] sm:$0xff] %v5557
    %5717 = vst [vmem:[#allocation2 + $0x48] sm:$0xff] %v5572
    %5718 = vst [vmem:[#allocation2 + $0x50] sm:$0xff] %v5587
    %5719 = vst [vmem:[#allocation2 + $0x58] sm:$0xff] %v5602
    %5720 = vst [vmem:[#allocation2 + $0x60] sm:$0xff] %v5617
    %5721 = vst [vmem:[#allocation2 + $0x68] sm:$0xff] %v5632
    %5722 = vst [vmem:[#allocation2 + $0x70] sm:$0xff] %v5647
    %5723 = vst [vmem:[#allocation2 + $0x78] sm:$0xff] %v5662
    %5724 = vst [vmem:[#allocation2 + $0x80] sm:$0xff] %v5677
    %5725 = vst [vmem:[#allocation2 + $0x88] sm:$0xff] %v5692
    %5726 = vst.msk [vmem:[#allocation2 + $0x90] sm:$0xff] %vm1935, %v5707
    // Predicated region
    $region46: #{tpu_custom_call.1} parent=1 // pred_check
      _
    $region47: #{tpu_custom_call.1} parent=1 // pred_check_branch
      %5728 = sbr.rel (0) target = $region49
    $region48: #{tpu_custom_call.1} parent=1 // pred_region
      %5730 = vsyncadd [#allocation3], 0
      %s5732 = sshll.u32 [#allocation2], 4
      %s5733 = int_to_ptr.vmem [resolvable:$true] %s5732
      %s5734 = sshll.u32 %s11, 4
      %s5735 = int_to_ptr.hbm [resolvable:$true] %s5734
      %5737 = dma.vmem_to_hbm [thread:$0]  %s5733, 2432, %s5735, [#allocation3]
    $region49: #{tpu_custom_call.1} parent=1 // pred_fallthru
      _
    // Predicated region
    $region50: #{tpu_custom_call.1} parent=1 // pred_check
      _
    $region51: #{tpu_custom_call.1} parent=1 // pred_check_branch
      %5739 = sbr.rel (0) target = $region53
    $region52: #{tpu_custom_call.1} parent=1 // pred_region
      %5741 = dma.done [#allocation3], 2432
    $region53: #{tpu_custom_call.1} parent=1 // pred_fallthru
      _
    %5742 = vsyncpa [#allocation3], 1

</llo_original>
